<compile_context>
chip_gen: v7x
topology: tpu7x:2x2x1
jax: 0.10.0
libtpu: 0.0.40
codegen_flags: <defaults>
</compile_context>

<pallas_src>
import numpy as np
import jax
import jax.numpy as jnp
from jax.experimental import pallas as pl
from jax.experimental.pallas import tpu as pltpu


# ------------------------------------------------------------------
# Model dimensions (small demo shapes; original uses 150x150 images)
# ------------------------------------------------------------------
H = W = 16
OBS_FLAT = H * W                        # 256
CONV_C = 4
KSIZE, STRIDE, PAD = 3, 2, 1
Ho = Wo = (H + 2 * PAD - KSIZE) // STRIDE + 1   # 8
FLAT = CONV_C * Ho * Wo                 # 256 (flattened conv output, NCHW order)
EMBED = 32
STATE = 32
ACTION = 22                             # 17 + 5 one-hot
HIDDEN = 64
N_OBS = 3                               # obs_-2, obs_-1, obs_0
N_STEP = 3                              # rollout length

LANE = 128
EBLK = LANE                             # per-image lane block holding one embedding
DEC_N = 1 + OBS_FLAT                    # 257 = reward | obs
DEC_NP = 3 * LANE                       # 384 padded decoder width
OUT_W = N_STEP * DEC_NP                 # 1152 (lane-dense output tile width)


# ------------------------------------------------------------------
# Fused Pallas kernel: full forward pass, all weights VMEM-resident
# ------------------------------------------------------------------
def _env_model_kernel(obs_ref, act_ref,
                      wconv_ref, bconv_ref,
                      wenc_ref, benc_ref,
                      winit_ref, binit_ref,
                      wt1s_ref, wt1a_ref, bt1_ref,
                      wt2_ref, bt2_ref,
                      wdec_ref, bdec_ref,
                      out_ref):
    f32 = jnp.float32

    # --- 3 observation encoders, batched along the lane axis via block-diagonal weights ---
    # conv (folded into a dense matmul) + ReLU            -> (8, 768)
    h = jnp.dot(obs_ref[...], wconv_ref[...], preferred_element_type=f32) + bconv_ref[...]
    h = jnp.maximum(h, 0.0)
    # encoder fc + ReLU: embedding k lives in lanes [k*128, k*128+32)   -> (8, 384)
    e = jnp.dot(h, wenc_ref[...], preferred_element_type=f32) + benc_ref[...]
    e = jnp.maximum(e, 0.0)

    # --- initial state: Linear(concat(e1,e2,e3)) realized with block-stacked weight rows ---
    state = jnp.dot(e, winit_ref[...], preferred_element_type=f32) + binit_ref[...]
    state = jnp.maximum(state, 0.0)                       # (8, 128); row 0 carries the real state

    # --- unrolled 3-step rollout: transition (concat folded into split weights) + fused decoder ---
    for t in range(N_STEP):
        a_t = act_ref[:, t * LANE:(t + 1) * LANE]         # (8, 128) one-hot action t (row 0)
        h1 = (jnp.dot(state, wt1s_ref[...], preferred_element_type=f32)
              + jnp.dot(a_t, wt1a_ref[...], preferred_element_type=f32)
              + bt1_ref[...])
        h1 = jnp.maximum(h1, 0.0)
        state = jnp.dot(h1, wt2_ref[...], preferred_element_type=f32) + bt2_ref[...]
        # fused decoder: lane 0 = reward, lanes 1..256 = flattened next-obs
        dec = jnp.dot(state, wdec_ref[...], preferred_element_type=f32) + bdec_ref[...]
        out_ref[:, t * DEC_NP:(t + 1) * DEC_NP] = dec     # lane-dense 384-wide store


# ------------------------------------------------------------------
# Parameter construction: logical PyTorch-layout weights + one-time
# padded / block-diagonal TPU-layout weights.
# ------------------------------------------------------------------
def init_params(key):
    def uniform(k, shape, fan_in):
        lim = 1.0 / np.sqrt(fan_in)
        return np.asarray(jax.random.uniform(k, shape, jnp.float32, -lim, lim))

    ks = jax.random.split(key, 14)
    conv_w = uniform(ks[0], (CONV_C, 1, KSIZE, KSIZE), 1 * KSIZE * KSIZE)
    conv_b = uniform(ks[1], (CONV_C,), 1 * KSIZE * KSIZE)
    enc_w = uniform(ks[2], (FLAT, EMBED), FLAT)
    enc_b = uniform(ks[3], (EMBED,), FLAT)
    init_w = uniform(ks[4], (N_OBS * EMBED, STATE), N_OBS * EMBED)
    init_b = uniform(ks[5], (STATE,), N_OBS * EMBED)
    t1_w = uniform(ks[6], (STATE + ACTION, HIDDEN), STATE + ACTION)
    t1_b = uniform(ks[7], (HIDDEN,), STATE + ACTION)
    t2_w = uniform(ks[8], (HIDDEN, STATE), HIDDEN)
    t2_b = uniform(ks[9], (STATE,), HIDDEN)
    dr_w = uniform(ks[10], (STATE, 1), STATE)
    dr_b = uniform(ks[11], (1,), STATE)
    do_w = uniform(ks[12], (STATE, OBS_FLAT), STATE)
    do_b = uniform(ks[13], (OBS_FLAT,), STATE)

    # ---- fold conv(3x3, stride 2, pad 1) on a 16x16 image into a dense (256, 256) matmul ----
    # output flat index = c*Ho*Wo + i*Wo + j  (== torch NCHW .view flatten order)
    wc_dense = np.zeros((OBS_FLAT, FLAT), np.float32)
    for c in range(CONV_C):
        for i in range(Ho):
            for j in range(Wo):
                o = c * Ho * Wo + i * Wo + j
                for di in range(KSIZE):
                    for dj in range(KSIZE):
                        hh = STRIDE * i + di - PAD
                        ww = STRIDE * j + dj - PAD
                        if 0 <= hh < H and 0 <= ww < W:
                            wc_dense[hh * W + ww, o] = conv_w[c, 0, di, dj]
    bc_dense = np.repeat(conv_b, Ho * Wo).astype(np.float32)

    # ---- one-time padded, lane-aligned kernel weights (block-diagonal over the 3 observations) ----
    wconv = np.zeros((N_OBS * OBS_FLAT, N_OBS * FLAT), np.float32)   # (768, 768)
    bconv = np.zeros((1, N_OBS * FLAT), np.float32)
    wenc = np.zeros((N_OBS * FLAT, N_OBS * EBLK), np.float32)        # (768, 384)
    benc = np.zeros((1, N_OBS * EBLK), np.float32)
    winit = np.zeros((N_OBS * EBLK, LANE), np.float32)               # (384, 128)
    for k in range(N_OBS):
        wconv[k * OBS_FLAT:(k + 1) * OBS_FLAT, k * FLAT:(k + 1) * FLAT] = wc_dense
        bconv[0, k * FLAT:(k + 1) * FLAT] = bc_dense
        wenc[k * FLAT:(k + 1) * FLAT, k * EBLK:k * EBLK + EMBED] = enc_w
        benc[0, k * EBLK:k * EBLK + EMBED] = enc_b
        winit[k * EBLK:k * EBLK + EMBED, :STATE] = init_w[k * EMBED:(k + 1) * EMBED, :]
    binit = np.zeros((1, LANE), np.float32); binit[0, :STATE] = init_b

    wt1s = np.zeros((LANE, LANE), np.float32); wt1s[:STATE, :HIDDEN] = t1_w[:STATE]
    wt1a = np.zeros((LANE, LANE), np.float32); wt1a[:ACTION, :HIDDEN] = t1_w[STATE:]
    bt1 = np.zeros((1, LANE), np.float32); bt1[0, :HIDDEN] = t1_b
    wt2 = np.zeros((LANE, LANE), np.float32); wt2[:HIDDEN, :STATE] = t2_w
    bt2 = np.zeros((1, LANE), np.float32); bt2[0, :STATE] = t2_b

    wdec = np.zeros((LANE, DEC_NP), np.float32)                      # fused reward|obs head
    wdec[:STATE, 0:1] = dr_w
    wdec[:STATE, 1:1 + OBS_FLAT] = do_w
    bdec = np.zeros((1, DEC_NP), np.float32)
    bdec[0, 0] = dr_b[0]
    bdec[0, 1:1 + OBS_FLAT] = do_b

    padded = dict(wconv=wconv, bconv=bconv, wenc=wenc, benc=benc,
                  winit=winit, binit=binit, wt1s=wt1s, wt1a=wt1a, bt1=bt1,
                  wt2=wt2, bt2=bt2, wdec=wdec, bdec=bdec)
    padded = {k: jnp.asarray(v, jnp.float32) for k, v in padded.items()}

    logical = dict(conv_w=conv_w, conv_b=conv_b, enc_w=enc_w, enc_b=enc_b,
                   init_w=init_w, init_b=init_b, t1_w=t1_w, t1_b=t1_b,
                   t2_w=t2_w, t2_b=t2_b, dr_w=dr_w, dr_b=dr_b, do_w=do_w, do_b=do_b)
    return padded, logical


# ------------------------------------------------------------------
# Action one-hot encoding (numpy, mirrors the PyTorch helper exactly,
# including int() truncation — see review note; demo values are chosen
# so truncation and rounding agree).
# ------------------------------------------------------------------
def action_one_hot_encoding(delta, velocity):
    delta_encoding = np.zeros(17, dtype=np.float32)
    idx = int(delta / 0.05)
    delta_encoding[idx + 8] = 1.0
    vel_encoding = np.zeros(5, dtype=np.float32)
    idx_vel = int(velocity / 0.25) - 2
    vel_encoding[idx_vel] = 1.0
    return jnp.asarray(np.concatenate((delta_encoding, vel_encoding), axis=0))


# ------------------------------------------------------------------
# Fused forward pass: one pallas_call per forward
# ------------------------------------------------------------------
@jax.jit
def environment_model_forward(params, obs_m2, obs_m1, obs_0, actions):
    # Pack the 3 observations into row 0 of one lane-dense (8, 768) tile.
    obs_row = jnp.stack([obs_m2, obs_m1, obs_0]).reshape(N_OBS * OBS_FLAT)
    obs_p = jnp.zeros((8, N_OBS * OBS_FLAT), jnp.float32).at[0, :].set(obs_row)
    # Pack the 3 one-hot actions into row 0 of one (8, 384) tile (one 128-lane block per step).
    act_row = jnp.zeros((N_STEP, LANE), jnp.float32).at[:, :ACTION].set(actions)
    act_p = jnp.zeros((8, N_STEP * LANE), jnp.float32).at[0, :].set(act_row.reshape(-1))

    out = pl.pallas_call(
        _env_model_kernel,
        out_shape=jax.ShapeDtypeStruct((8, OUT_W), jnp.float32),
        compiler_params=pltpu.CompilerParams(vmem_limit_bytes=32 * 1024 * 1024),
    )(obs_p, act_p,
      params["wconv"], params["bconv"], params["wenc"], params["benc"],
      params["winit"], params["binit"],
      params["wt1s"], params["wt1a"], params["bt1"],
      params["wt2"], params["bt2"],
      params["wdec"], params["bdec"])

    results = []
    for t in range(N_STEP):
        base = t * DEC_NP
        r = out[0, base:base + 1].reshape(1, 1)
        o = out[0, base + 1:base + 1 + OBS_FLAT].reshape(1, 1, H, W)
        results += [r, o]
    return tuple(results)


# ------------------------------------------------------------------
# Pure-JAX reference (real conv, real concats) for correctness check
# ------------------------------------------------------------------
def reference_forward(lg, obs_m2, obs_m1, obs_0, actions):
    hp = jax.lax.Precision.HIGHEST

    def encoder(obs):
        y = jax.lax.conv_general_dilated(
            obs, jnp.asarray(lg["conv_w"]), window_strides=(STRIDE, STRIDE),
            padding=((PAD, PAD), (PAD, PAD)),
            dimension_numbers=("NCHW", "OIHW", "NCHW"), precision=hp)
        y = jnp.maximum(y + jnp.asarray(lg["conv_b"]).reshape(1, CONV_C, 1, 1), 0.0)
        flat = y.reshape(FLAT)                                 # NCHW flatten
        return jnp.maximum(jnp.dot(flat, lg["enc_w"], precision=hp) + lg["enc_b"], 0.0)

    e = jnp.concatenate([encoder(obs_m2), encoder(obs_m1), encoder(obs_0)])
    state = jnp.maximum(jnp.dot(e, lg["init_w"], precision=hp) + lg["init_b"], 0.0)
    outs = []
    for t in range(N_STEP):
        x = jnp.concatenate([state, actions[t]])
        h1 = jnp.maximum(jnp.dot(x, lg["t1_w"], precision=hp) + lg["t1_b"], 0.0)
        state = jnp.dot(h1, lg["t2_w"], precision=hp) + lg["t2_b"]
        r = (jnp.dot(state, lg["dr_w"], precision=hp) + lg["dr_b"]).reshape(1, 1)
        o = (jnp.dot(state, lg["do_w"], precision=hp) + lg["do_b"]).reshape(1, 1, H, W)
        outs += [r, o]
    return tuple(outs)


# ------------------------------------------------------------------
if __name__ == "__main__":
    key = jax.random.PRNGKey(0)
    kp, k1, k2, k3 = jax.random.split(key, 4)
    params, logical = init_params(kp)

    # Synthetic observations (in place of images read from disk in the original).
    obs_m2 = jax.random.uniform(k1, (1, 1, H, W), jnp.float32)
    obs_m1 = jax.random.uniform(k2, (1, 1, H, W), jnp.float32)
    obs_0 = jax.random.uniform(k3, (1, 1, H, W), jnp.float32)

    # Synthetic (delta, velocity) actions, matching the encoding semantics.
    a0 = action_one_hot_encoding(0.05, 0.75)
    a1 = action_one_hot_encoding(-0.10, 1.00)
    a2 = action_one_hot_encoding(0.20, 0.50)
    actions = jnp.stack([a0, a1, a2])                          # (3, 22)

    outs = environment_model_forward(params, obs_m2, obs_m1, obs_0, actions)
    outs = jax.block_until_ready(outs)

    r0, o0, r1, o1, r2, o2 = outs
    assert r0.shape == (1, 1) and o0.shape == (1, 1, H, W)
    assert r1.shape == (1, 1) and o1.shape == (1, 1, H, W)
    assert r2.shape == (1, 1) and o2.shape == (1, 1, H, W)
    assert all(bool(jnp.all(jnp.isfinite(x))) for x in outs)

    # Numerical check against the pure-JAX reference (validates the conv fold,
    # the block-diagonal batching and the concat-splitting).
    refs = reference_forward(logical, obs_m2, obs_m1, obs_0, actions)
    for got, want in zip(outs, refs):
        np.testing.assert_allclose(np.asarray(got), np.asarray(want), rtol=2e-3, atol=2e-3)

    print("KERNEL_OK")
</pallas_src>

<mosaic_0001>
module attributes {stable_mosaic.version = 11 : i64} {
  func.func @_env_model_kernel(%arg0: memref<8x768xf32, #tpu.memory_space<vmem>>, %arg1: memref<8x384xf32, #tpu.memory_space<vmem>>, %arg2: memref<768x768xf32, #tpu.memory_space<vmem>>, %arg3: memref<1x768xf32, #tpu.memory_space<vmem>>, %arg4: memref<768x384xf32, #tpu.memory_space<vmem>>, %arg5: memref<1x384xf32, #tpu.memory_space<vmem>>, %arg6: memref<384x128xf32, #tpu.memory_space<vmem>>, %arg7: memref<1x128xf32, #tpu.memory_space<vmem>>, %arg8: memref<128x128xf32, #tpu.memory_space<vmem>>, %arg9: memref<128x128xf32, #tpu.memory_space<vmem>>, %arg10: memref<1x128xf32, #tpu.memory_space<vmem>>, %arg11: memref<128x128xf32, #tpu.memory_space<vmem>>, %arg12: memref<1x128xf32, #tpu.memory_space<vmem>>, %arg13: memref<128x384xf32, #tpu.memory_space<vmem>>, %arg14: memref<1x384xf32, #tpu.memory_space<vmem>>, %arg15: memref<8x1152xf32, #tpu.memory_space<vmem>>) attributes {dimension_semantics = [], scalar_prefetch = 0 : i64, scratch_operands = 0 : i64, tpu.core_type = #tpu.core_type<tc>} {
    %c0 = arith.constant 0 : index
    %c0_0 = arith.constant 0 : index
    %0 = vector.load %arg0[%c0, %c0_0] : memref<8x768xf32, #tpu.memory_space<vmem>>, vector<8x768xf32>
    %c0_1 = arith.constant 0 : index
    %c0_2 = arith.constant 0 : index
    %1 = vector.load %arg2[%c0_1, %c0_2] : memref<768x768xf32, #tpu.memory_space<vmem>>, vector<768x768xf32>
    %cst = arith.constant dense<0.000000e+00> : vector<8x768xf32>
    %2 = tpu.matmul %0, %1, %cst {dimension_numbers = #tpu.dot_dimension_numbers<[1], [0], [0], [1], [0, 0, 1, 1], [], []>} : vector<8x768xf32>, vector<768x768xf32>, vector<8x768xf32> -> vector<8x768xf32>
    %c0_3 = arith.constant 0 : index
    %c0_4 = arith.constant 0 : index
    %3 = vector.load %arg3[%c0_3, %c0_4] : memref<1x768xf32, #tpu.memory_space<vmem>>, vector<1x768xf32>
    %4 = vector.broadcast %3 : vector<1x768xf32> to vector<8x768xf32>
    %5 = arith.addf %2, %4 : vector<8x768xf32>
    %cst_5 = arith.constant 0.000000e+00 : f32
    %6 = vector.broadcast %cst_5 : f32 to vector<8x768xf32>
    %7 = arith.maximumf %5, %6 : vector<8x768xf32>
    %c0_6 = arith.constant 0 : index
    %c0_7 = arith.constant 0 : index
    %8 = vector.load %arg4[%c0_6, %c0_7] : memref<768x384xf32, #tpu.memory_space<vmem>>, vector<768x384xf32>
    %cst_8 = arith.constant dense<0.000000e+00> : vector<8x384xf32>
    %9 = tpu.matmul %7, %8, %cst_8 {dimension_numbers = #tpu.dot_dimension_numbers<[1], [0], [0], [1], [0, 0, 1, 1], [], []>} : vector<8x768xf32>, vector<768x384xf32>, vector<8x384xf32> -> vector<8x384xf32>
    %c0_9 = arith.constant 0 : index
    %c0_10 = arith.constant 0 : index
    %10 = vector.load %arg5[%c0_9, %c0_10] : memref<1x384xf32, #tpu.memory_space<vmem>>, vector<1x384xf32>
    %11 = vector.broadcast %10 : vector<1x384xf32> to vector<8x384xf32>
    %12 = arith.addf %9, %11 : vector<8x384xf32>
    %cst_11 = arith.constant 0.000000e+00 : f32
    %13 = vector.broadcast %cst_11 : f32 to vector<8x384xf32>
    %14 = arith.maximumf %12, %13 : vector<8x384xf32>
    %c0_12 = arith.constant 0 : index
    %c0_13 = arith.constant 0 : index
    %15 = vector.load %arg6[%c0_12, %c0_13] : memref<384x128xf32, #tpu.memory_space<vmem>>, vector<384x128xf32>
    %cst_14 = arith.constant dense<0.000000e+00> : vector<8x128xf32>
    %16 = tpu.matmul %14, %15, %cst_14 {dimension_numbers = #tpu.dot_dimension_numbers<[1], [0], [0], [1], [0, 0, 1, 1], [], []>} : vector<8x384xf32>, vector<384x128xf32>, vector<8x128xf32> -> vector<8x128xf32>
    %c0_15 = arith.constant 0 : index
    %c0_16 = arith.constant 0 : index
    %17 = vector.load %arg7[%c0_15, %c0_16] : memref<1x128xf32, #tpu.memory_space<vmem>>, vector<1x128xf32>
    %18 = vector.broadcast %17 : vector<1x128xf32> to vector<8x128xf32>
    %19 = arith.addf %16, %18 : vector<8x128xf32>
    %cst_17 = arith.constant 0.000000e+00 : f32
    %20 = vector.broadcast %cst_17 : f32 to vector<8x128xf32>
    %21 = arith.maximumf %19, %20 : vector<8x128xf32>
    %c0_18 = arith.constant 0 : index
    %c0_19 = arith.constant 0 : index
    %22 = vector.load %arg1[%c0_18, %c0_19] : memref<8x384xf32, #tpu.memory_space<vmem>>, vector<8x128xf32>
    %c0_20 = arith.constant 0 : index
    %c0_21 = arith.constant 0 : index
    %23 = vector.load %arg8[%c0_20, %c0_21] : memref<128x128xf32, #tpu.memory_space<vmem>>, vector<128x128xf32>
    %cst_22 = arith.constant dense<0.000000e+00> : vector<8x128xf32>
    %24 = tpu.matmul %21, %23, %cst_22 {dimension_numbers = #tpu.dot_dimension_numbers<[1], [0], [0], [1], [0, 0, 1, 1], [], []>} : vector<8x128xf32>, vector<128x128xf32>, vector<8x128xf32> -> vector<8x128xf32>
    %c0_23 = arith.constant 0 : index
    %c0_24 = arith.constant 0 : index
    %25 = vector.load %arg9[%c0_23, %c0_24] : memref<128x128xf32, #tpu.memory_space<vmem>>, vector<128x128xf32>
    %cst_25 = arith.constant dense<0.000000e+00> : vector<8x128xf32>
    %26 = tpu.matmul %22, %25, %cst_25 {dimension_numbers = #tpu.dot_dimension_numbers<[1], [0], [0], [1], [0, 0, 1, 1], [], []>} : vector<8x128xf32>, vector<128x128xf32>, vector<8x128xf32> -> vector<8x128xf32>
    %27 = arith.addf %24, %26 : vector<8x128xf32>
    %c0_26 = arith.constant 0 : index
    %c0_27 = arith.constant 0 : index
    %28 = vector.load %arg10[%c0_26, %c0_27] : memref<1x128xf32, #tpu.memory_space<vmem>>, vector<1x128xf32>
    %29 = vector.broadcast %28 : vector<1x128xf32> to vector<8x128xf32>
    %30 = arith.addf %27, %29 : vector<8x128xf32>
    %cst_28 = arith.constant 0.000000e+00 : f32
    %31 = vector.broadcast %cst_28 : f32 to vector<8x128xf32>
    %32 = arith.maximumf %30, %31 : vector<8x128xf32>
    %c0_29 = arith.constant 0 : index
    %c0_30 = arith.constant 0 : index
    %33 = vector.load %arg11[%c0_29, %c0_30] : memref<128x128xf32, #tpu.memory_space<vmem>>, vector<128x128xf32>
    %cst_31 = arith.constant dense<0.000000e+00> : vector<8x128xf32>
    %34 = tpu.matmul %32, %33, %cst_31 {dimension_numbers = #tpu.dot_dimension_numbers<[1], [0], [0], [1], [0, 0, 1, 1], [], []>} : vector<8x128xf32>, vector<128x128xf32>, vector<8x128xf32> -> vector<8x128xf32>
    %c0_32 = arith.constant 0 : index
    %c0_33 = arith.constant 0 : index
    %35 = vector.load %arg12[%c0_32, %c0_33] : memref<1x128xf32, #tpu.memory_space<vmem>>, vector<1x128xf32>
    %36 = vector.broadcast %35 : vector<1x128xf32> to vector<8x128xf32>
    %37 = arith.addf %34, %36 : vector<8x128xf32>
    %c0_34 = arith.constant 0 : index
    %c0_35 = arith.constant 0 : index
    %38 = vector.load %arg13[%c0_34, %c0_35] : memref<128x384xf32, #tpu.memory_space<vmem>>, vector<128x384xf32>
    %cst_36 = arith.constant dense<0.000000e+00> : vector<8x384xf32>
    %39 = tpu.matmul %37, %38, %cst_36 {dimension_numbers = #tpu.dot_dimension_numbers<[1], [0], [0], [1], [0, 0, 1, 1], [], []>} : vector<8x128xf32>, vector<128x384xf32>, vector<8x384xf32> -> vector<8x384xf32>
    %c0_37 = arith.constant 0 : index
    %c0_38 = arith.constant 0 : index
    %40 = vector.load %arg14[%c0_37, %c0_38] : memref<1x384xf32, #tpu.memory_space<vmem>>, vector<1x384xf32>
    %41 = vector.broadcast %40 : vector<1x384xf32> to vector<8x384xf32>
    %42 = arith.addf %39, %41 : vector<8x384xf32>
    %c0_39 = arith.constant 0 : index
    %c0_40 = arith.constant 0 : index
    %43 = vector.load %arg15[%c0_39, %c0_40] : memref<8x1152xf32, #tpu.memory_space<vmem>>, vector<8x384xf32>
    tpu.vector_store %arg15[%c0_39, %c0_40], %42 {strides = array<i32>} : memref<8x1152xf32, #tpu.memory_space<vmem>>, vector<8x384xf32>,
    %c0_41 = arith.constant 0 : index
    %c128 = arith.constant 128 : index
    %44 = vector.load %arg1[%c0_41, %c128] : memref<8x384xf32, #tpu.memory_space<vmem>>, vector<8x128xf32>
    %c0_42 = arith.constant 0 : index
    %c0_43 = arith.constant 0 : index
    %45 = vector.load %arg8[%c0_42, %c0_43] : memref<128x128xf32, #tpu.memory_space<vmem>>, vector<128x128xf32>
    %cst_44 = arith.constant dense<0.000000e+00> : vector<8x128xf32>
    %46 = tpu.matmul %37, %45, %cst_44 {dimension_numbers = #tpu.dot_dimension_numbers<[1], [0], [0], [1], [0, 0, 1, 1], [], []>} : vector<8x128xf32>, vector<128x128xf32>, vector<8x128xf32> -> vector<8x128xf32>
    %c0_45 = arith.constant 0 : index
    %c0_46 = arith.constant 0 : index
    %47 = vector.load %arg9[%c0_45, %c0_46] : memref<128x128xf32, #tpu.memory_space<vmem>>, vector<128x128xf32>
    %cst_47 = arith.constant dense<0.000000e+00> : vector<8x128xf32>
    %48 = tpu.matmul %44, %47, %cst_47 {dimension_numbers = #tpu.dot_dimension_numbers<[1], [0], [0], [1], [0, 0, 1, 1], [], []>} : vector<8x128xf32>, vector<128x128xf32>, vector<8x128xf32> -> vector<8x128xf32>
    %49 = arith.addf %46, %48 : vector<8x128xf32>
    %c0_48 = arith.constant 0 : index
    %c0_49 = arith.constant 0 : index
    %50 = vector.load %arg10[%c0_48, %c0_49] : memref<1x128xf32, #tpu.memory_space<vmem>>, vector<1x128xf32>
    %51 = vector.broadcast %50 : vector<1x128xf32> to vector<8x128xf32>
    %52 = arith.addf %49, %51 : vector<8x128xf32>
    %cst_50 = arith.constant 0.000000e+00 : f32
    %53 = vector.broadcast %cst_50 : f32 to vector<8x128xf32>
    %54 = arith.maximumf %52, %53 : vector<8x128xf32>
    %c0_51 = arith.constant 0 : index
    %c0_52 = arith.constant 0 : index
    %55 = vector.load %arg11[%c0_51, %c0_52] : memref<128x128xf32, #tpu.memory_space<vmem>>, vector<128x128xf32>
    %cst_53 = arith.constant dense<0.000000e+00> : vector<8x128xf32>
    %56 = tpu.matmul %54, %55, %cst_53 {dimension_numbers = #tpu.dot_dimension_numbers<[1], [0], [0], [1], [0, 0, 1, 1], [], []>} : vector<8x128xf32>, vector<128x128xf32>, vector<8x128xf32> -> vector<8x128xf32>
    %c0_54 = arith.constant 0 : index
    %c0_55 = arith.constant 0 : index
    %57 = vector.load %arg12[%c0_54, %c0_55] : memref<1x128xf32, #tpu.memory_space<vmem>>, vector<1x128xf32>
    %58 = vector.broadcast %57 : vector<1x128xf32> to vector<8x128xf32>
    %59 = arith.addf %56, %58 : vector<8x128xf32>
    %c0_56 = arith.constant 0 : index
    %c0_57 = arith.constant 0 : index
    %60 = vector.load %arg13[%c0_56, %c0_57] : memref<128x384xf32, #tpu.memory_space<vmem>>, vector<128x384xf32>
    %cst_58 = arith.constant dense<0.000000e+00> : vector<8x384xf32>
    %61 = tpu.matmul %59, %60, %cst_58 {dimension_numbers = #tpu.dot_dimension_numbers<[1], [0], [0], [1], [0, 0, 1, 1], [], []>} : vector<8x128xf32>, vector<128x384xf32>, vector<8x384xf32> -> vector<8x384xf32>
    %c0_59 = arith.constant 0 : index
    %c0_60 = arith.constant 0 : index
    %62 = vector.load %arg14[%c0_59, %c0_60] : memref<1x384xf32, #tpu.memory_space<vmem>>, vector<1x384xf32>
    %63 = vector.broadcast %62 : vector<1x384xf32> to vector<8x384xf32>
    %64 = arith.addf %61, %63 : vector<8x384xf32>
    %c0_61 = arith.constant 0 : index
    %c384 = arith.constant 384 : index
    %65 = vector.load %arg15[%c0_61, %c384] : memref<8x1152xf32, #tpu.memory_space<vmem>>, vector<8x384xf32>
    tpu.vector_store %arg15[%c0_61, %c384], %64 {strides = array<i32>} : memref<8x1152xf32, #tpu.memory_space<vmem>>, vector<8x384xf32>,
    %c0_62 = arith.constant 0 : index
    %c256 = arith.constant 256 : index
    %66 = vector.load %arg1[%c0_62, %c256] : memref<8x384xf32, #tpu.memory_space<vmem>>, vector<8x128xf32>
    %c0_63 = arith.constant 0 : index
    %c0_64 = arith.constant 0 : index
    %67 = vector.load %arg8[%c0_63, %c0_64] : memref<128x128xf32, #tpu.memory_space<vmem>>, vector<128x128xf32>
    %cst_65 = arith.constant dense<0.000000e+00> : vector<8x128xf32>
    %68 = tpu.matmul %59, %67, %cst_65 {dimension_numbers = #tpu.dot_dimension_numbers<[1], [0], [0], [1], [0, 0, 1, 1], [], []>} : vector<8x128xf32>, vector<128x128xf32>, vector<8x128xf32> -> vector<8x128xf32>
    %c0_66 = arith.constant 0 : index
    %c0_67 = arith.constant 0 : index
    %69 = vector.load %arg9[%c0_66, %c0_67] : memref<128x128xf32, #tpu.memory_space<vmem>>, vector<128x128xf32>
    %cst_68 = arith.constant dense<0.000000e+00> : vector<8x128xf32>
    %70 = tpu.matmul %66, %69, %cst_68 {dimension_numbers = #tpu.dot_dimension_numbers<[1], [0], [0], [1], [0, 0, 1, 1], [], []>} : vector<8x128xf32>, vector<128x128xf32>, vector<8x128xf32> -> vector<8x128xf32>
    %71 = arith.addf %68, %70 : vector<8x128xf32>
    %c0_69 = arith.constant 0 : index
    %c0_70 = arith.constant 0 : index
    %72 = vector.load %arg10[%c0_69, %c0_70] : memref<1x128xf32, #tpu.memory_space<vmem>>, vector<1x128xf32>
    %73 = vector.broadcast %72 : vector<1x128xf32> to vector<8x128xf32>
    %74 = arith.addf %71, %73 : vector<8x128xf32>
    %cst_71 = arith.constant 0.000000e+00 : f32
    %75 = vector.broadcast %cst_71 : f32 to vector<8x128xf32>
    %76 = arith.maximumf %74, %75 : vector<8x128xf32>
    %c0_72 = arith.constant 0 : index
    %c0_73 = arith.constant 0 : index
    %77 = vector.load %arg11[%c0_72, %c0_73] : memref<128x128xf32, #tpu.memory_space<vmem>>, vector<128x128xf32>
    %cst_74 = arith.constant dense<0.000000e+00> : vector<8x128xf32>
    %78 = tpu.matmul %76, %77, %cst_74 {dimension_numbers = #tpu.dot_dimension_numbers<[1], [0], [0], [1], [0, 0, 1, 1], [], []>} : vector<8x128xf32>, vector<128x128xf32>, vector<8x128xf32> -> vector<8x128xf32>
    %c0_75 = arith.constant 0 : index
    %c0_76 = arith.constant 0 : index
    %79 = vector.load %arg12[%c0_75, %c0_76] : memref<1x128xf32, #tpu.memory_space<vmem>>, vector<1x128xf32>
    %80 = vector.broadcast %79 : vector<1x128xf32> to vector<8x128xf32>
    %81 = arith.addf %78, %80 : vector<8x128xf32>
    %c0_77 = arith.constant 0 : index
    %c0_78 = arith.constant 0 : index
    %82 = vector.load %arg13[%c0_77, %c0_78] : memref<128x384xf32, #tpu.memory_space<vmem>>, vector<128x384xf32>
    %cst_79 = arith.constant dense<0.000000e+00> : vector<8x384xf32>
    %83 = tpu.matmul %81, %82, %cst_79 {dimension_numbers = #tpu.dot_dimension_numbers<[1], [0], [0], [1], [0, 0, 1, 1], [], []>} : vector<8x128xf32>, vector<128x384xf32>, vector<8x384xf32> -> vector<8x384xf32>
    %c0_80 = arith.constant 0 : index
    %c0_81 = arith.constant 0 : index
    %84 = vector.load %arg14[%c0_80, %c0_81] : memref<1x384xf32, #tpu.memory_space<vmem>>, vector<1x384xf32>
    %85 = vector.broadcast %84 : vector<1x384xf32> to vector<8x384xf32>
    %86 = arith.addf %83, %85 : vector<8x384xf32>
    %c0_82 = arith.constant 0 : index
    %c768 = arith.constant 768 : index
    %87 = vector.load %arg15[%c0_82, %c768] : memref<8x1152xf32, #tpu.memory_space<vmem>>, vector<8x384xf32>
    tpu.vector_store %arg15[%c0_82, %c768], %86 {strides = array<i32>} : memref<8x1152xf32, #tpu.memory_space<vmem>>, vector<8x384xf32>,
    return
  }
}

</mosaic_0001>

<llo_original>
// kernel: squeeze.5
$region0: #{squeeze.5}
  %s0 = inlined_call_operand.vmem [shape: f32[256], index: 0, kind: input, shape index: {}]
  %s1 = inlined_call_operand.hbm [shape: f32[1,1,16,16], index: 1, kind: output, shape index: {}]
  $region1: #{squeeze.5} parent=0
    #allocation0 [shape = 'u8[8192]{0}', space=vmem, size = 0x2000, scoped, tag = 'operand span for operand 1']
    #allocation1 [shape = 's32[1]{0}', space=sflag, size = 0x4, scoped, tag = 'scoped memory for squeeze.5']
    #allocation2 [shape = 'u8[4096]{0}', space=vmem, size = 0x1000, scoped, tag = 'scoped mem for input reshape']
    %2 = vsyncpa [#allocation1], 0
    %s4 = sshllo.u32 0, 2
    %v5 = vld [vmem:[%s0] sm:%s4]
    %6 = vst [vmem:[#allocation2] sm:%s4] %v5
    %v7 = vld [vmem:[#allocation2] sm:$0x3]
    %vm8 = vcmask 130048
    %9 = vst.msk [vmem:[#allocation0] ss:$8 sm:$0x3] %vm8, %v7
    %v10 = vld [vmem:[#allocation2] sm:$0x3]
    %11 = vrot.lane.b32.xlu0 %v10, 112
    %v12 = vpop.permute.xlu0 %11
    %vm13 = vcmask 130048
    %s14 = scalar_lea.vmem [#allocation0], 1
    %15 = vst.msk [vmem:[%s14] ss:$8 sm:$0x3] %vm13, %v12
    %v16 = vld [vmem:[#allocation2] sm:$0x3]
    %17 = vrot.lane.b32.xlu0 %v16, 96
    %v18 = vpop.permute.xlu0 %17
    %vm19 = vcmask 130048
    %s20 = scalar_lea.vmem [#allocation0], 2
    %21 = vst.msk [vmem:[%s20] ss:$8 sm:$0x3] %vm19, %v18
    %v22 = vld [vmem:[#allocation2] sm:$0x3]
    %23 = vrot.lane.b32.xlu0 %v22, 80
    %v24 = vpop.permute.xlu0 %23
    %vm25 = vcmask 130048
    %s26 = scalar_lea.vmem [#allocation0], 3
    %27 = vst.msk [vmem:[%s26] ss:$8 sm:$0x3] %vm25, %v24
    %v28 = vld [vmem:[#allocation2] sm:$0x3]
    %29 = vrot.lane.b32.xlu0 %v28, 64
    %v30 = vpop.permute.xlu0 %29
    %vm31 = vcmask 130048
    %s32 = scalar_lea.vmem [#allocation0], 4
    %33 = vst.msk [vmem:[%s32] ss:$8 sm:$0x3] %vm31, %v30
    %v34 = vld [vmem:[#allocation2] sm:$0x3]
    %35 = vrot.lane.b32.xlu0 %v34, 48
    %v36 = vpop.permute.xlu0 %35
    %vm37 = vcmask 130048
    %s38 = scalar_lea.vmem [#allocation0], 5
    %39 = vst.msk [vmem:[%s38] ss:$8 sm:$0x3] %vm37, %v36
    %v40 = vld [vmem:[#allocation2] sm:$0x3]
    %41 = vrot.lane.b32.xlu0 %v40, 32
    %v42 = vpop.permute.xlu0 %41
    %vm43 = vcmask 130048
    %s44 = scalar_lea.vmem [#allocation0], 6
    %45 = vst.msk [vmem:[%s44] ss:$8 sm:$0x3] %vm43, %v42
    %v46 = vld [vmem:[#allocation2] sm:$0x3]
    %47 = vrot.lane.b32.xlu0 %v46, 16
    %v48 = vpop.permute.xlu0 %47
    %vm49 = vcmask 130048
    %s50 = scalar_lea.vmem [#allocation0], 7
    %51 = vst.msk [vmem:[%s50] ss:$8 sm:$0x3] %vm49, %v48
    %s53 = ssub.s32 256, 256
    %54 = vsyncadd [#allocation1], %s53
    %s56 = sshll.u32 [#allocation0], 4
    %s57 = int_to_ptr.vmem [resolvable:$true] %s56
    %59 = dma.vmem_to_hbm [thread:$0]  %s57, 256, %s1, [#allocation1]
    %60 = dma.done [#allocation1], 256
    %61 = vsyncpa [#allocation1], 1

// kernel: environment_model_forward.1
$region0: #{environment_model_forward.1}
  #allocation0 [shape = 'u32[]', space=smem, size = 0x4, offset = 0x4, fixed_abs, tag = 'smem constant byte address 0x4 - core index']
  #allocation1 [shape = 'u32[144,128]{1,0:T(1,128)}', space=vmem, size = 0x12000, scoped, tag = 'internal scratch']
  %s0 = inlined_call_operand.vmem [shape: f32[8,768], index: 0, kind: input, shape index: {}]
  %s1 = inlined_call_operand.vmem [shape: f32[8,384], index: 1, kind: input, shape index: {}]
  %s2 = inlined_call_operand.hbm [shape: f32[768,768], index: 2, kind: input, shape index: {}]
  %s3 = inlined_call_operand.hbm [shape: f32[1,768], index: 3, kind: input, shape index: {}]
  %s4 = inlined_call_operand.hbm [shape: f32[768,384], index: 4, kind: input, shape index: {}]
  %s5 = inlined_call_operand.hbm [shape: f32[1,384], index: 5, kind: input, shape index: {}]
  %s6 = inlined_call_operand.hbm [shape: f32[384,128], index: 6, kind: input, shape index: {}]
  %s7 = inlined_call_operand.hbm [shape: f32[1,128], index: 7, kind: input, shape index: {}]
  %s8 = inlined_call_operand.hbm [shape: f32[128,128], index: 8, kind: input, shape index: {}]
  %s9 = inlined_call_operand.hbm [shape: f32[128,128], index: 9, kind: input, shape index: {}]
  %s10 = inlined_call_operand.hbm [shape: f32[1,128], index: 10, kind: input, shape index: {}]
  %s11 = inlined_call_operand.hbm [shape: f32[128,128], index: 11, kind: input, shape index: {}]
  %s12 = inlined_call_operand.hbm [shape: f32[1,128], index: 12, kind: input, shape index: {}]
  %s13 = inlined_call_operand.hbm [shape: f32[128,384], index: 13, kind: input, shape index: {}]
  %s14 = inlined_call_operand.hbm [shape: f32[1,384], index: 14, kind: input, shape index: {}]
  %s15 = inlined_call_operand.vmem [shape: f32[8,1152], index: 15, kind: output, shape index: {}]
  %s16 = sld [smem:[#allocation0]]
  $region122: #{environment_model_forward.1} parent=0
    _
  %s18 = ssub.s32 1, %s16
  %s19 = scalar_select 0, %s18, %s16
  $region1: #{environment_model_forward.1} parent=0
    #allocation2 [shape = 'u8[2359296]{0}', space=vmem, size = 0x240000, scoped, tag = 'input window, operand 2, single buffered']
    #allocation3 [shape = 's32[1]{0}', space=sflag, size = 0x4, scoped, tag = 'scoped memory for environment_model_forward.1']
    #allocation4 [shape = 'u8[3072]{0}', space=vmem, size = 0xc00, scoped, tag = 'input window, operand 3, single buffered']
    #allocation5 [shape = 's32[1]{0}', space=sflag, size = 0x4, scoped, tag = 'scoped memory for environment_model_forward.1']
    #allocation6 [shape = 'u8[1179648]{0}', space=vmem, size = 0x120000, scoped, tag = 'input window, operand 4, single buffered']
    #allocation7 [shape = 'u8[1536]{0}', space=vmem, size = 0x800, scoped, tag = 'input window, operand 5, single buffered']
    #allocation8 [shape = 's32[1]{0}', space=sflag, size = 0x4, scoped, tag = 'scoped memory for environment_model_forward.1']
    #allocation9 [shape = 'u8[196608]{0}', space=vmem, size = 0x30000, scoped, tag = 'input window, operand 6, single buffered']
    #allocation10 [shape = 'u8[512]{0}', space=vmem, size = 0x400, scoped, tag = 'input window, operand 7, single buffered']
    #allocation11 [shape = 's32[1]{0}', space=sflag, size = 0x4, scoped, tag = 'scoped memory for environment_model_forward.1']
    #allocation12 [shape = 'u8[65536]{0}', space=vmem, size = 0x10000, scoped, tag = 'input window, operand 8, single buffered']
    #allocation13 [shape = 'u8[65536]{0}', space=vmem, size = 0x10000, scoped, tag = 'input window, operand 9, single buffered']
    #allocation14 [shape = 's32[1]{0}', space=sflag, size = 0x4, scoped, tag = 'scoped memory for environment_model_forward.1']
    #allocation15 [shape = 'u8[512]{0}', space=vmem, size = 0x400, scoped, tag = 'input window, operand 10, single buffered']
    #allocation16 [shape = 'u8[65536]{0}', space=vmem, size = 0x10000, scoped, tag = 'input window, operand 11, single buffered']
    #allocation17 [shape = 's32[1]{0}', space=sflag, size = 0x4, scoped, tag = 'scoped memory for environment_model_forward.1']
    #allocation18 [shape = 'u8[512]{0}', space=vmem, size = 0x400, scoped, tag = 'input window, operand 12, single buffered']
    #allocation19 [shape = 'u8[196608]{0}', space=vmem, size = 0x30000, scoped, tag = 'input window, operand 13, single buffered']
    #allocation20 [shape = 's32[1]{0}', space=sflag, size = 0x4, scoped, tag = 'scoped memory for environment_model_forward.1']
    #allocation21 [shape = 'u8[1536]{0}', space=vmem, size = 0x800, scoped, tag = 'input window, operand 14, single buffered']
    %20 = vsyncpa [#allocation3], 0
    %21 = vsyncpa [#allocation5], 0
    %22 = vsyncpa [#allocation8], 0
    %23 = vsyncpa [#allocation11], 0
    %24 = vsyncpa [#allocation14], 0
    %25 = vsyncpa [#allocation17], 0
    %26 = vsyncpa [#allocation20], 0
    // Predicated region
    $region2: #{environment_model_forward.1} parent=1 // pred_check
      _
    $region3: #{environment_model_forward.1} parent=1 // pred_check_branch
      %28 = sbr.rel (0) target = $region5
    $region4: #{environment_model_forward.1} parent=1 // pred_region
      _
    $region5: #{environment_model_forward.1} parent=1 // pred_fallthru
      _
    // Predicated region
    $region6: #{environment_model_forward.1} parent=1 // pred_check
      _
    $region7: #{environment_model_forward.1} parent=1 // pred_check_branch
      %30 = sbr.rel (0) target = $region9
    $region8: #{environment_model_forward.1} parent=1 // pred_region
      _
    $region9: #{environment_model_forward.1} parent=1 // pred_fallthru
      _
    // Predicated region
    $region10: #{environment_model_forward.1} parent=1 // pred_check
      _
    $region11: #{environment_model_forward.1} parent=1 // pred_check_branch
      %32 = sbr.rel (0) target = $region13
    $region12: #{environment_model_forward.1} parent=1 // pred_region
      %s34 = ssub.s32 73728, 73728
      %35 = vsyncadd [#allocation3], %s34
      %s36 = sshll.u32 [#allocation2], 4
      %s37 = int_to_ptr.vmem [resolvable:$true] %s36
      %42 = dma.hbm_to_vmem [thread:$0]  %s2, 73728, %s37, [#allocation3], 768, 768, 48
    $region13: #{environment_model_forward.1} parent=1 // pred_fallthru
      _
    // Predicated region
    $region14: #{environment_model_forward.1} parent=1 // pred_check
      _
    $region15: #{environment_model_forward.1} parent=1 // pred_check_branch
      %44 = sbr.rel (0) target = $region17
    $region16: #{environment_model_forward.1} parent=1 // pred_region
      %s46 = ssub.s32 96, 96
      %47 = vsyncadd [#allocation5], %s46
      %s49 = sshll.u32 [#allocation4], 4
      %s50 = int_to_ptr.vmem [resolvable:$true] %s49
      %52 = dma.hbm_to_vmem [thread:$0]  %s3, 96, %s50, [#allocation5]
    $region17: #{environment_model_forward.1} parent=1 // pred_fallthru
      _
    // Predicated region
    $region18: #{environment_model_forward.1} parent=1 // pred_check
      _
    $region19: #{environment_model_forward.1} parent=1 // pred_check_branch
      %54 = sbr.rel (0) target = $region21
    $region20: #{environment_model_forward.1} parent=1 // pred_region
      %s56 = ssub.s32 36864, 36864
      %57 = vsyncadd [#allocation5], %s56
      %s58 = sshll.u32 [#allocation6], 4
      %s59 = int_to_ptr.vmem [resolvable:$true] %s58
      %64 = dma.hbm_to_vmem [thread:$0]  %s4, 36864, %s59, [#allocation5], 384, 384, 24
    $region21: #{environment_model_forward.1} parent=1 // pred_fallthru
      _
    // Predicated region
    $region22: #{environment_model_forward.1} parent=1 // pred_check
      _
    $region23: #{environment_model_forward.1} parent=1 // pred_check_branch
      %66 = sbr.rel (0) target = $region25
    $region24: #{environment_model_forward.1} parent=1 // pred_region
      %s68 = ssub.s32 48, 48
      %69 = vsyncadd [#allocation8], %s68
      %s71 = sshll.u32 [#allocation7], 4
      %s72 = int_to_ptr.vmem [resolvable:$true] %s71
      %74 = dma.hbm_to_vmem [thread:$0]  %s5, 48, %s72, [#allocation8]
    $region25: #{environment_model_forward.1} parent=1 // pred_fallthru
      _
    // Predicated region
    $region26: #{environment_model_forward.1} parent=1 // pred_check
      _
    $region27: #{environment_model_forward.1} parent=1 // pred_check_branch
      %76 = sbr.rel (0) target = $region29
    $region28: #{environment_model_forward.1} parent=1 // pred_region
      %s78 = ssub.s32 6144, 6144
      %79 = vsyncadd [#allocation8], %s78
      %s80 = sshll.u32 [#allocation9], 4
      %s81 = int_to_ptr.vmem [resolvable:$true] %s80
      %86 = dma.hbm_to_vmem [thread:$0]  %s6, 6144, %s81, [#allocation8], 128, 128, 8
    $region29: #{environment_model_forward.1} parent=1 // pred_fallthru
      _
    // Predicated region
    $region30: #{environment_model_forward.1} parent=1 // pred_check
      _
    $region31: #{environment_model_forward.1} parent=1 // pred_check_branch
      %88 = sbr.rel (0) target = $region33
    $region32: #{environment_model_forward.1} parent=1 // pred_region
      %s90 = ssub.s32 16, 16
      %91 = vsyncadd [#allocation11], %s90
      %s93 = sshll.u32 [#allocation10], 4
      %s94 = int_to_ptr.vmem [resolvable:$true] %s93
      %96 = dma.hbm_to_vmem [thread:$0]  %s7, 16, %s94, [#allocation11]
    $region33: #{environment_model_forward.1} parent=1 // pred_fallthru
      _
    // Predicated region
    $region34: #{environment_model_forward.1} parent=1 // pred_check
      _
    $region35: #{environment_model_forward.1} parent=1 // pred_check_branch
      %98 = sbr.rel (0) target = $region37
    $region36: #{environment_model_forward.1} parent=1 // pred_region
      %s100 = ssub.s32 2048, 2048
      %101 = vsyncadd [#allocation11], %s100
      %s102 = sshll.u32 [#allocation12], 4
      %s103 = int_to_ptr.vmem [resolvable:$true] %s102
      %108 = dma.hbm_to_vmem [thread:$0]  %s8, 2048, %s103, [#allocation11], 128, 128, 8
    $region37: #{environment_model_forward.1} parent=1 // pred_fallthru
      _
    // Predicated region
    $region38: #{environment_model_forward.1} parent=1 // pred_check
      _
    $region39: #{environment_model_forward.1} parent=1 // pred_check_branch
      %110 = sbr.rel (0) target = $region41
    $region40: #{environment_model_forward.1} parent=1 // pred_region
      %s112 = ssub.s32 2048, 2048
      %113 = vsyncadd [#allocation14], %s112
      %s114 = sshll.u32 [#allocation13], 4
      %s115 = int_to_ptr.vmem [resolvable:$true] %s114
      %120 = dma.hbm_to_vmem [thread:$0]  %s9, 2048, %s115, [#allocation14], 128, 128, 8
    $region41: #{environment_model_forward.1} parent=1 // pred_fallthru
      _
    // Predicated region
    $region42: #{environment_model_forward.1} parent=1 // pred_check
      _
    $region43: #{environment_model_forward.1} parent=1 // pred_check_branch
      %122 = sbr.rel (0) target = $region45
    $region44: #{environment_model_forward.1} parent=1 // pred_region
      %s124 = ssub.s32 16, 16
      %125 = vsyncadd [#allocation14], %s124
      %s127 = sshll.u32 [#allocation15], 4
      %s128 = int_to_ptr.vmem [resolvable:$true] %s127
      %130 = dma.hbm_to_vmem [thread:$0]  %s10, 16, %s128, [#allocation14]
    $region45: #{environment_model_forward.1} parent=1 // pred_fallthru
      _
    // Predicated region
    $region46: #{environment_model_forward.1} parent=1 // pred_check
      _
    $region47: #{environment_model_forward.1} parent=1 // pred_check_branch
      %132 = sbr.rel (0) target = $region49
    $region48: #{environment_model_forward.1} parent=1 // pred_region
      %s134 = ssub.s32 2048, 2048
      %135 = vsyncadd [#allocation17], %s134
      %s136 = sshll.u32 [#allocation16], 4
      %s137 = int_to_ptr.vmem [resolvable:$true] %s136
      %142 = dma.hbm_to_vmem [thread:$0]  %s11, 2048, %s137, [#allocation17], 128, 128, 8
    $region49: #{environment_model_forward.1} parent=1 // pred_fallthru
      _
    // Predicated region
    $region50: #{environment_model_forward.1} parent=1 // pred_check
      _
    $region51: #{environment_model_forward.1} parent=1 // pred_check_branch
      %144 = sbr.rel (0) target = $region53
    $region52: #{environment_model_forward.1} parent=1 // pred_region
      %s146 = ssub.s32 16, 16
      %147 = vsyncadd [#allocation17], %s146
      %s149 = sshll.u32 [#allocation18], 4
      %s150 = int_to_ptr.vmem [resolvable:$true] %s149
      %152 = dma.hbm_to_vmem [thread:$0]  %s12, 16, %s150, [#allocation17]
    $region53: #{environment_model_forward.1} parent=1 // pred_fallthru
      _
    // Predicated region
    $region54: #{environment_model_forward.1} parent=1 // pred_check
      _
    $region55: #{environment_model_forward.1} parent=1 // pred_check_branch
      %154 = sbr.rel (0) target = $region57
    $region56: #{environment_model_forward.1} parent=1 // pred_region
      %s156 = ssub.s32 6144, 6144
      %157 = vsyncadd [#allocation20], %s156
      %s158 = sshll.u32 [#allocation19], 4
      %s159 = int_to_ptr.vmem [resolvable:$true] %s158
      %164 = dma.hbm_to_vmem [thread:$0]  %s13, 6144, %s159, [#allocation20], 384, 384, 24
    $region57: #{environment_model_forward.1} parent=1 // pred_fallthru
      _
    // Predicated region
    $region58: #{environment_model_forward.1} parent=1 // pred_check
      _
    $region59: #{environment_model_forward.1} parent=1 // pred_check_branch
      %166 = sbr.rel (0) target = $region61
    $region60: #{environment_model_forward.1} parent=1 // pred_region
      %s168 = ssub.s32 48, 48
      %169 = vsyncadd [#allocation20], %s168
      %s171 = sshll.u32 [#allocation21], 4
      %s172 = int_to_ptr.vmem [resolvable:$true] %s171
      %174 = dma.hbm_to_vmem [thread:$0]  %s14, 48, %s172, [#allocation20]
    $region61: #{environment_model_forward.1} parent=1 // pred_fallthru
      _
    // Predicated region
    $region62: #{environment_model_forward.1} parent=1 // pred_check
      _
    $region63: #{environment_model_forward.1} parent=1 // pred_check_branch
      %176 = sbr.rel (0) target = $region65
    $region64: #{environment_model_forward.1} parent=1 // pred_region
      %177 = dma.done [#allocation3], 73728
    $region65: #{environment_model_forward.1} parent=1 // pred_fallthru
      _
    // Predicated region
    $region66: #{environment_model_forward.1} parent=1 // pred_check
      _
    $region67: #{environment_model_forward.1} parent=1 // pred_check_branch
      %179 = sbr.rel (0) target = $region69
    $region68: #{environment_model_forward.1} parent=1 // pred_region
      %180 = dma.done [#allocation5], 96
    $region69: #{environment_model_forward.1} parent=1 // pred_fallthru
      _
    // Predicated region
    $region70: #{environment_model_forward.1} parent=1 // pred_check
      _
    $region71: #{environment_model_forward.1} parent=1 // pred_check_branch
      %182 = sbr.rel (0) target = $region73
    $region72: #{environment_model_forward.1} parent=1 // pred_region
      %183 = dma.done [#allocation5], 36864
    $region73: #{environment_model_forward.1} parent=1 // pred_fallthru
      _
    // Predicated region
    $region74: #{environment_model_forward.1} parent=1 // pred_check
      _
    $region75: #{environment_model_forward.1} parent=1 // pred_check_branch
      %185 = sbr.rel (0) target = $region77
    $region76: #{environment_model_forward.1} parent=1 // pred_region
      %186 = dma.done [#allocation8], 48
    $region77: #{environment_model_forward.1} parent=1 // pred_fallthru
      _
    // Predicated region
    $region78: #{environment_model_forward.1} parent=1 // pred_check
      _
    $region79: #{environment_model_forward.1} parent=1 // pred_check_branch
      %188 = sbr.rel (0) target = $region81
    $region80: #{environment_model_forward.1} parent=1 // pred_region
      %189 = dma.done [#allocation8], 6144
    $region81: #{environment_model_forward.1} parent=1 // pred_fallthru
      _
    // Predicated region
    $region82: #{environment_model_forward.1} parent=1 // pred_check
      _
    $region83: #{environment_model_forward.1} parent=1 // pred_check_branch
      %191 = sbr.rel (0) target = $region85
    $region84: #{environment_model_forward.1} parent=1 // pred_region
      %192 = dma.done [#allocation11], 16
    $region85: #{environment_model_forward.1} parent=1 // pred_fallthru
      _
    // Predicated region
    $region86: #{environment_model_forward.1} parent=1 // pred_check
      _
    $region87: #{environment_model_forward.1} parent=1 // pred_check_branch
      %194 = sbr.rel (0) target = $region89
    $region88: #{environment_model_forward.1} parent=1 // pred_region
      %195 = dma.done [#allocation11], 2048
    $region89: #{environment_model_forward.1} parent=1 // pred_fallthru
      _
    // Predicated region
    $region90: #{environment_model_forward.1} parent=1 // pred_check
      _
    $region91: #{environment_model_forward.1} parent=1 // pred_check_branch
      %197 = sbr.rel (0) target = $region93
    $region92: #{environment_model_forward.1} parent=1 // pred_region
      %198 = dma.done [#allocation14], 2048
    $region93: #{environment_model_forward.1} parent=1 // pred_fallthru
      _
    // Predicated region
    $region94: #{environment_model_forward.1} parent=1 // pred_check
      _
    $region95: #{environment_model_forward.1} parent=1 // pred_check_branch
      %200 = sbr.rel (0) target = $region97
    $region96: #{environment_model_forward.1} parent=1 // pred_region
      %201 = dma.done [#allocation14], 16
    $region97: #{environment_model_forward.1} parent=1 // pred_fallthru
      _
    // Predicated region
    $region98: #{environment_model_forward.1} parent=1 // pred_check
      _
    $region99: #{environment_model_forward.1} parent=1 // pred_check_branch
      %203 = sbr.rel (0) target = $region101
    $region100: #{environment_model_forward.1} parent=1 // pred_region
      %204 = dma.done [#allocation17], 2048
    $region101: #{environment_model_forward.1} parent=1 // pred_fallthru
      _
    // Predicated region
    $region102: #{environment_model_forward.1} parent=1 // pred_check
      _
    $region103: #{environment_model_forward.1} parent=1 // pred_check_branch
      %206 = sbr.rel (0) target = $region105
    $region104: #{environment_model_forward.1} parent=1 // pred_region
      %207 = dma.done [#allocation17], 16
    $region105: #{environment_model_forward.1} parent=1 // pred_fallthru
      _
    // Predicated region
    $region106: #{environment_model_forward.1} parent=1 // pred_check
      _
    $region107: #{environment_model_forward.1} parent=1 // pred_check_branch
      %209 = sbr.rel (0) target = $region109
    $region108: #{environment_model_forward.1} parent=1 // pred_region
      %210 = dma.done [#allocation20], 6144
    $region109: #{environment_model_forward.1} parent=1 // pred_fallthru
      _
    // Predicated region
    $region110: #{environment_model_forward.1} parent=1 // pred_check
      _
    $region111: #{environment_model_forward.1} parent=1 // pred_check_branch
      %212 = sbr.rel (0) target = $region113
    $region112: #{environment_model_forward.1} parent=1 // pred_region
      %213 = dma.done [#allocation20], 48
    $region113: #{environment_model_forward.1} parent=1 // pred_fallthru
      _
    %v214 = vld [vmem:[%s0] sm:$0xff]
    %v215 = vld [vmem:[%s0 + $0x8] sm:$0xff]
    %v216 = vld [vmem:[%s0 + $0x10] sm:$0xff]
    %v217 = vld [vmem:[%s0 + $0x18] sm:$0xff]
    %v218 = vld [vmem:[%s0 + $0x20] sm:$0xff]
    %v219 = vld [vmem:[%s0 + $0x28] sm:$0xff]
    %v220 = vld [vmem:[#allocation2] sm:$0xff]
    %v221 = vld [vmem:[#allocation2 + $0x8] sm:$0xff]
    %v222 = vld [vmem:[#allocation2 + $0x10] sm:$0xff]
    %v223 = vld [vmem:[#allocation2 + $0x18] sm:$0xff]
    %v224 = vld [vmem:[#allocation2 + $0x20] sm:$0xff]
    %v225 = vld [vmem:[#allocation2 + $0x28] sm:$0xff]
    %v226 = vld [vmem:[#allocation2 + $0x30] sm:$0xff]
    %v227 = vld [vmem:[#allocation2 + $0x38] sm:$0xff]
    %v228 = vld [vmem:[#allocation2 + $0x40] sm:$0xff]
    %v229 = vld [vmem:[#allocation2 + $0x48] sm:$0xff]
    %v230 = vld [vmem:[#allocation2 + $0x50] sm:$0xff]
    %v231 = vld [vmem:[#allocation2 + $0x58] sm:$0xff]
    %v232 = vld [vmem:[#allocation2 + $0x60] sm:$0xff]
    %v233 = vld [vmem:[#allocation2 + $0x68] sm:$0xff]
    %v234 = vld [vmem:[#allocation2 + $0x70] sm:$0xff]
    %v235 = vld [vmem:[#allocation2 + $0x78] sm:$0xff]
    %v236 = vld [vmem:[#allocation2 + $0x80] sm:$0xff]
    %v237 = vld [vmem:[#allocation2 + $0x88] sm:$0xff]
    %v238 = vld [vmem:[#allocation2 + $0x90] sm:$0xff]
    %v239 = vld [vmem:[#allocation2 + $0x98] sm:$0xff]
    %v240 = vld [vmem:[#allocation2 + $0xa0] sm:$0xff]
    %v241 = vld [vmem:[#allocation2 + $0xa8] sm:$0xff]
    %v242 = vld [vmem:[#allocation2 + $0xb0] sm:$0xff]
    %v243 = vld [vmem:[#allocation2 + $0xb8] sm:$0xff]
    %v244 = vld [vmem:[#allocation2 + $0xc0] sm:$0xff]
    %v245 = vld [vmem:[#allocation2 + $0xc8] sm:$0xff]
    %v246 = vld [vmem:[#allocation2 + $0xd0] sm:$0xff]
    %v247 = vld [vmem:[#allocation2 + $0xd8] sm:$0xff]
    %v248 = vld [vmem:[#allocation2 + $0xe0] sm:$0xff]
    %v249 = vld [vmem:[#allocation2 + $0xe8] sm:$0xff]
    %v250 = vld [vmem:[#allocation2 + $0xf0] sm:$0xff]
    %v251 = vld [vmem:[#allocation2 + $0xf8] sm:$0xff]
    %v252 = vld [vmem:[#allocation2 + $0x100] sm:$0xff]
    %v253 = vld [vmem:[#allocation2 + $0x108] sm:$0xff]
    %v254 = vld [vmem:[#allocation2 + $0x110] sm:$0xff]
    %v255 = vld [vmem:[#allocation2 + $0x118] sm:$0xff]
    %v256 = vld [vmem:[#allocation2 + $0x120] sm:$0xff]
    %v257 = vld [vmem:[#allocation2 + $0x128] sm:$0xff]
    %v258 = vld [vmem:[#allocation2 + $0x130] sm:$0xff]
    %v259 = vld [vmem:[#allocation2 + $0x138] sm:$0xff]
    %v260 = vld [vmem:[#allocation2 + $0x140] sm:$0xff]
    %v261 = vld [vmem:[#allocation2 + $0x148] sm:$0xff]
    %v262 = vld [vmem:[#allocation2 + $0x150] sm:$0xff]
    %v263 = vld [vmem:[#allocation2 + $0x158] sm:$0xff]
    %v264 = vld [vmem:[#allocation2 + $0x160] sm:$0xff]
    %v265 = vld [vmem:[#allocation2 + $0x168] sm:$0xff]
    %v266 = vld [vmem:[#allocation2 + $0x170] sm:$0xff]
    %v267 = vld [vmem:[#allocation2 + $0x178] sm:$0xff]
    %v268 = vld [vmem:[#allocation2 + $0x180] sm:$0xff]
    %v269 = vld [vmem:[#allocation2 + $0x188] sm:$0xff]
    %v270 = vld [vmem:[#allocation2 + $0x190] sm:$0xff]
    %v271 = vld [vmem:[#allocation2 + $0x198] sm:$0xff]
    %v272 = vld [vmem:[#allocation2 + $0x1a0] sm:$0xff]
    %v273 = vld [vmem:[#allocation2 + $0x1a8] sm:$0xff]
    %v274 = vld [vmem:[#allocation2 + $0x1b0] sm:$0xff]
    %v275 = vld [vmem:[#allocation2 + $0x1b8] sm:$0xff]
    %v276 = vld [vmem:[#allocation2 + $0x1c0] sm:$0xff]
    %v277 = vld [vmem:[#allocation2 + $0x1c8] sm:$0xff]
    %v278 = vld [vmem:[#allocation2 + $0x1d0] sm:$0xff]
    %v279 = vld [vmem:[#allocation2 + $0x1d8] sm:$0xff]
    %v280 = vld [vmem:[#allocation2 + $0x1e0] sm:$0xff]
    %v281 = vld [vmem:[#allocation2 + $0x1e8] sm:$0xff]
    %v282 = vld [vmem:[#allocation2 + $0x1f0] sm:$0xff]
    %v283 = vld [vmem:[#allocation2 + $0x1f8] sm:$0xff]
    %v284 = vld [vmem:[#allocation2 + $0x200] sm:$0xff]
    %v285 = vld [vmem:[#allocation2 + $0x208] sm:$0xff]
    %v286 = vld [vmem:[#allocation2 + $0x210] sm:$0xff]
    %v287 = vld [vmem:[#allocation2 + $0x218] sm:$0xff]
    %v288 = vld [vmem:[#allocation2 + $0x220] sm:$0xff]
    %v289 = vld [vmem:[#allocation2 + $0x228] sm:$0xff]
    %v290 = vld [vmem:[#allocation2 + $0x230] sm:$0xff]
    %v291 = vld [vmem:[#allocation2 + $0x238] sm:$0xff]
    %v292 = vld [vmem:[#allocation2 + $0x240] sm:$0xff]
    %v293 = vld [vmem:[#allocation2 + $0x248] sm:$0xff]
    %v294 = vld [vmem:[#allocation2 + $0x250] sm:$0xff]
    %v295 = vld [vmem:[#allocation2 + $0x258] sm:$0xff]
    %v296 = vld [vmem:[#allocation2 + $0x260] sm:$0xff]
    %v297 = vld [vmem:[#allocation2 + $0x268] sm:$0xff]
    %v298 = vld [vmem:[#allocation2 + $0x270] sm:$0xff]
    %v299 = vld [vmem:[#allocation2 + $0x278] sm:$0xff]
    %v300 = vld [vmem:[#allocation2 + $0x280] sm:$0xff]
    %v301 = vld [vmem:[#allocation2 + $0x288] sm:$0xff]
    %v302 = vld [vmem:[#allocation2 + $0x290] sm:$0xff]
    %v303 = vld [vmem:[#allocation2 + $0x298] sm:$0xff]
    %v304 = vld [vmem:[#allocation2 + $0x2a0] sm:$0xff]
    %v305 = vld [vmem:[#allocation2 + $0x2a8] sm:$0xff]
    %v306 = vld [vmem:[#allocation2 + $0x2b0] sm:$0xff]
    %v307 = vld [vmem:[#allocation2 + $0x2b8] sm:$0xff]
    %v308 = vld [vmem:[#allocation2 + $0x2c0] sm:$0xff]
    %v309 = vld [vmem:[#allocation2 + $0x2c8] sm:$0xff]
    %v310 = vld [vmem:[#allocation2 + $0x2d0] sm:$0xff]
    %v311 = vld [vmem:[#allocation2 + $0x2d8] sm:$0xff]
    %v312 = vld [vmem:[#allocation2 + $0x2e0] sm:$0xff]
    %v313 = vld [vmem:[#allocation2 + $0x2e8] sm:$0xff]
    %v314 = vld [vmem:[#allocation2 + $0x2f0] sm:$0xff]
    %v315 = vld [vmem:[#allocation2 + $0x2f8] sm:$0xff]
    %v316 = vld [vmem:[#allocation2 + $0x300] sm:$0xff]
    %v317 = vld [vmem:[#allocation2 + $0x308] sm:$0xff]
    %v318 = vld [vmem:[#allocation2 + $0x310] sm:$0xff]
    %v319 = vld [vmem:[#allocation2 + $0x318] sm:$0xff]
    %v320 = vld [vmem:[#allocation2 + $0x320] sm:$0xff]
    %v321 = vld [vmem:[#allocation2 + $0x328] sm:$0xff]
    %v322 = vld [vmem:[#allocation2 + $0x330] sm:$0xff]
    %v323 = vld [vmem:[#allocation2 + $0x338] sm:$0xff]
    %v324 = vld [vmem:[#allocation2 + $0x340] sm:$0xff]
    %v325 = vld [vmem:[#allocation2 + $0x348] sm:$0xff]
    %v326 = vld [vmem:[#allocation2 + $0x350] sm:$0xff]
    %v327 = vld [vmem:[#allocation2 + $0x358] sm:$0xff]
    %v328 = vld [vmem:[#allocation2 + $0x360] sm:$0xff]
    %v329 = vld [vmem:[#allocation2 + $0x368] sm:$0xff]
    %v330 = vld [vmem:[#allocation2 + $0x370] sm:$0xff]
    %v331 = vld [vmem:[#allocation2 + $0x378] sm:$0xff]
    %v332 = vld [vmem:[#allocation2 + $0x380] sm:$0xff]
    %v333 = vld [vmem:[#allocation2 + $0x388] sm:$0xff]
    %v334 = vld [vmem:[#allocation2 + $0x390] sm:$0xff]
    %v335 = vld [vmem:[#allocation2 + $0x398] sm:$0xff]
    %v336 = vld [vmem:[#allocation2 + $0x3a0] sm:$0xff]
    %v337 = vld [vmem:[#allocation2 + $0x3a8] sm:$0xff]
    %v338 = vld [vmem:[#allocation2 + $0x3b0] sm:$0xff]
    %v339 = vld [vmem:[#allocation2 + $0x3b8] sm:$0xff]
    %v340 = vld [vmem:[#allocation2 + $0x3c0] sm:$0xff]
    %v341 = vld [vmem:[#allocation2 + $0x3c8] sm:$0xff]
    %v342 = vld [vmem:[#allocation2 + $0x3d0] sm:$0xff]
    %v343 = vld [vmem:[#allocation2 + $0x3d8] sm:$0xff]
    %v344 = vld [vmem:[#allocation2 + $0x3e0] sm:$0xff]
    %v345 = vld [vmem:[#allocation2 + $0x3e8] sm:$0xff]
    %v346 = vld [vmem:[#allocation2 + $0x3f0] sm:$0xff]
    %v347 = vld [vmem:[#allocation2 + $0x3f8] sm:$0xff]
    %v348 = vld [vmem:[#allocation2 + $0x400] sm:$0xff]
    %v349 = vld [vmem:[#allocation2 + $0x408] sm:$0xff]
    %v350 = vld [vmem:[#allocation2 + $0x410] sm:$0xff]
    %v351 = vld [vmem:[#allocation2 + $0x418] sm:$0xff]
    %v352 = vld [vmem:[#allocation2 + $0x420] sm:$0xff]
    %v353 = vld [vmem:[#allocation2 + $0x428] sm:$0xff]
    %v354 = vld [vmem:[#allocation2 + $0x430] sm:$0xff]
    %v355 = vld [vmem:[#allocation2 + $0x438] sm:$0xff]
    %v356 = vld [vmem:[#allocation2 + $0x440] sm:$0xff]
    %v357 = vld [vmem:[#allocation2 + $0x448] sm:$0xff]
    %v358 = vld [vmem:[#allocation2 + $0x450] sm:$0xff]
    %v359 = vld [vmem:[#allocation2 + $0x458] sm:$0xff]
    %v360 = vld [vmem:[#allocation2 + $0x460] sm:$0xff]
    %v361 = vld [vmem:[#allocation2 + $0x468] sm:$0xff]
    %v362 = vld [vmem:[#allocation2 + $0x470] sm:$0xff]
    %v363 = vld [vmem:[#allocation2 + $0x478] sm:$0xff]
    %v364 = vld [vmem:[#allocation2 + $0x480] sm:$0xff]
    %v365 = vld [vmem:[#allocation2 + $0x488] sm:$0xff]
    %v366 = vld [vmem:[#allocation2 + $0x490] sm:$0xff]
    %v367 = vld [vmem:[#allocation2 + $0x498] sm:$0xff]
    %v368 = vld [vmem:[#allocation2 + $0x4a0] sm:$0xff]
    %v369 = vld [vmem:[#allocation2 + $0x4a8] sm:$0xff]
    %v370 = vld [vmem:[#allocation2 + $0x4b0] sm:$0xff]
    %v371 = vld [vmem:[#allocation2 + $0x4b8] sm:$0xff]
    %v372 = vld [vmem:[#allocation2 + $0x4c0] sm:$0xff]
    %v373 = vld [vmem:[#allocation2 + $0x4c8] sm:$0xff]
    %v374 = vld [vmem:[#allocation2 + $0x4d0] sm:$0xff]
    %v375 = vld [vmem:[#allocation2 + $0x4d8] sm:$0xff]
    %v376 = vld [vmem:[#allocation2 + $0x4e0] sm:$0xff]
    %v377 = vld [vmem:[#allocation2 + $0x4e8] sm:$0xff]
    %v378 = vld [vmem:[#allocation2 + $0x4f0] sm:$0xff]
    %v379 = vld [vmem:[#allocation2 + $0x4f8] sm:$0xff]
    %v380 = vld [vmem:[#allocation2 + $0x500] sm:$0xff]
    %v381 = vld [vmem:[#allocation2 + $0x508] sm:$0xff]
    %v382 = vld [vmem:[#allocation2 + $0x510] sm:$0xff]
    %v383 = vld [vmem:[#allocation2 + $0x518] sm:$0xff]
    %v384 = vld [vmem:[#allocation2 + $0x520] sm:$0xff]
    %v385 = vld [vmem:[#allocation2 + $0x528] sm:$0xff]
    %v386 = vld [vmem:[#allocation2 + $0x530] sm:$0xff]
    %v387 = vld [vmem:[#allocation2 + $0x538] sm:$0xff]
    %v388 = vld [vmem:[#allocation2 + $0x540] sm:$0xff]
    %v389 = vld [vmem:[#allocation2 + $0x548] sm:$0xff]
    %v390 = vld [vmem:[#allocation2 + $0x550] sm:$0xff]
    %v391 = vld [vmem:[#allocation2 + $0x558] sm:$0xff]
    %v392 = vld [vmem:[#allocation2 + $0x560] sm:$0xff]
    %v393 = vld [vmem:[#allocation2 + $0x568] sm:$0xff]
    %v394 = vld [vmem:[#allocation2 + $0x570] sm:$0xff]
    %v395 = vld [vmem:[#allocation2 + $0x578] sm:$0xff]
    %v396 = vld [vmem:[#allocation2 + $0x580] sm:$0xff]
    %v397 = vld [vmem:[#allocation2 + $0x588] sm:$0xff]
    %v398 = vld [vmem:[#allocation2 + $0x590] sm:$0xff]
    %v399 = vld [vmem:[#allocation2 + $0x598] sm:$0xff]
    %v400 = vld [vmem:[#allocation2 + $0x5a0] sm:$0xff]
    %v401 = vld [vmem:[#allocation2 + $0x5a8] sm:$0xff]
    %v402 = vld [vmem:[#allocation2 + $0x5b0] sm:$0xff]
    %v403 = vld [vmem:[#allocation2 + $0x5b8] sm:$0xff]
    %v404 = vld [vmem:[#allocation2 + $0x5c0] sm:$0xff]
    %v405 = vld [vmem:[#allocation2 + $0x5c8] sm:$0xff]
    %v406 = vld [vmem:[#allocation2 + $0x5d0] sm:$0xff]
    %v407 = vld [vmem:[#allocation2 + $0x5d8] sm:$0xff]
    %v408 = vld [vmem:[#allocation2 + $0x5e0] sm:$0xff]
    %v409 = vld [vmem:[#allocation2 + $0x5e8] sm:$0xff]
    %v410 = vld [vmem:[#allocation2 + $0x5f0] sm:$0xff]
    %v411 = vld [vmem:[#allocation2 + $0x5f8] sm:$0xff]
    %v412 = vld [vmem:[#allocation2 + $0x600] sm:$0xff]
    %v413 = vld [vmem:[#allocation2 + $0x608] sm:$0xff]
    %v414 = vld [vmem:[#allocation2 + $0x610] sm:$0xff]
    %v415 = vld [vmem:[#allocation2 + $0x618] sm:$0xff]
    %v416 = vld [vmem:[#allocation2 + $0x620] sm:$0xff]
    %v417 = vld [vmem:[#allocation2 + $0x628] sm:$0xff]
    %v418 = vld [vmem:[#allocation2 + $0x630] sm:$0xff]
    %v419 = vld [vmem:[#allocation2 + $0x638] sm:$0xff]
    %v420 = vld [vmem:[#allocation2 + $0x640] sm:$0xff]
    %v421 = vld [vmem:[#allocation2 + $0x648] sm:$0xff]
    %v422 = vld [vmem:[#allocation2 + $0x650] sm:$0xff]
    %v423 = vld [vmem:[#allocation2 + $0x658] sm:$0xff]
    %v424 = vld [vmem:[#allocation2 + $0x660] sm:$0xff]
    %v425 = vld [vmem:[#allocation2 + $0x668] sm:$0xff]
    %v426 = vld [vmem:[#allocation2 + $0x670] sm:$0xff]
    %v427 = vld [vmem:[#allocation2 + $0x678] sm:$0xff]
    %v428 = vld [vmem:[#allocation2 + $0x680] sm:$0xff]
    %v429 = vld [vmem:[#allocation2 + $0x688] sm:$0xff]
    %v430 = vld [vmem:[#allocation2 + $0x690] sm:$0xff]
    %v431 = vld [vmem:[#allocation2 + $0x698] sm:$0xff]
    %v432 = vld [vmem:[#allocation2 + $0x6a0] sm:$0xff]
    %v433 = vld [vmem:[#allocation2 + $0x6a8] sm:$0xff]
    %v434 = vld [vmem:[#allocation2 + $0x6b0] sm:$0xff]
    %v435 = vld [vmem:[#allocation2 + $0x6b8] sm:$0xff]
    %v436 = vld [vmem:[#allocation2 + $0x6c0] sm:$0xff]
    %v437 = vld [vmem:[#allocation2 + $0x6c8] sm:$0xff]
    %v438 = vld [vmem:[#allocation2 + $0x6d0] sm:$0xff]
    %v439 = vld [vmem:[#allocation2 + $0x6d8] sm:$0xff]
    %v440 = vld [vmem:[#allocation2 + $0x6e0] sm:$0xff]
    %v441 = vld [vmem:[#allocation2 + $0x6e8] sm:$0xff]
    %v442 = vld [vmem:[#allocation2 + $0x6f0] sm:$0xff]
    %v443 = vld [vmem:[#allocation2 + $0x6f8] sm:$0xff]
    %v444 = vld [vmem:[#allocation2 + $0x700] sm:$0xff]
    %v445 = vld [vmem:[#allocation2 + $0x708] sm:$0xff]
    %v446 = vld [vmem:[#allocation2 + $0x710] sm:$0xff]
    %v447 = vld [vmem:[#allocation2 + $0x718] sm:$0xff]
    %v448 = vld [vmem:[#allocation2 + $0x720] sm:$0xff]
    %v449 = vld [vmem:[#allocation2 + $0x728] sm:$0xff]
    %v450 = vld [vmem:[#allocation2 + $0x730] sm:$0xff]
    %v451 = vld [vmem:[#allocation2 + $0x738] sm:$0xff]
    %v452 = vld [vmem:[#allocation2 + $0x740] sm:$0xff]
    %v453 = vld [vmem:[#allocation2 + $0x748] sm:$0xff]
    %v454 = vld [vmem:[#allocation2 + $0x750] sm:$0xff]
    %v455 = vld [vmem:[#allocation2 + $0x758] sm:$0xff]
    %v456 = vld [vmem:[#allocation2 + $0x760] sm:$0xff]
    %v457 = vld [vmem:[#allocation2 + $0x768] sm:$0xff]
    %v458 = vld [vmem:[#allocation2 + $0x770] sm:$0xff]
    %v459 = vld [vmem:[#allocation2 + $0x778] sm:$0xff]
    %v460 = vld [vmem:[#allocation2 + $0x780] sm:$0xff]
    %v461 = vld [vmem:[#allocation2 + $0x788] sm:$0xff]
    %v462 = vld [vmem:[#allocation2 + $0x790] sm:$0xff]
    %v463 = vld [vmem:[#allocation2 + $0x798] sm:$0xff]
    %v464 = vld [vmem:[#allocation2 + $0x7a0] sm:$0xff]
    %v465 = vld [vmem:[#allocation2 + $0x7a8] sm:$0xff]
    %v466 = vld [vmem:[#allocation2 + $0x7b0] sm:$0xff]
    %v467 = vld [vmem:[#allocation2 + $0x7b8] sm:$0xff]
    %v468 = vld [vmem:[#allocation2 + $0x7c0] sm:$0xff]
    %v469 = vld [vmem:[#allocation2 + $0x7c8] sm:$0xff]
    %v470 = vld [vmem:[#allocation2 + $0x7d0] sm:$0xff]
    %v471 = vld [vmem:[#allocation2 + $0x7d8] sm:$0xff]
    %v472 = vld [vmem:[#allocation2 + $0x7e0] sm:$0xff]
    %v473 = vld [vmem:[#allocation2 + $0x7e8] sm:$0xff]
    %v474 = vld [vmem:[#allocation2 + $0x7f0] sm:$0xff]
    %v475 = vld [vmem:[#allocation2 + $0x7f8] sm:$0xff]
    %v476 = vld [vmem:[#allocation2 + $0x800] sm:$0xff]
    %v477 = vld [vmem:[#allocation2 + $0x808] sm:$0xff]
    %v478 = vld [vmem:[#allocation2 + $0x810] sm:$0xff]
    %v479 = vld [vmem:[#allocation2 + $0x818] sm:$0xff]
    %v480 = vld [vmem:[#allocation2 + $0x820] sm:$0xff]
    %v481 = vld [vmem:[#allocation2 + $0x828] sm:$0xff]
    %v482 = vld [vmem:[#allocation2 + $0x830] sm:$0xff]
    %v483 = vld [vmem:[#allocation2 + $0x838] sm:$0xff]
    %v484 = vld [vmem:[#allocation2 + $0x840] sm:$0xff]
    %v485 = vld [vmem:[#allocation2 + $0x848] sm:$0xff]
    %v486 = vld [vmem:[#allocation2 + $0x850] sm:$0xff]
    %v487 = vld [vmem:[#allocation2 + $0x858] sm:$0xff]
    %v488 = vld [vmem:[#allocation2 + $0x860] sm:$0xff]
    %v489 = vld [vmem:[#allocation2 + $0x868] sm:$0xff]
    %v490 = vld [vmem:[#allocation2 + $0x870] sm:$0xff]
    %v491 = vld [vmem:[#allocation2 + $0x878] sm:$0xff]
    %v492 = vld [vmem:[#allocation2 + $0x880] sm:$0xff]
    %v493 = vld [vmem:[#allocation2 + $0x888] sm:$0xff]
    %v494 = vld [vmem:[#allocation2 + $0x890] sm:$0xff]
    %v495 = vld [vmem:[#allocation2 + $0x898] sm:$0xff]
    %v496 = vld [vmem:[#allocation2 + $0x8a0] sm:$0xff]
    %v497 = vld [vmem:[#allocation2 + $0x8a8] sm:$0xff]
    %v498 = vld [vmem:[#allocation2 + $0x8b0] sm:$0xff]
    %v499 = vld [vmem:[#allocation2 + $0x8b8] sm:$0xff]
    %v500 = vld [vmem:[#allocation2 + $0x8c0] sm:$0xff]
    %v501 = vld [vmem:[#allocation2 + $0x8c8] sm:$0xff]
    %v502 = vld [vmem:[#allocation2 + $0x8d0] sm:$0xff]
    %v503 = vld [vmem:[#allocation2 + $0x8d8] sm:$0xff]
    %v504 = vld [vmem:[#allocation2 + $0x8e0] sm:$0xff]
    %v505 = vld [vmem:[#allocation2 + $0x8e8] sm:$0xff]
    %v506 = vld [vmem:[#allocation2 + $0x8f0] sm:$0xff]
    %v507 = vld [vmem:[#allocation2 + $0x8f8] sm:$0xff]
    %v508 = vld [vmem:[#allocation2 + $0x900] sm:$0xff]
    %v509 = vld [vmem:[#allocation2 + $0x908] sm:$0xff]
    %v510 = vld [vmem:[#allocation2 + $0x910] sm:$0xff]
    %v511 = vld [vmem:[#allocation2 + $0x918] sm:$0xff]
    %v512 = vld [vmem:[#allocation2 + $0x920] sm:$0xff]
    %v513 = vld [vmem:[#allocation2 + $0x928] sm:$0xff]
    %v514 = vld [vmem:[#allocation2 + $0x930] sm:$0xff]
    %v515 = vld [vmem:[#allocation2 + $0x938] sm:$0xff]
    %v516 = vld [vmem:[#allocation2 + $0x940] sm:$0xff]
    %v517 = vld [vmem:[#allocation2 + $0x948] sm:$0xff]
    %v518 = vld [vmem:[#allocation2 + $0x950] sm:$0xff]
    %v519 = vld [vmem:[#allocation2 + $0x958] sm:$0xff]
    %v520 = vld [vmem:[#allocation2 + $0x960] sm:$0xff]
    %v521 = vld [vmem:[#allocation2 + $0x968] sm:$0xff]
    %v522 = vld [vmem:[#allocation2 + $0x970] sm:$0xff]
    %v523 = vld [vmem:[#allocation2 + $0x978] sm:$0xff]
    %v524 = vld [vmem:[#allocation2 + $0x980] sm:$0xff]
    %v525 = vld [vmem:[#allocation2 + $0x988] sm:$0xff]
    %v526 = vld [vmem:[#allocation2 + $0x990] sm:$0xff]
    %v527 = vld [vmem:[#allocation2 + $0x998] sm:$0xff]
    %v528 = vld [vmem:[#allocation2 + $0x9a0] sm:$0xff]
    %v529 = vld [vmem:[#allocation2 + $0x9a8] sm:$0xff]
    %v530 = vld [vmem:[#allocation2 + $0x9b0] sm:$0xff]
    %v531 = vld [vmem:[#allocation2 + $0x9b8] sm:$0xff]
    %v532 = vld [vmem:[#allocation2 + $0x9c0] sm:$0xff]
    %v533 = vld [vmem:[#allocation2 + $0x9c8] sm:$0xff]
    %v534 = vld [vmem:[#allocation2 + $0x9d0] sm:$0xff]
    %v535 = vld [vmem:[#allocation2 + $0x9d8] sm:$0xff]
    %v536 = vld [vmem:[#allocation2 + $0x9e0] sm:$0xff]
    %v537 = vld [vmem:[#allocation2 + $0x9e8] sm:$0xff]
    %v538 = vld [vmem:[#allocation2 + $0x9f0] sm:$0xff]
    %v539 = vld [vmem:[#allocation2 + $0x9f8] sm:$0xff]
    %v540 = vld [vmem:[#allocation2 + $0xa00] sm:$0xff]
    %v541 = vld [vmem:[#allocation2 + $0xa08] sm:$0xff]
    %v542 = vld [vmem:[#allocation2 + $0xa10] sm:$0xff]
    %v543 = vld [vmem:[#allocation2 + $0xa18] sm:$0xff]
    %v544 = vld [vmem:[#allocation2 + $0xa20] sm:$0xff]
    %v545 = vld [vmem:[#allocation2 + $0xa28] sm:$0xff]
    %v546 = vld [vmem:[#allocation2 + $0xa30] sm:$0xff]
    %v547 = vld [vmem:[#allocation2 + $0xa38] sm:$0xff]
    %v548 = vld [vmem:[#allocation2 + $0xa40] sm:$0xff]
    %v549 = vld [vmem:[#allocation2 + $0xa48] sm:$0xff]
    %v550 = vld [vmem:[#allocation2 + $0xa50] sm:$0xff]
    %v551 = vld [vmem:[#allocation2 + $0xa58] sm:$0xff]
    %v552 = vld [vmem:[#allocation2 + $0xa60] sm:$0xff]
    %v553 = vld [vmem:[#allocation2 + $0xa68] sm:$0xff]
    %v554 = vld [vmem:[#allocation2 + $0xa70] sm:$0xff]
    %v555 = vld [vmem:[#allocation2 + $0xa78] sm:$0xff]
    %v556 = vld [vmem:[#allocation2 + $0xa80] sm:$0xff]
    %v557 = vld [vmem:[#allocation2 + $0xa88] sm:$0xff]
    %v558 = vld [vmem:[#allocation2 + $0xa90] sm:$0xff]
    %v559 = vld [vmem:[#allocation2 + $0xa98] sm:$0xff]
    %v560 = vld [vmem:[#allocation2 + $0xaa0] sm:$0xff]
    %v561 = vld [vmem:[#allocation2 + $0xaa8] sm:$0xff]
    %v562 = vld [vmem:[#allocation2 + $0xab0] sm:$0xff]
    %v563 = vld [vmem:[#allocation2 + $0xab8] sm:$0xff]
    %v564 = vld [vmem:[#allocation2 + $0xac0] sm:$0xff]
    %v565 = vld [vmem:[#allocation2 + $0xac8] sm:$0xff]
    %v566 = vld [vmem:[#allocation2 + $0xad0] sm:$0xff]
    %v567 = vld [vmem:[#allocation2 + $0xad8] sm:$0xff]
    %v568 = vld [vmem:[#allocation2 + $0xae0] sm:$0xff]
    %v569 = vld [vmem:[#allocation2 + $0xae8] sm:$0xff]
    %v570 = vld [vmem:[#allocation2 + $0xaf0] sm:$0xff]
    %v571 = vld [vmem:[#allocation2 + $0xaf8] sm:$0xff]
    %v572 = vld [vmem:[#allocation2 + $0xb00] sm:$0xff]
    %v573 = vld [vmem:[#allocation2 + $0xb08] sm:$0xff]
    %v574 = vld [vmem:[#allocation2 + $0xb10] sm:$0xff]
    %v575 = vld [vmem:[#allocation2 + $0xb18] sm:$0xff]
    %v576 = vld [vmem:[#allocation2 + $0xb20] sm:$0xff]
    %v577 = vld [vmem:[#allocation2 + $0xb28] sm:$0xff]
    %v578 = vld [vmem:[#allocation2 + $0xb30] sm:$0xff]
    %v579 = vld [vmem:[#allocation2 + $0xb38] sm:$0xff]
    %v580 = vld [vmem:[#allocation2 + $0xb40] sm:$0xff]
    %v581 = vld [vmem:[#allocation2 + $0xb48] sm:$0xff]
    %v582 = vld [vmem:[#allocation2 + $0xb50] sm:$0xff]
    %v583 = vld [vmem:[#allocation2 + $0xb58] sm:$0xff]
    %v584 = vld [vmem:[#allocation2 + $0xb60] sm:$0xff]
    %v585 = vld [vmem:[#allocation2 + $0xb68] sm:$0xff]
    %v586 = vld [vmem:[#allocation2 + $0xb70] sm:$0xff]
    %v587 = vld [vmem:[#allocation2 + $0xb78] sm:$0xff]
    %v588 = vld [vmem:[#allocation2 + $0xb80] sm:$0xff]
    %v589 = vld [vmem:[#allocation2 + $0xb88] sm:$0xff]
    %v590 = vld [vmem:[#allocation2 + $0xb90] sm:$0xff]
    %v591 = vld [vmem:[#allocation2 + $0xb98] sm:$0xff]
    %v592 = vld [vmem:[#allocation2 + $0xba0] sm:$0xff]
    %v593 = vld [vmem:[#allocation2 + $0xba8] sm:$0xff]
    %v594 = vld [vmem:[#allocation2 + $0xbb0] sm:$0xff]
    %v595 = vld [vmem:[#allocation2 + $0xbb8] sm:$0xff]
    %v596 = vld [vmem:[#allocation2 + $0xbc0] sm:$0xff]
    %v597 = vld [vmem:[#allocation2 + $0xbc8] sm:$0xff]
    %v598 = vld [vmem:[#allocation2 + $0xbd0] sm:$0xff]
    %v599 = vld [vmem:[#allocation2 + $0xbd8] sm:$0xff]
    %v600 = vld [vmem:[#allocation2 + $0xbe0] sm:$0xff]
    %v601 = vld [vmem:[#allocation2 + $0xbe8] sm:$0xff]
    %v602 = vld [vmem:[#allocation2 + $0xbf0] sm:$0xff]
    %v603 = vld [vmem:[#allocation2 + $0xbf8] sm:$0xff]
    %v604 = vld [vmem:[#allocation2 + $0xc00] sm:$0xff]
    %v605 = vld [vmem:[#allocation2 + $0xc08] sm:$0xff]
    %v606 = vld [vmem:[#allocation2 + $0xc10] sm:$0xff]
    %v607 = vld [vmem:[#allocation2 + $0xc18] sm:$0xff]
    %v608 = vld [vmem:[#allocation2 + $0xc20] sm:$0xff]
    %v609 = vld [vmem:[#allocation2 + $0xc28] sm:$0xff]
    %v610 = vld [vmem:[#allocation2 + $0xc30] sm:$0xff]
    %v611 = vld [vmem:[#allocation2 + $0xc38] sm:$0xff]
    %v612 = vld [vmem:[#allocation2 + $0xc40] sm:$0xff]
    %v613 = vld [vmem:[#allocation2 + $0xc48] sm:$0xff]
    %v614 = vld [vmem:[#allocation2 + $0xc50] sm:$0xff]
    %v615 = vld [vmem:[#allocation2 + $0xc58] sm:$0xff]
    %v616 = vld [vmem:[#allocation2 + $0xc60] sm:$0xff]
    %v617 = vld [vmem:[#allocation2 + $0xc68] sm:$0xff]
    %v618 = vld [vmem:[#allocation2 + $0xc70] sm:$0xff]
    %v619 = vld [vmem:[#allocation2 + $0xc78] sm:$0xff]
    %v620 = vld [vmem:[#allocation2 + $0xc80] sm:$0xff]
    %v621 = vld [vmem:[#allocation2 + $0xc88] sm:$0xff]
    %v622 = vld [vmem:[#allocation2 + $0xc90] sm:$0xff]
    %v623 = vld [vmem:[#allocation2 + $0xc98] sm:$0xff]
    %v624 = vld [vmem:[#allocation2 + $0xca0] sm:$0xff]
    %v625 = vld [vmem:[#allocation2 + $0xca8] sm:$0xff]
    %v626 = vld [vmem:[#allocation2 + $0xcb0] sm:$0xff]
    %v627 = vld [vmem:[#allocation2 + $0xcb8] sm:$0xff]
    %v628 = vld [vmem:[#allocation2 + $0xcc0] sm:$0xff]
    %v629 = vld [vmem:[#allocation2 + $0xcc8] sm:$0xff]
    %v630 = vld [vmem:[#allocation2 + $0xcd0] sm:$0xff]
    %v631 = vld [vmem:[#allocation2 + $0xcd8] sm:$0xff]
    %v632 = vld [vmem:[#allocation2 + $0xce0] sm:$0xff]
    %v633 = vld [vmem:[#allocation2 + $0xce8] sm:$0xff]
    %v634 = vld [vmem:[#allocation2 + $0xcf0] sm:$0xff]
    %v635 = vld [vmem:[#allocation2 + $0xcf8] sm:$0xff]
    %v636 = vld [vmem:[#allocation2 + $0xd00] sm:$0xff]
    %v637 = vld [vmem:[#allocation2 + $0xd08] sm:$0xff]
    %v638 = vld [vmem:[#allocation2 + $0xd10] sm:$0xff]
    %v639 = vld [vmem:[#allocation2 + $0xd18] sm:$0xff]
    %v640 = vld [vmem:[#allocation2 + $0xd20] sm:$0xff]
    %v641 = vld [vmem:[#allocation2 + $0xd28] sm:$0xff]
    %v642 = vld [vmem:[#allocation2 + $0xd30] sm:$0xff]
    %v643 = vld [vmem:[#allocation2 + $0xd38] sm:$0xff]
    %v644 = vld [vmem:[#allocation2 + $0xd40] sm:$0xff]
    %v645 = vld [vmem:[#allocation2 + $0xd48] sm:$0xff]
    %v646 = vld [vmem:[#allocation2 + $0xd50] sm:$0xff]
    %v647 = vld [vmem:[#allocation2 + $0xd58] sm:$0xff]
    %v648 = vld [vmem:[#allocation2 + $0xd60] sm:$0xff]
    %v649 = vld [vmem:[#allocation2 + $0xd68] sm:$0xff]
    %v650 = vld [vmem:[#allocation2 + $0xd70] sm:$0xff]
    %v651 = vld [vmem:[#allocation2 + $0xd78] sm:$0xff]
    %v652 = vld [vmem:[#allocation2 + $0xd80] sm:$0xff]
    %v653 = vld [vmem:[#allocation2 + $0xd88] sm:$0xff]
    %v654 = vld [vmem:[#allocation2 + $0xd90] sm:$0xff]
    %v655 = vld [vmem:[#allocation2 + $0xd98] sm:$0xff]
    %v656 = vld [vmem:[#allocation2 + $0xda0] sm:$0xff]
    %v657 = vld [vmem:[#allocation2 + $0xda8] sm:$0xff]
    %v658 = vld [vmem:[#allocation2 + $0xdb0] sm:$0xff]
    %v659 = vld [vmem:[#allocation2 + $0xdb8] sm:$0xff]
    %v660 = vld [vmem:[#allocation2 + $0xdc0] sm:$0xff]
    %v661 = vld [vmem:[#allocation2 + $0xdc8] sm:$0xff]
    %v662 = vld [vmem:[#allocation2 + $0xdd0] sm:$0xff]
    %v663 = vld [vmem:[#allocation2 + $0xdd8] sm:$0xff]
    %v664 = vld [vmem:[#allocation2 + $0xde0] sm:$0xff]
    %v665 = vld [vmem:[#allocation2 + $0xde8] sm:$0xff]
    %v666 = vld [vmem:[#allocation2 + $0xdf0] sm:$0xff]
    %v667 = vld [vmem:[#allocation2 + $0xdf8] sm:$0xff]
    %v668 = vld [vmem:[#allocation2 + $0xe00] sm:$0xff]
    %v669 = vld [vmem:[#allocation2 + $0xe08] sm:$0xff]
    %v670 = vld [vmem:[#allocation2 + $0xe10] sm:$0xff]
    %v671 = vld [vmem:[#allocation2 + $0xe18] sm:$0xff]
    %v672 = vld [vmem:[#allocation2 + $0xe20] sm:$0xff]
    %v673 = vld [vmem:[#allocation2 + $0xe28] sm:$0xff]
    %v674 = vld [vmem:[#allocation2 + $0xe30] sm:$0xff]
    %v675 = vld [vmem:[#allocation2 + $0xe38] sm:$0xff]
    %v676 = vld [vmem:[#allocation2 + $0xe40] sm:$0xff]
    %v677 = vld [vmem:[#allocation2 + $0xe48] sm:$0xff]
    %v678 = vld [vmem:[#allocation2 + $0xe50] sm:$0xff]
    %v679 = vld [vmem:[#allocation2 + $0xe58] sm:$0xff]
    %v680 = vld [vmem:[#allocation2 + $0xe60] sm:$0xff]
    %v681 = vld [vmem:[#allocation2 + $0xe68] sm:$0xff]
    %v682 = vld [vmem:[#allocation2 + $0xe70] sm:$0xff]
    %v683 = vld [vmem:[#allocation2 + $0xe78] sm:$0xff]
    %v684 = vld [vmem:[#allocation2 + $0xe80] sm:$0xff]
    %v685 = vld [vmem:[#allocation2 + $0xe88] sm:$0xff]
    %v686 = vld [vmem:[#allocation2 + $0xe90] sm:$0xff]
    %v687 = vld [vmem:[#allocation2 + $0xe98] sm:$0xff]
    %v688 = vld [vmem:[#allocation2 + $0xea0] sm:$0xff]
    %v689 = vld [vmem:[#allocation2 + $0xea8] sm:$0xff]
    %v690 = vld [vmem:[#allocation2 + $0xeb0] sm:$0xff]
    %v691 = vld [vmem:[#allocation2 + $0xeb8] sm:$0xff]
    %v692 = vld [vmem:[#allocation2 + $0xec0] sm:$0xff]
    %v693 = vld [vmem:[#allocation2 + $0xec8] sm:$0xff]
    %v694 = vld [vmem:[#allocation2 + $0xed0] sm:$0xff]
    %v695 = vld [vmem:[#allocation2 + $0xed8] sm:$0xff]
    %v696 = vld [vmem:[#allocation2 + $0xee0] sm:$0xff]
    %v697 = vld [vmem:[#allocation2 + $0xee8] sm:$0xff]
    %v698 = vld [vmem:[#allocation2 + $0xef0] sm:$0xff]
    %v699 = vld [vmem:[#allocation2 + $0xef8] sm:$0xff]
    %v700 = vld [vmem:[#allocation2 + $0xf00] sm:$0xff]
    %v701 = vld [vmem:[#allocation2 + $0xf08] sm:$0xff]
    %v702 = vld [vmem:[#allocation2 + $0xf10] sm:$0xff]
    %v703 = vld [vmem:[#allocation2 + $0xf18] sm:$0xff]
    %v704 = vld [vmem:[#allocation2 + $0xf20] sm:$0xff]
    %v705 = vld [vmem:[#allocation2 + $0xf28] sm:$0xff]
    %v706 = vld [vmem:[#allocation2 + $0xf30] sm:$0xff]
    %v707 = vld [vmem:[#allocation2 + $0xf38] sm:$0xff]
    %v708 = vld [vmem:[#allocation2 + $0xf40] sm:$0xff]
    %v709 = vld [vmem:[#allocation2 + $0xf48] sm:$0xff]
    %v710 = vld [vmem:[#allocation2 + $0xf50] sm:$0xff]
    %v711 = vld [vmem:[#allocation2 + $0xf58] sm:$0xff]
    %v712 = vld [vmem:[#allocation2 + $0xf60] sm:$0xff]
    %v713 = vld [vmem:[#allocation2 + $0xf68] sm:$0xff]
    %v714 = vld [vmem:[#allocation2 + $0xf70] sm:$0xff]
    %v715 = vld [vmem:[#allocation2 + $0xf78] sm:$0xff]
    %v716 = vld [vmem:[#allocation2 + $0xf80] sm:$0xff]
    %v717 = vld [vmem:[#allocation2 + $0xf88] sm:$0xff]
    %v718 = vld [vmem:[#allocation2 + $0xf90] sm:$0xff]
    %v719 = vld [vmem:[#allocation2 + $0xf98] sm:$0xff]
    %v720 = vld [vmem:[#allocation2 + $0xfa0] sm:$0xff]
    %v721 = vld [vmem:[#allocation2 + $0xfa8] sm:$0xff]
    %v722 = vld [vmem:[#allocation2 + $0xfb0] sm:$0xff]
    %v723 = vld [vmem:[#allocation2 + $0xfb8] sm:$0xff]
    %v724 = vld [vmem:[#allocation2 + $0xfc0] sm:$0xff]
    %v725 = vld [vmem:[#allocation2 + $0xfc8] sm:$0xff]
    %v726 = vld [vmem:[#allocation2 + $0xfd0] sm:$0xff]
    %v727 = vld [vmem:[#allocation2 + $0xfd8] sm:$0xff]
    %v728 = vld [vmem:[#allocation2 + $0xfe0] sm:$0xff]
    %v729 = vld [vmem:[#allocation2 + $0xfe8] sm:$0xff]
    %v730 = vld [vmem:[#allocation2 + $0xff0] sm:$0xff]
    %v731 = vld [vmem:[#allocation2 + $0xff8] sm:$0xff]
    %v732 = vld [vmem:[#allocation2 + $0x1000] sm:$0xff]
    %v733 = vld [vmem:[#allocation2 + $0x1008] sm:$0xff]
    %v734 = vld [vmem:[#allocation2 + $0x1010] sm:$0xff]
    %v735 = vld [vmem:[#allocation2 + $0x1018] sm:$0xff]
    %v736 = vld [vmem:[#allocation2 + $0x1020] sm:$0xff]
    %v737 = vld [vmem:[#allocation2 + $0x1028] sm:$0xff]
    %v738 = vld [vmem:[#allocation2 + $0x1030] sm:$0xff]
    %v739 = vld [vmem:[#allocation2 + $0x1038] sm:$0xff]
    %v740 = vld [vmem:[#allocation2 + $0x1040] sm:$0xff]
    %v741 = vld [vmem:[#allocation2 + $0x1048] sm:$0xff]
    %v742 = vld [vmem:[#allocation2 + $0x1050] sm:$0xff]
    %v743 = vld [vmem:[#allocation2 + $0x1058] sm:$0xff]
    %v744 = vld [vmem:[#allocation2 + $0x1060] sm:$0xff]
    %v745 = vld [vmem:[#allocation2 + $0x1068] sm:$0xff]
    %v746 = vld [vmem:[#allocation2 + $0x1070] sm:$0xff]
    %v747 = vld [vmem:[#allocation2 + $0x1078] sm:$0xff]
    %v748 = vld [vmem:[#allocation2 + $0x1080] sm:$0xff]
    %v749 = vld [vmem:[#allocation2 + $0x1088] sm:$0xff]
    %v750 = vld [vmem:[#allocation2 + $0x1090] sm:$0xff]
    %v751 = vld [vmem:[#allocation2 + $0x1098] sm:$0xff]
    %v752 = vld [vmem:[#allocation2 + $0x10a0] sm:$0xff]
    %v753 = vld [vmem:[#allocation2 + $0x10a8] sm:$0xff]
    %v754 = vld [vmem:[#allocation2 + $0x10b0] sm:$0xff]
    %v755 = vld [vmem:[#allocation2 + $0x10b8] sm:$0xff]
    %v756 = vld [vmem:[#allocation2 + $0x10c0] sm:$0xff]
    %v757 = vld [vmem:[#allocation2 + $0x10c8] sm:$0xff]
    %v758 = vld [vmem:[#allocation2 + $0x10d0] sm:$0xff]
    %v759 = vld [vmem:[#allocation2 + $0x10d8] sm:$0xff]
    %v760 = vld [vmem:[#allocation2 + $0x10e0] sm:$0xff]
    %v761 = vld [vmem:[#allocation2 + $0x10e8] sm:$0xff]
    %v762 = vld [vmem:[#allocation2 + $0x10f0] sm:$0xff]
    %v763 = vld [vmem:[#allocation2 + $0x10f8] sm:$0xff]
    %v764 = vld [vmem:[#allocation2 + $0x1100] sm:$0xff]
    %v765 = vld [vmem:[#allocation2 + $0x1108] sm:$0xff]
    %v766 = vld [vmem:[#allocation2 + $0x1110] sm:$0xff]
    %v767 = vld [vmem:[#allocation2 + $0x1118] sm:$0xff]
    %v768 = vld [vmem:[#allocation2 + $0x1120] sm:$0xff]
    %v769 = vld [vmem:[#allocation2 + $0x1128] sm:$0xff]
    %v770 = vld [vmem:[#allocation2 + $0x1130] sm:$0xff]
    %v771 = vld [vmem:[#allocation2 + $0x1138] sm:$0xff]
    %v772 = vld [vmem:[#allocation2 + $0x1140] sm:$0xff]
    %v773 = vld [vmem:[#allocation2 + $0x1148] sm:$0xff]
    %v774 = vld [vmem:[#allocation2 + $0x1150] sm:$0xff]
    %v775 = vld [vmem:[#allocation2 + $0x1158] sm:$0xff]
    %v776 = vld [vmem:[#allocation2 + $0x1160] sm:$0xff]
    %v777 = vld [vmem:[#allocation2 + $0x1168] sm:$0xff]
    %v778 = vld [vmem:[#allocation2 + $0x1170] sm:$0xff]
    %v779 = vld [vmem:[#allocation2 + $0x1178] sm:$0xff]
    %v780 = vld [vmem:[#allocation2 + $0x1180] sm:$0xff]
    %v781 = vld [vmem:[#allocation2 + $0x1188] sm:$0xff]
    %v782 = vld [vmem:[#allocation2 + $0x1190] sm:$0xff]
    %v783 = vld [vmem:[#allocation2 + $0x1198] sm:$0xff]
    %v784 = vld [vmem:[#allocation2 + $0x11a0] sm:$0xff]
    %v785 = vld [vmem:[#allocation2 + $0x11a8] sm:$0xff]
    %v786 = vld [vmem:[#allocation2 + $0x11b0] sm:$0xff]
    %v787 = vld [vmem:[#allocation2 + $0x11b8] sm:$0xff]
    %v788 = vld [vmem:[#allocation2 + $0x11c0] sm:$0xff]
    %v789 = vld [vmem:[#allocation2 + $0x11c8] sm:$0xff]
    %v790 = vld [vmem:[#allocation2 + $0x11d0] sm:$0xff]
    %v791 = vld [vmem:[#allocation2 + $0x11d8] sm:$0xff]
    %v792 = vld [vmem:[#allocation2 + $0x11e0] sm:$0xff]
    %v793 = vld [vmem:[#allocation2 + $0x11e8] sm:$0xff]
    %v794 = vld [vmem:[#allocation2 + $0x11f0] sm:$0xff]
    %v795 = vld [vmem:[#allocation2 + $0x11f8] sm:$0xff]
    %v796 = vld [vmem:[#allocation4] sm:$0x3f]
    %v798 = vlaneseq
    %v799 = vshrl.u32 %v798, 7
    %v800 = vsub.s32 0, %v799
    %v801 = vrot.slane %v796, %v800
    %v802 = vlaneseq
    %v803 = vshrl.u32 %v802, 7
    %v804 = vsub.s32 1, %v803
    %v805 = vrot.slane %v796, %v804
    %v806 = vlaneseq
    %v807 = vshrl.u32 %v806, 7
    %v808 = vsub.s32 2, %v807
    %v809 = vrot.slane %v796, %v808
    %v810 = vlaneseq
    %v811 = vshrl.u32 %v810, 7
    %v812 = vsub.s32 3, %v811
    %v813 = vrot.slane %v796, %v812
    %v814 = vlaneseq
    %v815 = vshrl.u32 %v814, 7
    %v816 = vsub.s32 4, %v815
    %v817 = vrot.slane %v796, %v816
    %v818 = vlaneseq
    %v819 = vshrl.u32 %v818, 7
    %v820 = vsub.s32 5, %v819
    %v821 = vrot.slane %v796, %v820
    %828 = vmatprep.subr.mxu0 %v221
    %829 = vmatpush1.msra.mxu0 %v220
    %830 = vmatprep.subr.mxu0 %v227
    %831 = vmatpush1.msra.mxu0 %v226
    %832 = vmatprep.subr.mxu0 %v233
    %833 = vmatpush1.msra.mxu0 %v232
    %834 = vmatprep.subr.mxu0 %v239
    %835 = vmatpush1.msra.mxu0 %v238
    %836 = vmatprep.subr.mxu0 %v245
    %837 = vmatpush1.msra.mxu0 %v244
    %838 = vmatprep.subr.mxu0 %v251
    %839 = vmatpush1.msra.mxu0 %v250
    %840 = vmatprep.subr.mxu0 %v257
    %841 = vmatpush1.msra.mxu0 %v256
    %842 = vmatprep.subr.mxu0 %v263
    %843 = vmatpush1.msra.mxu0 %v262
    %844 = vmatprep.subr.mxu0 %v269
    %845 = vmatpush1.msra.mxu0 %v268
    %846 = vmatprep.subr.mxu0 %v275
    %847 = vmatpush1.msra.mxu0 %v274
    %848 = vmatprep.subr.mxu0 %v281
    %849 = vmatpush1.msra.mxu0 %v280
    %850 = vmatprep.subr.mxu0 %v287
    %851 = vmatpush1.msra.mxu0 %v286
    %852 = vmatprep.subr.mxu0 %v293
    %853 = vmatpush1.msra.mxu0 %v292
    %854 = vmatprep.subr.mxu0 %v299
    %855 = vmatpush1.msra.mxu0 %v298
    %856 = vmatprep.subr.mxu0 %v305
    %857 = vmatpush1.msra.mxu0 %v304
    %858 = vmatprep.subr.mxu0 %v311
    %859 = vmatpush1.msra.mxu0 %v310
    %860 = vmatprep.subr.mxu0 %v317
    %861 = vmatpush1.msra.mxu0 %v316
    %862 = vmatprep.subr.mxu0 %v323
    %863 = vmatpush1.msra.mxu0 %v322
    %864 = vmatprep.subr.mxu0 %v329
    %865 = vmatpush1.msra.mxu0 %v328
    %866 = vmatprep.subr.mxu0 %v335
    %867 = vmatpush1.msra.mxu0 %v334
    %868 = vmatprep.subr.mxu0 %v341
    %869 = vmatpush1.msra.mxu0 %v340
    %870 = vmatprep.subr.mxu0 %v347
    %871 = vmatpush1.msra.mxu0 %v346
    %872 = vmatprep.subr.mxu0 %v353
    %873 = vmatpush1.msra.mxu0 %v352
    %874 = vmatprep.subr.mxu0 %v359
    %875 = vmatpush1.msra.mxu0 %v358
    %876 = vmatprep.subr.mxu0 %v365
    %877 = vmatpush1.msra.mxu0 %v364
    %878 = vmatprep.subr.mxu0 %v371
    %879 = vmatpush1.msra.mxu0 %v370
    %880 = vmatprep.subr.mxu0 %v377
    %881 = vmatpush1.msra.mxu0 %v376
    %882 = vmatprep.subr.mxu0 %v383
    %883 = vmatpush1.msra.mxu0 %v382
    %884 = vmatprep.subr.mxu0 %v389
    %885 = vmatpush1.msra.mxu0 %v388
    %886 = vmatprep.subr.mxu0 %v395
    %887 = vmatpush1.msra.mxu0 %v394
    %888 = vmatprep.subr.mxu0 %v401
    %889 = vmatpush1.msra.mxu0 %v400
    %890 = vmatprep.subr.mxu0 %v407
    %891 = vmatpush1.msra.mxu0 %v406
    %892 = vmatprep.mubr.f32.mxu0 %v215
    %893 = vmatmul.mubr.f32.gmra.mrb[0].mxu0 %v214
    %v894 = vpop.f32.mrb[0].mxu0
    %v895 = vadd.f32 %v801, %v894
    %v896 = vpop.f32.mrb[0].mxu0
    %v897 = vadd.f32 %v805, %v896
    %898 = vdwg.mxu0
    %899 = vmatprep.subr.mxu0 %v413
    %900 = vmatpush1.msra.mxu0 %v412
    %901 = vmatprep.subr.mxu0 %v419
    %902 = vmatpush1.msra.mxu0 %v418
    %903 = vmatprep.subr.mxu0 %v425
    %904 = vmatpush1.msra.mxu0 %v424
    %905 = vmatprep.subr.mxu0 %v431
    %906 = vmatpush1.msra.mxu0 %v430
    %907 = vmatprep.subr.mxu0 %v437
    %908 = vmatpush1.msra.mxu0 %v436
    %909 = vmatprep.subr.mxu0 %v443
    %910 = vmatpush1.msra.mxu0 %v442
    %911 = vmatprep.subr.mxu0 %v449
    %912 = vmatpush1.msra.mxu0 %v448
    %913 = vmatprep.subr.mxu0 %v455
    %914 = vmatpush1.msra.mxu0 %v454
    %915 = vmatprep.subr.mxu0 %v461
    %916 = vmatpush1.msra.mxu0 %v460
    %917 = vmatprep.subr.mxu0 %v467
    %918 = vmatpush1.msra.mxu0 %v466
    %919 = vmatprep.subr.mxu0 %v473
    %920 = vmatpush1.msra.mxu0 %v472
    %921 = vmatprep.subr.mxu0 %v479
    %922 = vmatpush1.msra.mxu0 %v478
    %923 = vmatprep.subr.mxu0 %v485
    %924 = vmatpush1.msra.mxu0 %v484
    %925 = vmatprep.subr.mxu0 %v491
    %926 = vmatpush1.msra.mxu0 %v490
    %927 = vmatprep.subr.mxu0 %v497
    %928 = vmatpush1.msra.mxu0 %v496
    %929 = vmatprep.subr.mxu0 %v503
    %930 = vmatpush1.msra.mxu0 %v502
    %931 = vmatprep.subr.mxu0 %v509
    %932 = vmatpush1.msra.mxu0 %v508
    %933 = vmatprep.subr.mxu0 %v515
    %934 = vmatpush1.msra.mxu0 %v514
    %935 = vmatprep.subr.mxu0 %v521
    %936 = vmatpush1.msra.mxu0 %v520
    %937 = vmatprep.subr.mxu0 %v527
    %938 = vmatpush1.msra.mxu0 %v526
    %939 = vmatprep.subr.mxu0 %v533
    %940 = vmatpush1.msra.mxu0 %v532
    %941 = vmatprep.subr.mxu0 %v539
    %942 = vmatpush1.msra.mxu0 %v538
    %943 = vmatprep.subr.mxu0 %v545
    %944 = vmatpush1.msra.mxu0 %v544
    %945 = vmatprep.subr.mxu0 %v551
    %946 = vmatpush1.msra.mxu0 %v550
    %947 = vmatprep.subr.mxu0 %v557
    %948 = vmatpush1.msra.mxu0 %v556
    %949 = vmatprep.subr.mxu0 %v563
    %950 = vmatpush1.msra.mxu0 %v562
    %951 = vmatprep.subr.mxu0 %v569
    %952 = vmatpush1.msra.mxu0 %v568
    %953 = vmatprep.subr.mxu0 %v575
    %954 = vmatpush1.msra.mxu0 %v574
    %955 = vmatprep.subr.mxu0 %v581
    %956 = vmatpush1.msra.mxu0 %v580
    %957 = vmatprep.subr.mxu0 %v587
    %958 = vmatpush1.msra.mxu0 %v586
    %959 = vmatprep.subr.mxu0 %v593
    %960 = vmatpush1.msra.mxu0 %v592
    %961 = vmatprep.subr.mxu0 %v599
    %962 = vmatpush1.msra.mxu0 %v598
    %963 = vmatprep.mubr.f32.mxu0 %v217
    %964 = vmatmul.mubr.f32.gmra.mrb[0].mxu0 %v216
    %v965 = vpop.f32.mrb[0].mxu0
    %v966 = vadd.f32 %v895, %v965
    %v967 = vpop.f32.mrb[0].mxu0
    %v968 = vadd.f32 %v897, %v967
    %969 = vdwg.mxu0
    %970 = vmatprep.subr.mxu0 %v605
    %971 = vmatpush1.msra.mxu0 %v604
    %972 = vmatprep.subr.mxu0 %v611
    %973 = vmatpush1.msra.mxu0 %v610
    %974 = vmatprep.subr.mxu0 %v617
    %975 = vmatpush1.msra.mxu0 %v616
    %976 = vmatprep.subr.mxu0 %v623
    %977 = vmatpush1.msra.mxu0 %v622
    %978 = vmatprep.subr.mxu0 %v629
    %979 = vmatpush1.msra.mxu0 %v628
    %980 = vmatprep.subr.mxu0 %v635
    %981 = vmatpush1.msra.mxu0 %v634
    %982 = vmatprep.subr.mxu0 %v641
    %983 = vmatpush1.msra.mxu0 %v640
    %984 = vmatprep.subr.mxu0 %v647
    %985 = vmatpush1.msra.mxu0 %v646
    %986 = vmatprep.subr.mxu0 %v653
    %987 = vmatpush1.msra.mxu0 %v652
    %988 = vmatprep.subr.mxu0 %v659
    %989 = vmatpush1.msra.mxu0 %v658
    %990 = vmatprep.subr.mxu0 %v665
    %991 = vmatpush1.msra.mxu0 %v664
    %992 = vmatprep.subr.mxu0 %v671
    %993 = vmatpush1.msra.mxu0 %v670
    %994 = vmatprep.subr.mxu0 %v677
    %995 = vmatpush1.msra.mxu0 %v676
    %996 = vmatprep.subr.mxu0 %v683
    %997 = vmatpush1.msra.mxu0 %v682
    %998 = vmatprep.subr.mxu0 %v689
    %999 = vmatpush1.msra.mxu0 %v688
    %1000 = vmatprep.subr.mxu0 %v695
    %1001 = vmatpush1.msra.mxu0 %v694
    %1002 = vmatprep.subr.mxu0 %v701
    %1003 = vmatpush1.msra.mxu0 %v700
    %1004 = vmatprep.subr.mxu0 %v707
    %1005 = vmatpush1.msra.mxu0 %v706
    %1006 = vmatprep.subr.mxu0 %v713
    %1007 = vmatpush1.msra.mxu0 %v712
    %1008 = vmatprep.subr.mxu0 %v719
    %1009 = vmatpush1.msra.mxu0 %v718
    %1010 = vmatprep.subr.mxu0 %v725
    %1011 = vmatpush1.msra.mxu0 %v724
    %1012 = vmatprep.subr.mxu0 %v731
    %1013 = vmatpush1.msra.mxu0 %v730
    %1014 = vmatprep.subr.mxu0 %v737
    %1015 = vmatpush1.msra.mxu0 %v736
    %1016 = vmatprep.subr.mxu0 %v743
    %1017 = vmatpush1.msra.mxu0 %v742
    %1018 = vmatprep.subr.mxu0 %v749
    %1019 = vmatpush1.msra.mxu0 %v748
    %1020 = vmatprep.subr.mxu0 %v755
    %1021 = vmatpush1.msra.mxu0 %v754
    %1022 = vmatprep.subr.mxu0 %v761
    %1023 = vmatpush1.msra.mxu0 %v760
    %1024 = vmatprep.subr.mxu0 %v767
    %1025 = vmatpush1.msra.mxu0 %v766
    %1026 = vmatprep.subr.mxu0 %v773
    %1027 = vmatpush1.msra.mxu0 %v772
    %1028 = vmatprep.subr.mxu0 %v779
    %1029 = vmatpush1.msra.mxu0 %v778
    %1030 = vmatprep.subr.mxu0 %v785
    %1031 = vmatpush1.msra.mxu0 %v784
    %1032 = vmatprep.subr.mxu0 %v791
    %1033 = vmatpush1.msra.mxu0 %v790
    %1034 = vmatprep.mubr.f32.mxu0 %v219
    %1035 = vmatmul.mubr.f32.gmra.mrb[0].mxu0 %v218
    %v1036 = vpop.f32.mrb[0].mxu0
    %v1037 = vadd.f32 %v966, %v1036
    %v1038 = vpop.f32.mrb[0].mxu0
    %v1039 = vadd.f32 %v968, %v1038
    %1040 = vdwg.mxu0
    %1041 = vmatprep.subr.mxu0 %v223
    %1042 = vmatpush1.msra.mxu0 %v222
    %1043 = vmatprep.subr.mxu0 %v229
    %1044 = vmatpush1.msra.mxu0 %v228
    %1045 = vmatprep.subr.mxu0 %v235
    %1046 = vmatpush1.msra.mxu0 %v234
    %1047 = vmatprep.subr.mxu0 %v241
    %1048 = vmatpush1.msra.mxu0 %v240
    %1049 = vmatprep.subr.mxu0 %v247
    %1050 = vmatpush1.msra.mxu0 %v246
    %1051 = vmatprep.subr.mxu0 %v253
    %1052 = vmatpush1.msra.mxu0 %v252
    %1053 = vmatprep.subr.mxu0 %v259
    %1054 = vmatpush1.msra.mxu0 %v258
    %1055 = vmatprep.subr.mxu0 %v265
    %1056 = vmatpush1.msra.mxu0 %v264
    %1057 = vmatprep.subr.mxu0 %v271
    %1058 = vmatpush1.msra.mxu0 %v270
    %1059 = vmatprep.subr.mxu0 %v277
    %1060 = vmatpush1.msra.mxu0 %v276
    %1061 = vmatprep.subr.mxu0 %v283
    %1062 = vmatpush1.msra.mxu0 %v282
    %1063 = vmatprep.subr.mxu0 %v289
    %1064 = vmatpush1.msra.mxu0 %v288
    %1065 = vmatprep.subr.mxu0 %v295
    %1066 = vmatpush1.msra.mxu0 %v294
    %1067 = vmatprep.subr.mxu0 %v301
    %1068 = vmatpush1.msra.mxu0 %v300
    %1069 = vmatprep.subr.mxu0 %v307
    %1070 = vmatpush1.msra.mxu0 %v306
    %1071 = vmatprep.subr.mxu0 %v313
    %1072 = vmatpush1.msra.mxu0 %v312
    %1073 = vmatprep.subr.mxu0 %v319
    %1074 = vmatpush1.msra.mxu0 %v318
    %1075 = vmatprep.subr.mxu0 %v325
    %1076 = vmatpush1.msra.mxu0 %v324
    %1077 = vmatprep.subr.mxu0 %v331
    %1078 = vmatpush1.msra.mxu0 %v330
    %1079 = vmatprep.subr.mxu0 %v337
    %1080 = vmatpush1.msra.mxu0 %v336
    %1081 = vmatprep.subr.mxu0 %v343
    %1082 = vmatpush1.msra.mxu0 %v342
    %1083 = vmatprep.subr.mxu0 %v349
    %1084 = vmatpush1.msra.mxu0 %v348
    %1085 = vmatprep.subr.mxu0 %v355
    %1086 = vmatpush1.msra.mxu0 %v354
    %1087 = vmatprep.subr.mxu0 %v361
    %1088 = vmatpush1.msra.mxu0 %v360
    %1089 = vmatprep.subr.mxu0 %v367
    %1090 = vmatpush1.msra.mxu0 %v366
    %1091 = vmatprep.subr.mxu0 %v373
    %1092 = vmatpush1.msra.mxu0 %v372
    %1093 = vmatprep.subr.mxu0 %v379
    %1094 = vmatpush1.msra.mxu0 %v378
    %1095 = vmatprep.subr.mxu0 %v385
    %1096 = vmatpush1.msra.mxu0 %v384
    %1097 = vmatprep.subr.mxu0 %v391
    %1098 = vmatpush1.msra.mxu0 %v390
    %1099 = vmatprep.subr.mxu0 %v397
    %1100 = vmatpush1.msra.mxu0 %v396
    %1101 = vmatprep.subr.mxu0 %v403
    %1102 = vmatpush1.msra.mxu0 %v402
    %1103 = vmatprep.subr.mxu0 %v409
    %1104 = vmatpush1.msra.mxu0 %v408
    %1105 = vmatprep.mubr.f32.mxu0 %v215
    %1106 = vmatmul.mubr.f32.gmra.mrb[0].mxu0 %v214
    %v1107 = vpop.f32.mrb[0].mxu0
    %v1108 = vadd.f32 %v809, %v1107
    %v1109 = vpop.f32.mrb[0].mxu0
    %v1110 = vadd.f32 %v813, %v1109
    %1111 = vdwg.mxu0
    %1112 = vmatprep.subr.mxu0 %v415
    %1113 = vmatpush1.msra.mxu0 %v414
    %1114 = vmatprep.subr.mxu0 %v421
    %1115 = vmatpush1.msra.mxu0 %v420
    %1116 = vmatprep.subr.mxu0 %v427
    %1117 = vmatpush1.msra.mxu0 %v426
    %1118 = vmatprep.subr.mxu0 %v433
    %1119 = vmatpush1.msra.mxu0 %v432
    %1120 = vmatprep.subr.mxu0 %v439
    %1121 = vmatpush1.msra.mxu0 %v438
    %1122 = vmatprep.subr.mxu0 %v445
    %1123 = vmatpush1.msra.mxu0 %v444
    %1124 = vmatprep.subr.mxu0 %v451
    %1125 = vmatpush1.msra.mxu0 %v450
    %1126 = vmatprep.subr.mxu0 %v457
    %1127 = vmatpush1.msra.mxu0 %v456
    %1128 = vmatprep.subr.mxu0 %v463
    %1129 = vmatpush1.msra.mxu0 %v462
    %1130 = vmatprep.subr.mxu0 %v469
    %1131 = vmatpush1.msra.mxu0 %v468
    %1132 = vmatprep.subr.mxu0 %v475
    %1133 = vmatpush1.msra.mxu0 %v474
    %1134 = vmatprep.subr.mxu0 %v481
    %1135 = vmatpush1.msra.mxu0 %v480
    %1136 = vmatprep.subr.mxu0 %v487
    %1137 = vmatpush1.msra.mxu0 %v486
    %1138 = vmatprep.subr.mxu0 %v493
    %1139 = vmatpush1.msra.mxu0 %v492
    %1140 = vmatprep.subr.mxu0 %v499
    %1141 = vmatpush1.msra.mxu0 %v498
    %1142 = vmatprep.subr.mxu0 %v505
    %1143 = vmatpush1.msra.mxu0 %v504
    %1144 = vmatprep.subr.mxu0 %v511
    %1145 = vmatpush1.msra.mxu0 %v510
    %1146 = vmatprep.subr.mxu0 %v517
    %1147 = vmatpush1.msra.mxu0 %v516
    %1148 = vmatprep.subr.mxu0 %v523
    %1149 = vmatpush1.msra.mxu0 %v522
    %1150 = vmatprep.subr.mxu0 %v529
    %1151 = vmatpush1.msra.mxu0 %v528
    %1152 = vmatprep.subr.mxu0 %v535
    %1153 = vmatpush1.msra.mxu0 %v534
    %1154 = vmatprep.subr.mxu0 %v541
    %1155 = vmatpush1.msra.mxu0 %v540
    %1156 = vmatprep.subr.mxu0 %v547
    %1157 = vmatpush1.msra.mxu0 %v546
    %1158 = vmatprep.subr.mxu0 %v553
    %1159 = vmatpush1.msra.mxu0 %v552
    %1160 = vmatprep.subr.mxu0 %v559
    %1161 = vmatpush1.msra.mxu0 %v558
    %1162 = vmatprep.subr.mxu0 %v565
    %1163 = vmatpush1.msra.mxu0 %v564
    %1164 = vmatprep.subr.mxu0 %v571
    %1165 = vmatpush1.msra.mxu0 %v570
    %1166 = vmatprep.subr.mxu0 %v577
    %1167 = vmatpush1.msra.mxu0 %v576
    %1168 = vmatprep.subr.mxu0 %v583
    %1169 = vmatpush1.msra.mxu0 %v582
    %1170 = vmatprep.subr.mxu0 %v589
    %1171 = vmatpush1.msra.mxu0 %v588
    %1172 = vmatprep.subr.mxu0 %v595
    %1173 = vmatpush1.msra.mxu0 %v594
    %1174 = vmatprep.subr.mxu0 %v601
    %1175 = vmatpush1.msra.mxu0 %v600
    %1176 = vmatprep.mubr.f32.mxu0 %v217
    %1177 = vmatmul.mubr.f32.gmra.mrb[0].mxu0 %v216
    %v1178 = vpop.f32.mrb[0].mxu0
    %v1179 = vadd.f32 %v1108, %v1178
    %v1180 = vpop.f32.mrb[0].mxu0
    %v1181 = vadd.f32 %v1110, %v1180
    %1182 = vdwg.mxu0
    %1183 = vmatprep.subr.mxu0 %v607
    %1184 = vmatpush1.msra.mxu0 %v606
    %1185 = vmatprep.subr.mxu0 %v613
    %1186 = vmatpush1.msra.mxu0 %v612
    %1187 = vmatprep.subr.mxu0 %v619
    %1188 = vmatpush1.msra.mxu0 %v618
    %1189 = vmatprep.subr.mxu0 %v625
    %1190 = vmatpush1.msra.mxu0 %v624
    %1191 = vmatprep.subr.mxu0 %v631
    %1192 = vmatpush1.msra.mxu0 %v630
    %1193 = vmatprep.subr.mxu0 %v637
    %1194 = vmatpush1.msra.mxu0 %v636
    %1195 = vmatprep.subr.mxu0 %v643
    %1196 = vmatpush1.msra.mxu0 %v642
    %1197 = vmatprep.subr.mxu0 %v649
    %1198 = vmatpush1.msra.mxu0 %v648
    %1199 = vmatprep.subr.mxu0 %v655
    %1200 = vmatpush1.msra.mxu0 %v654
    %1201 = vmatprep.subr.mxu0 %v661
    %1202 = vmatpush1.msra.mxu0 %v660
    %1203 = vmatprep.subr.mxu0 %v667
    %1204 = vmatpush1.msra.mxu0 %v666
    %1205 = vmatprep.subr.mxu0 %v673
    %1206 = vmatpush1.msra.mxu0 %v672
    %1207 = vmatprep.subr.mxu0 %v679
    %1208 = vmatpush1.msra.mxu0 %v678
    %1209 = vmatprep.subr.mxu0 %v685
    %1210 = vmatpush1.msra.mxu0 %v684
    %1211 = vmatprep.subr.mxu0 %v691
    %1212 = vmatpush1.msra.mxu0 %v690
    %1213 = vmatprep.subr.mxu0 %v697
    %1214 = vmatpush1.msra.mxu0 %v696
    %1215 = vmatprep.subr.mxu0 %v703
    %1216 = vmatpush1.msra.mxu0 %v702
    %1217 = vmatprep.subr.mxu0 %v709
    %1218 = vmatpush1.msra.mxu0 %v708
    %1219 = vmatprep.subr.mxu0 %v715
    %1220 = vmatpush1.msra.mxu0 %v714
    %1221 = vmatprep.subr.mxu0 %v721
    %1222 = vmatpush1.msra.mxu0 %v720
    %1223 = vmatprep.subr.mxu0 %v727
    %1224 = vmatpush1.msra.mxu0 %v726
    %1225 = vmatprep.subr.mxu0 %v733
    %1226 = vmatpush1.msra.mxu0 %v732
    %1227 = vmatprep.subr.mxu0 %v739
    %1228 = vmatpush1.msra.mxu0 %v738
    %1229 = vmatprep.subr.mxu0 %v745
    %1230 = vmatpush1.msra.mxu0 %v744
    %1231 = vmatprep.subr.mxu0 %v751
    %1232 = vmatpush1.msra.mxu0 %v750
    %1233 = vmatprep.subr.mxu0 %v757
    %1234 = vmatpush1.msra.mxu0 %v756
    %1235 = vmatprep.subr.mxu0 %v763
    %1236 = vmatpush1.msra.mxu0 %v762
    %1237 = vmatprep.subr.mxu0 %v769
    %1238 = vmatpush1.msra.mxu0 %v768
    %1239 = vmatprep.subr.mxu0 %v775
    %1240 = vmatpush1.msra.mxu0 %v774
    %1241 = vmatprep.subr.mxu0 %v781
    %1242 = vmatpush1.msra.mxu0 %v780
    %1243 = vmatprep.subr.mxu0 %v787
    %1244 = vmatpush1.msra.mxu0 %v786
    %1245 = vmatprep.subr.mxu0 %v793
    %1246 = vmatpush1.msra.mxu0 %v792
    %1247 = vmatprep.mubr.f32.mxu0 %v219
    %1248 = vmatmul.mubr.f32.gmra.mrb[0].mxu0 %v218
    %v1249 = vpop.f32.mrb[0].mxu0
    %v1250 = vadd.f32 %v1179, %v1249
    %v1251 = vpop.f32.mrb[0].mxu0
    %v1252 = vadd.f32 %v1181, %v1251
    %1253 = vdwg.mxu0
    %1254 = vmatprep.subr.mxu0 %v225
    %1255 = vmatpush1.msra.mxu0 %v224
    %1256 = vmatprep.subr.mxu0 %v231
    %1257 = vmatpush1.msra.mxu0 %v230
    %1258 = vmatprep.subr.mxu0 %v237
    %1259 = vmatpush1.msra.mxu0 %v236
    %1260 = vmatprep.subr.mxu0 %v243
    %1261 = vmatpush1.msra.mxu0 %v242
    %1262 = vmatprep.subr.mxu0 %v249
    %1263 = vmatpush1.msra.mxu0 %v248
    %1264 = vmatprep.subr.mxu0 %v255
    %1265 = vmatpush1.msra.mxu0 %v254
    %1266 = vmatprep.subr.mxu0 %v261
    %1267 = vmatpush1.msra.mxu0 %v260
    %1268 = vmatprep.subr.mxu0 %v267
    %1269 = vmatpush1.msra.mxu0 %v266
    %1270 = vmatprep.subr.mxu0 %v273
    %1271 = vmatpush1.msra.mxu0 %v272
    %1272 = vmatprep.subr.mxu0 %v279
    %1273 = vmatpush1.msra.mxu0 %v278
    %1274 = vmatprep.subr.mxu0 %v285
    %1275 = vmatpush1.msra.mxu0 %v284
    %1276 = vmatprep.subr.mxu0 %v291
    %1277 = vmatpush1.msra.mxu0 %v290
    %1278 = vmatprep.subr.mxu0 %v297
    %1279 = vmatpush1.msra.mxu0 %v296
    %1280 = vmatprep.subr.mxu0 %v303
    %1281 = vmatpush1.msra.mxu0 %v302
    %1282 = vmatprep.subr.mxu0 %v309
    %1283 = vmatpush1.msra.mxu0 %v308
    %1284 = vmatprep.subr.mxu0 %v315
    %1285 = vmatpush1.msra.mxu0 %v314
    %1286 = vmatprep.subr.mxu0 %v321
    %1287 = vmatpush1.msra.mxu0 %v320
    %1288 = vmatprep.subr.mxu0 %v327
    %1289 = vmatpush1.msra.mxu0 %v326
    %1290 = vmatprep.subr.mxu0 %v333
    %1291 = vmatpush1.msra.mxu0 %v332
    %1292 = vmatprep.subr.mxu0 %v339
    %1293 = vmatpush1.msra.mxu0 %v338
    %1294 = vmatprep.subr.mxu0 %v345
    %1295 = vmatpush1.msra.mxu0 %v344
    %1296 = vmatprep.subr.mxu0 %v351
    %1297 = vmatpush1.msra.mxu0 %v350
    %1298 = vmatprep.subr.mxu0 %v357
    %1299 = vmatpush1.msra.mxu0 %v356
    %1300 = vmatprep.subr.mxu0 %v363
    %1301 = vmatpush1.msra.mxu0 %v362
    %1302 = vmatprep.subr.mxu0 %v369
    %1303 = vmatpush1.msra.mxu0 %v368
    %1304 = vmatprep.subr.mxu0 %v375
    %1305 = vmatpush1.msra.mxu0 %v374
    %1306 = vmatprep.subr.mxu0 %v381
    %1307 = vmatpush1.msra.mxu0 %v380
    %1308 = vmatprep.subr.mxu0 %v387
    %1309 = vmatpush1.msra.mxu0 %v386
    %1310 = vmatprep.subr.mxu0 %v393
    %1311 = vmatpush1.msra.mxu0 %v392
    %1312 = vmatprep.subr.mxu0 %v399
    %1313 = vmatpush1.msra.mxu0 %v398
    %1314 = vmatprep.subr.mxu0 %v405
    %1315 = vmatpush1.msra.mxu0 %v404
    %1316 = vmatprep.subr.mxu0 %v411
    %1317 = vmatpush1.msra.mxu0 %v410
    %1318 = vmatprep.mubr.f32.mxu0 %v215
    %1319 = vmatmul.mubr.f32.gmra.mrb[0].mxu0 %v214
    %v1320 = vpop.f32.mrb[0].mxu0
    %v1321 = vadd.f32 %v817, %v1320
    %v1322 = vpop.f32.mrb[0].mxu0
    %v1323 = vadd.f32 %v821, %v1322
    %1324 = vdwg.mxu0
    %1325 = vmatprep.subr.mxu0 %v417
    %1326 = vmatpush1.msra.mxu0 %v416
    %1327 = vmatprep.subr.mxu0 %v423
    %1328 = vmatpush1.msra.mxu0 %v422
    %1329 = vmatprep.subr.mxu0 %v429
    %1330 = vmatpush1.msra.mxu0 %v428
    %1331 = vmatprep.subr.mxu0 %v435
    %1332 = vmatpush1.msra.mxu0 %v434
    %1333 = vmatprep.subr.mxu0 %v441
    %1334 = vmatpush1.msra.mxu0 %v440
    %1335 = vmatprep.subr.mxu0 %v447
    %1336 = vmatpush1.msra.mxu0 %v446
    %1337 = vmatprep.subr.mxu0 %v453
    %1338 = vmatpush1.msra.mxu0 %v452
    %1339 = vmatprep.subr.mxu0 %v459
    %1340 = vmatpush1.msra.mxu0 %v458
    %1341 = vmatprep.subr.mxu0 %v465
    %1342 = vmatpush1.msra.mxu0 %v464
    %1343 = vmatprep.subr.mxu0 %v471
    %1344 = vmatpush1.msra.mxu0 %v470
    %1345 = vmatprep.subr.mxu0 %v477
    %1346 = vmatpush1.msra.mxu0 %v476
    %1347 = vmatprep.subr.mxu0 %v483
    %1348 = vmatpush1.msra.mxu0 %v482
    %1349 = vmatprep.subr.mxu0 %v489
    %1350 = vmatpush1.msra.mxu0 %v488
    %1351 = vmatprep.subr.mxu0 %v495
    %1352 = vmatpush1.msra.mxu0 %v494
    %1353 = vmatprep.subr.mxu0 %v501
    %1354 = vmatpush1.msra.mxu0 %v500
    %1355 = vmatprep.subr.mxu0 %v507
    %1356 = vmatpush1.msra.mxu0 %v506
    %1357 = vmatprep.subr.mxu0 %v513
    %1358 = vmatpush1.msra.mxu0 %v512
    %1359 = vmatprep.subr.mxu0 %v519
    %1360 = vmatpush1.msra.mxu0 %v518
    %1361 = vmatprep.subr.mxu0 %v525
    %1362 = vmatpush1.msra.mxu0 %v524
    %1363 = vmatprep.subr.mxu0 %v531
    %1364 = vmatpush1.msra.mxu0 %v530
    %1365 = vmatprep.subr.mxu0 %v537
    %1366 = vmatpush1.msra.mxu0 %v536
    %1367 = vmatprep.subr.mxu0 %v543
    %1368 = vmatpush1.msra.mxu0 %v542
    %1369 = vmatprep.subr.mxu0 %v549
    %1370 = vmatpush1.msra.mxu0 %v548
    %1371 = vmatprep.subr.mxu0 %v555
    %1372 = vmatpush1.msra.mxu0 %v554
    %1373 = vmatprep.subr.mxu0 %v561
    %1374 = vmatpush1.msra.mxu0 %v560
    %1375 = vmatprep.subr.mxu0 %v567
    %1376 = vmatpush1.msra.mxu0 %v566
    %1377 = vmatprep.subr.mxu0 %v573
    %1378 = vmatpush1.msra.mxu0 %v572
    %1379 = vmatprep.subr.mxu0 %v579
    %1380 = vmatpush1.msra.mxu0 %v578
    %1381 = vmatprep.subr.mxu0 %v585
    %1382 = vmatpush1.msra.mxu0 %v584
    %1383 = vmatprep.subr.mxu0 %v591
    %1384 = vmatpush1.msra.mxu0 %v590
    %1385 = vmatprep.subr.mxu0 %v597
    %1386 = vmatpush1.msra.mxu0 %v596
    %1387 = vmatprep.subr.mxu0 %v603
    %1388 = vmatpush1.msra.mxu0 %v602
    %1389 = vmatprep.mubr.f32.mxu0 %v217
    %1390 = vmatmul.mubr.f32.gmra.mrb[0].mxu0 %v216
    %v1391 = vpop.f32.mrb[0].mxu0
    %v1392 = vadd.f32 %v1321, %v1391
    %v1393 = vpop.f32.mrb[0].mxu0
    %v1394 = vadd.f32 %v1323, %v1393
    %1395 = vdwg.mxu0
    %1396 = vmatprep.subr.mxu0 %v609
    %1397 = vmatpush1.msra.mxu0 %v608
    %1398 = vmatprep.subr.mxu0 %v615
    %1399 = vmatpush1.msra.mxu0 %v614
    %1400 = vmatprep.subr.mxu0 %v621
    %1401 = vmatpush1.msra.mxu0 %v620
    %1402 = vmatprep.subr.mxu0 %v627
    %1403 = vmatpush1.msra.mxu0 %v626
    %1404 = vmatprep.subr.mxu0 %v633
    %1405 = vmatpush1.msra.mxu0 %v632
    %1406 = vmatprep.subr.mxu0 %v639
    %1407 = vmatpush1.msra.mxu0 %v638
    %1408 = vmatprep.subr.mxu0 %v645
    %1409 = vmatpush1.msra.mxu0 %v644
    %1410 = vmatprep.subr.mxu0 %v651
    %1411 = vmatpush1.msra.mxu0 %v650
    %1412 = vmatprep.subr.mxu0 %v657
    %1413 = vmatpush1.msra.mxu0 %v656
    %1414 = vmatprep.subr.mxu0 %v663
    %1415 = vmatpush1.msra.mxu0 %v662
    %1416 = vmatprep.subr.mxu0 %v669
    %1417 = vmatpush1.msra.mxu0 %v668
    %1418 = vmatprep.subr.mxu0 %v675
    %1419 = vmatpush1.msra.mxu0 %v674
    %1420 = vmatprep.subr.mxu0 %v681
    %1421 = vmatpush1.msra.mxu0 %v680
    %1422 = vmatprep.subr.mxu0 %v687
    %1423 = vmatpush1.msra.mxu0 %v686
    %1424 = vmatprep.subr.mxu0 %v693
    %1425 = vmatpush1.msra.mxu0 %v692
    %1426 = vmatprep.subr.mxu0 %v699
    %1427 = vmatpush1.msra.mxu0 %v698
    %1428 = vmatprep.subr.mxu0 %v705
    %1429 = vmatpush1.msra.mxu0 %v704
    %1430 = vmatprep.subr.mxu0 %v711
    %1431 = vmatpush1.msra.mxu0 %v710
    %1432 = vmatprep.subr.mxu0 %v717
    %1433 = vmatpush1.msra.mxu0 %v716
    %1434 = vmatprep.subr.mxu0 %v723
    %1435 = vmatpush1.msra.mxu0 %v722
    %1436 = vmatprep.subr.mxu0 %v729
    %1437 = vmatpush1.msra.mxu0 %v728
    %1438 = vmatprep.subr.mxu0 %v735
    %1439 = vmatpush1.msra.mxu0 %v734
    %1440 = vmatprep.subr.mxu0 %v741
    %1441 = vmatpush1.msra.mxu0 %v740
    %1442 = vmatprep.subr.mxu0 %v747
    %1443 = vmatpush1.msra.mxu0 %v746
    %1444 = vmatprep.subr.mxu0 %v753
    %1445 = vmatpush1.msra.mxu0 %v752
    %1446 = vmatprep.subr.mxu0 %v759
    %1447 = vmatpush1.msra.mxu0 %v758
    %1448 = vmatprep.subr.mxu0 %v765
    %1449 = vmatpush1.msra.mxu0 %v764
    %1450 = vmatprep.subr.mxu0 %v771
    %1451 = vmatpush1.msra.mxu0 %v770
    %1452 = vmatprep.subr.mxu0 %v777
    %1453 = vmatpush1.msra.mxu0 %v776
    %1454 = vmatprep.subr.mxu0 %v783
    %1455 = vmatpush1.msra.mxu0 %v782
    %1456 = vmatprep.subr.mxu0 %v789
    %1457 = vmatpush1.msra.mxu0 %v788
    %1458 = vmatprep.subr.mxu0 %v795
    %1459 = vmatpush1.msra.mxu0 %v794
    %1460 = vmatprep.mubr.f32.mxu0 %v219
    %1461 = vmatmul.mubr.f32.gmra.mrb[0].mxu0 %v218
    %v1462 = vpop.f32.mrb[0].mxu0
    %v1463 = vadd.f32 %v1392, %v1462
    %v1464 = vpop.f32.mrb[0].mxu0
    %v1465 = vadd.f32 %v1394, %v1464
    %1466 = vdwg.mxu0
    %v1467 = vmax.f32 %v1037, 0.0
    %v1468 = vmax.f32 %v1039, 0.0
    %v1469 = vmax.f32 %v1250, 0.0
    %v1470 = vmax.f32 %v1252, 0.0
    %v1471 = vmax.f32 %v1463, 0.0
    %v1472 = vmax.f32 %v1465, 0.0
    %v1473 = vld [vmem:[#allocation6] sm:$0xff]
    %v1474 = vld [vmem:[#allocation6 + $0x8] sm:$0xff]
    %v1475 = vld [vmem:[#allocation6 + $0x10] sm:$0xff]
    %v1476 = vld [vmem:[#allocation6 + $0x18] sm:$0xff]
    %v1477 = vld [vmem:[#allocation6 + $0x20] sm:$0xff]
    %v1478 = vld [vmem:[#allocation6 + $0x28] sm:$0xff]
    %v1479 = vld [vmem:[#allocation6 + $0x30] sm:$0xff]
    %v1480 = vld [vmem:[#allocation6 + $0x38] sm:$0xff]
    %v1481 = vld [vmem:[#allocation6 + $0x40] sm:$0xff]
    %v1482 = vld [vmem:[#allocation6 + $0x48] sm:$0xff]
    %v1483 = vld [vmem:[#allocation6 + $0x50] sm:$0xff]
    %v1484 = vld [vmem:[#allocation6 + $0x58] sm:$0xff]
    %v1485 = vld [vmem:[#allocation6 + $0x60] sm:$0xff]
    %v1486 = vld [vmem:[#allocation6 + $0x68] sm:$0xff]
    %v1487 = vld [vmem:[#allocation6 + $0x70] sm:$0xff]
    %v1488 = vld [vmem:[#allocation6 + $0x78] sm:$0xff]
    %v1489 = vld [vmem:[#allocation6 + $0x80] sm:$0xff]
    %v1490 = vld [vmem:[#allocation6 + $0x88] sm:$0xff]
    %v1491 = vld [vmem:[#allocation6 + $0x90] sm:$0xff]
    %v1492 = vld [vmem:[#allocation6 + $0x98] sm:$0xff]
    %v1493 = vld [vmem:[#allocation6 + $0xa0] sm:$0xff]
    %v1494 = vld [vmem:[#allocation6 + $0xa8] sm:$0xff]
    %v1495 = vld [vmem:[#allocation6 + $0xb0] sm:$0xff]
    %v1496 = vld [vmem:[#allocation6 + $0xb8] sm:$0xff]
    %v1497 = vld [vmem:[#allocation6 + $0xc0] sm:$0xff]
    %v1498 = vld [vmem:[#allocation6 + $0xc8] sm:$0xff]
    %v1499 = vld [vmem:[#allocation6 + $0xd0] sm:$0xff]
    %v1500 = vld [vmem:[#allocation6 + $0xd8] sm:$0xff]
    %v1501 = vld [vmem:[#allocation6 + $0xe0] sm:$0xff]
    %v1502 = vld [vmem:[#allocation6 + $0xe8] sm:$0xff]
    %v1503 = vld [vmem:[#allocation6 + $0xf0] sm:$0xff]
    %v1504 = vld [vmem:[#allocation6 + $0xf8] sm:$0xff]
    %v1505 = vld [vmem:[#allocation6 + $0x100] sm:$0xff]
    %v1506 = vld [vmem:[#allocation6 + $0x108] sm:$0xff]
    %v1507 = vld [vmem:[#allocation6 + $0x110] sm:$0xff]
    %v1508 = vld [vmem:[#allocation6 + $0x118] sm:$0xff]
    %v1509 = vld [vmem:[#allocation6 + $0x120] sm:$0xff]
    %v1510 = vld [vmem:[#allocation6 + $0x128] sm:$0xff]
    %v1511 = vld [vmem:[#allocation6 + $0x130] sm:$0xff]
    %v1512 = vld [vmem:[#allocation6 + $0x138] sm:$0xff]
    %v1513 = vld [vmem:[#allocation6 + $0x140] sm:$0xff]
    %v1514 = vld [vmem:[#allocation6 + $0x148] sm:$0xff]
    %v1515 = vld [vmem:[#allocation6 + $0x150] sm:$0xff]
    %v1516 = vld [vmem:[#allocation6 + $0x158] sm:$0xff]
    %v1517 = vld [vmem:[#allocation6 + $0x160] sm:$0xff]
    %v1518 = vld [vmem:[#allocation6 + $0x168] sm:$0xff]
    %v1519 = vld [vmem:[#allocation6 + $0x170] sm:$0xff]
    %v1520 = vld [vmem:[#allocation6 + $0x178] sm:$0xff]
    %v1521 = vld [vmem:[#allocation6 + $0x180] sm:$0xff]
    %v1522 = vld [vmem:[#allocation6 + $0x188] sm:$0xff]
    %v1523 = vld [vmem:[#allocation6 + $0x190] sm:$0xff]
    %v1524 = vld [vmem:[#allocation6 + $0x198] sm:$0xff]
    %v1525 = vld [vmem:[#allocation6 + $0x1a0] sm:$0xff]
    %v1526 = vld [vmem:[#allocation6 + $0x1a8] sm:$0xff]
    %v1527 = vld [vmem:[#allocation6 + $0x1b0] sm:$0xff]
    %v1528 = vld [vmem:[#allocation6 + $0x1b8] sm:$0xff]
    %v1529 = vld [vmem:[#allocation6 + $0x1c0] sm:$0xff]
    %v1530 = vld [vmem:[#allocation6 + $0x1c8] sm:$0xff]
    %v1531 = vld [vmem:[#allocation6 + $0x1d0] sm:$0xff]
    %v1532 = vld [vmem:[#allocation6 + $0x1d8] sm:$0xff]
    %v1533 = vld [vmem:[#allocation6 + $0x1e0] sm:$0xff]
    %v1534 = vld [vmem:[#allocation6 + $0x1e8] sm:$0xff]
    %v1535 = vld [vmem:[#allocation6 + $0x1f0] sm:$0xff]
    %v1536 = vld [vmem:[#allocation6 + $0x1f8] sm:$0xff]
    %v1537 = vld [vmem:[#allocation6 + $0x200] sm:$0xff]
    %v1538 = vld [vmem:[#allocation6 + $0x208] sm:$0xff]
    %v1539 = vld [vmem:[#allocation6 + $0x210] sm:$0xff]
    %v1540 = vld [vmem:[#allocation6 + $0x218] sm:$0xff]
    %v1541 = vld [vmem:[#allocation6 + $0x220] sm:$0xff]
    %v1542 = vld [vmem:[#allocation6 + $0x228] sm:$0xff]
    %v1543 = vld [vmem:[#allocation6 + $0x230] sm:$0xff]
    %v1544 = vld [vmem:[#allocation6 + $0x238] sm:$0xff]
    %v1545 = vld [vmem:[#allocation6 + $0x240] sm:$0xff]
    %v1546 = vld [vmem:[#allocation6 + $0x248] sm:$0xff]
    %v1547 = vld [vmem:[#allocation6 + $0x250] sm:$0xff]
    %v1548 = vld [vmem:[#allocation6 + $0x258] sm:$0xff]
    %v1549 = vld [vmem:[#allocation6 + $0x260] sm:$0xff]
    %v1550 = vld [vmem:[#allocation6 + $0x268] sm:$0xff]
    %v1551 = vld [vmem:[#allocation6 + $0x270] sm:$0xff]
    %v1552 = vld [vmem:[#allocation6 + $0x278] sm:$0xff]
    %v1553 = vld [vmem:[#allocation6 + $0x280] sm:$0xff]
    %v1554 = vld [vmem:[#allocation6 + $0x288] sm:$0xff]
    %v1555 = vld [vmem:[#allocation6 + $0x290] sm:$0xff]
    %v1556 = vld [vmem:[#allocation6 + $0x298] sm:$0xff]
    %v1557 = vld [vmem:[#allocation6 + $0x2a0] sm:$0xff]
    %v1558 = vld [vmem:[#allocation6 + $0x2a8] sm:$0xff]
    %v1559 = vld [vmem:[#allocation6 + $0x2b0] sm:$0xff]
    %v1560 = vld [vmem:[#allocation6 + $0x2b8] sm:$0xff]
    %v1561 = vld [vmem:[#allocation6 + $0x2c0] sm:$0xff]
    %v1562 = vld [vmem:[#allocation6 + $0x2c8] sm:$0xff]
    %v1563 = vld [vmem:[#allocation6 + $0x2d0] sm:$0xff]
    %v1564 = vld [vmem:[#allocation6 + $0x2d8] sm:$0xff]
    %v1565 = vld [vmem:[#allocation6 + $0x2e0] sm:$0xff]
    %v1566 = vld [vmem:[#allocation6 + $0x2e8] sm:$0xff]
    %v1567 = vld [vmem:[#allocation6 + $0x2f0] sm:$0xff]
    %v1568 = vld [vmem:[#allocation6 + $0x2f8] sm:$0xff]
    %v1569 = vld [vmem:[#allocation6 + $0x300] sm:$0xff]
    %v1570 = vld [vmem:[#allocation6 + $0x308] sm:$0xff]
    %v1571 = vld [vmem:[#allocation6 + $0x310] sm:$0xff]
    %v1572 = vld [vmem:[#allocation6 + $0x318] sm:$0xff]
    %v1573 = vld [vmem:[#allocation6 + $0x320] sm:$0xff]
    %v1574 = vld [vmem:[#allocation6 + $0x328] sm:$0xff]
    %v1575 = vld [vmem:[#allocation6 + $0x330] sm:$0xff]
    %v1576 = vld [vmem:[#allocation6 + $0x338] sm:$0xff]
    %v1577 = vld [vmem:[#allocation6 + $0x340] sm:$0xff]
    %v1578 = vld [vmem:[#allocation6 + $0x348] sm:$0xff]
    %v1579 = vld [vmem:[#allocation6 + $0x350] sm:$0xff]
    %v1580 = vld [vmem:[#allocation6 + $0x358] sm:$0xff]
    %v1581 = vld [vmem:[#allocation6 + $0x360] sm:$0xff]
    %v1582 = vld [vmem:[#allocation6 + $0x368] sm:$0xff]
    %v1583 = vld [vmem:[#allocation6 + $0x370] sm:$0xff]
    %v1584 = vld [vmem:[#allocation6 + $0x378] sm:$0xff]
    %v1585 = vld [vmem:[#allocation6 + $0x380] sm:$0xff]
    %v1586 = vld [vmem:[#allocation6 + $0x388] sm:$0xff]
    %v1587 = vld [vmem:[#allocation6 + $0x390] sm:$0xff]
    %v1588 = vld [vmem:[#allocation6 + $0x398] sm:$0xff]
    %v1589 = vld [vmem:[#allocation6 + $0x3a0] sm:$0xff]
    %v1590 = vld [vmem:[#allocation6 + $0x3a8] sm:$0xff]
    %v1591 = vld [vmem:[#allocation6 + $0x3b0] sm:$0xff]
    %v1592 = vld [vmem:[#allocation6 + $0x3b8] sm:$0xff]
    %v1593 = vld [vmem:[#allocation6 + $0x3c0] sm:$0xff]
    %v1594 = vld [vmem:[#allocation6 + $0x3c8] sm:$0xff]
    %v1595 = vld [vmem:[#allocation6 + $0x3d0] sm:$0xff]
    %v1596 = vld [vmem:[#allocation6 + $0x3d8] sm:$0xff]
    %v1597 = vld [vmem:[#allocation6 + $0x3e0] sm:$0xff]
    %v1598 = vld [vmem:[#allocation6 + $0x3e8] sm:$0xff]
    %v1599 = vld [vmem:[#allocation6 + $0x3f0] sm:$0xff]
    %v1600 = vld [vmem:[#allocation6 + $0x3f8] sm:$0xff]
    %v1601 = vld [vmem:[#allocation6 + $0x400] sm:$0xff]
    %v1602 = vld [vmem:[#allocation6 + $0x408] sm:$0xff]
    %v1603 = vld [vmem:[#allocation6 + $0x410] sm:$0xff]
    %v1604 = vld [vmem:[#allocation6 + $0x418] sm:$0xff]
    %v1605 = vld [vmem:[#allocation6 + $0x420] sm:$0xff]
    %v1606 = vld [vmem:[#allocation6 + $0x428] sm:$0xff]
    %v1607 = vld [vmem:[#allocation6 + $0x430] sm:$0xff]
    %v1608 = vld [vmem:[#allocation6 + $0x438] sm:$0xff]
    %v1609 = vld [vmem:[#allocation6 + $0x440] sm:$0xff]
    %v1610 = vld [vmem:[#allocation6 + $0x448] sm:$0xff]
    %v1611 = vld [vmem:[#allocation6 + $0x450] sm:$0xff]
    %v1612 = vld [vmem:[#allocation6 + $0x458] sm:$0xff]
    %v1613 = vld [vmem:[#allocation6 + $0x460] sm:$0xff]
    %v1614 = vld [vmem:[#allocation6 + $0x468] sm:$0xff]
    %v1615 = vld [vmem:[#allocation6 + $0x470] sm:$0xff]
    %v1616 = vld [vmem:[#allocation6 + $0x478] sm:$0xff]
    %v1617 = vld [vmem:[#allocation6 + $0x480] sm:$0xff]
    %v1618 = vld [vmem:[#allocation6 + $0x488] sm:$0xff]
    %v1619 = vld [vmem:[#allocation6 + $0x490] sm:$0xff]
    %v1620 = vld [vmem:[#allocation6 + $0x498] sm:$0xff]
    %v1621 = vld [vmem:[#allocation6 + $0x4a0] sm:$0xff]
    %v1622 = vld [vmem:[#allocation6 + $0x4a8] sm:$0xff]
    %v1623 = vld [vmem:[#allocation6 + $0x4b0] sm:$0xff]
    %v1624 = vld [vmem:[#allocation6 + $0x4b8] sm:$0xff]
    %v1625 = vld [vmem:[#allocation6 + $0x4c0] sm:$0xff]
    %v1626 = vld [vmem:[#allocation6 + $0x4c8] sm:$0xff]
    %v1627 = vld [vmem:[#allocation6 + $0x4d0] sm:$0xff]
    %v1628 = vld [vmem:[#allocation6 + $0x4d8] sm:$0xff]
    %v1629 = vld [vmem:[#allocation6 + $0x4e0] sm:$0xff]
    %v1630 = vld [vmem:[#allocation6 + $0x4e8] sm:$0xff]
    %v1631 = vld [vmem:[#allocation6 + $0x4f0] sm:$0xff]
    %v1632 = vld [vmem:[#allocation6 + $0x4f8] sm:$0xff]
    %v1633 = vld [vmem:[#allocation6 + $0x500] sm:$0xff]
    %v1634 = vld [vmem:[#allocation6 + $0x508] sm:$0xff]
    %v1635 = vld [vmem:[#allocation6 + $0x510] sm:$0xff]
    %v1636 = vld [vmem:[#allocation6 + $0x518] sm:$0xff]
    %v1637 = vld [vmem:[#allocation6 + $0x520] sm:$0xff]
    %v1638 = vld [vmem:[#allocation6 + $0x528] sm:$0xff]
    %v1639 = vld [vmem:[#allocation6 + $0x530] sm:$0xff]
    %v1640 = vld [vmem:[#allocation6 + $0x538] sm:$0xff]
    %v1641 = vld [vmem:[#allocation6 + $0x540] sm:$0xff]
    %v1642 = vld [vmem:[#allocation6 + $0x548] sm:$0xff]
    %v1643 = vld [vmem:[#allocation6 + $0x550] sm:$0xff]
    %v1644 = vld [vmem:[#allocation6 + $0x558] sm:$0xff]
    %v1645 = vld [vmem:[#allocation6 + $0x560] sm:$0xff]
    %v1646 = vld [vmem:[#allocation6 + $0x568] sm:$0xff]
    %v1647 = vld [vmem:[#allocation6 + $0x570] sm:$0xff]
    %v1648 = vld [vmem:[#allocation6 + $0x578] sm:$0xff]
    %v1649 = vld [vmem:[#allocation6 + $0x580] sm:$0xff]
    %v1650 = vld [vmem:[#allocation6 + $0x588] sm:$0xff]
    %v1651 = vld [vmem:[#allocation6 + $0x590] sm:$0xff]
    %v1652 = vld [vmem:[#allocation6 + $0x598] sm:$0xff]
    %v1653 = vld [vmem:[#allocation6 + $0x5a0] sm:$0xff]
    %v1654 = vld [vmem:[#allocation6 + $0x5a8] sm:$0xff]
    %v1655 = vld [vmem:[#allocation6 + $0x5b0] sm:$0xff]
    %v1656 = vld [vmem:[#allocation6 + $0x5b8] sm:$0xff]
    %v1657 = vld [vmem:[#allocation6 + $0x5c0] sm:$0xff]
    %v1658 = vld [vmem:[#allocation6 + $0x5c8] sm:$0xff]
    %v1659 = vld [vmem:[#allocation6 + $0x5d0] sm:$0xff]
    %v1660 = vld [vmem:[#allocation6 + $0x5d8] sm:$0xff]
    %v1661 = vld [vmem:[#allocation6 + $0x5e0] sm:$0xff]
    %v1662 = vld [vmem:[#allocation6 + $0x5e8] sm:$0xff]
    %v1663 = vld [vmem:[#allocation6 + $0x5f0] sm:$0xff]
    %v1664 = vld [vmem:[#allocation6 + $0x5f8] sm:$0xff]
    %v1665 = vld [vmem:[#allocation6 + $0x600] sm:$0xff]
    %v1666 = vld [vmem:[#allocation6 + $0x608] sm:$0xff]
    %v1667 = vld [vmem:[#allocation6 + $0x610] sm:$0xff]
    %v1668 = vld [vmem:[#allocation6 + $0x618] sm:$0xff]
    %v1669 = vld [vmem:[#allocation6 + $0x620] sm:$0xff]
    %v1670 = vld [vmem:[#allocation6 + $0x628] sm:$0xff]
    %v1671 = vld [vmem:[#allocation6 + $0x630] sm:$0xff]
    %v1672 = vld [vmem:[#allocation6 + $0x638] sm:$0xff]
    %v1673 = vld [vmem:[#allocation6 + $0x640] sm:$0xff]
    %v1674 = vld [vmem:[#allocation6 + $0x648] sm:$0xff]
    %v1675 = vld [vmem:[#allocation6 + $0x650] sm:$0xff]
    %v1676 = vld [vmem:[#allocation6 + $0x658] sm:$0xff]
    %v1677 = vld [vmem:[#allocation6 + $0x660] sm:$0xff]
    %v1678 = vld [vmem:[#allocation6 + $0x668] sm:$0xff]
    %v1679 = vld [vmem:[#allocation6 + $0x670] sm:$0xff]
    %v1680 = vld [vmem:[#allocation6 + $0x678] sm:$0xff]
    %v1681 = vld [vmem:[#allocation6 + $0x680] sm:$0xff]
    %v1682 = vld [vmem:[#allocation6 + $0x688] sm:$0xff]
    %v1683 = vld [vmem:[#allocation6 + $0x690] sm:$0xff]
    %v1684 = vld [vmem:[#allocation6 + $0x698] sm:$0xff]
    %v1685 = vld [vmem:[#allocation6 + $0x6a0] sm:$0xff]
    %v1686 = vld [vmem:[#allocation6 + $0x6a8] sm:$0xff]
    %v1687 = vld [vmem:[#allocation6 + $0x6b0] sm:$0xff]
    %v1688 = vld [vmem:[#allocation6 + $0x6b8] sm:$0xff]
    %v1689 = vld [vmem:[#allocation6 + $0x6c0] sm:$0xff]
    %v1690 = vld [vmem:[#allocation6 + $0x6c8] sm:$0xff]
    %v1691 = vld [vmem:[#allocation6 + $0x6d0] sm:$0xff]
    %v1692 = vld [vmem:[#allocation6 + $0x6d8] sm:$0xff]
    %v1693 = vld [vmem:[#allocation6 + $0x6e0] sm:$0xff]
    %v1694 = vld [vmem:[#allocation6 + $0x6e8] sm:$0xff]
    %v1695 = vld [vmem:[#allocation6 + $0x6f0] sm:$0xff]
    %v1696 = vld [vmem:[#allocation6 + $0x6f8] sm:$0xff]
    %v1697 = vld [vmem:[#allocation6 + $0x700] sm:$0xff]
    %v1698 = vld [vmem:[#allocation6 + $0x708] sm:$0xff]
    %v1699 = vld [vmem:[#allocation6 + $0x710] sm:$0xff]
    %v1700 = vld [vmem:[#allocation6 + $0x718] sm:$0xff]
    %v1701 = vld [vmem:[#allocation6 + $0x720] sm:$0xff]
    %v1702 = vld [vmem:[#allocation6 + $0x728] sm:$0xff]
    %v1703 = vld [vmem:[#allocation6 + $0x730] sm:$0xff]
    %v1704 = vld [vmem:[#allocation6 + $0x738] sm:$0xff]
    %v1705 = vld [vmem:[#allocation6 + $0x740] sm:$0xff]
    %v1706 = vld [vmem:[#allocation6 + $0x748] sm:$0xff]
    %v1707 = vld [vmem:[#allocation6 + $0x750] sm:$0xff]
    %v1708 = vld [vmem:[#allocation6 + $0x758] sm:$0xff]
    %v1709 = vld [vmem:[#allocation6 + $0x760] sm:$0xff]
    %v1710 = vld [vmem:[#allocation6 + $0x768] sm:$0xff]
    %v1711 = vld [vmem:[#allocation6 + $0x770] sm:$0xff]
    %v1712 = vld [vmem:[#allocation6 + $0x778] sm:$0xff]
    %v1713 = vld [vmem:[#allocation6 + $0x780] sm:$0xff]
    %v1714 = vld [vmem:[#allocation6 + $0x788] sm:$0xff]
    %v1715 = vld [vmem:[#allocation6 + $0x790] sm:$0xff]
    %v1716 = vld [vmem:[#allocation6 + $0x798] sm:$0xff]
    %v1717 = vld [vmem:[#allocation6 + $0x7a0] sm:$0xff]
    %v1718 = vld [vmem:[#allocation6 + $0x7a8] sm:$0xff]
    %v1719 = vld [vmem:[#allocation6 + $0x7b0] sm:$0xff]
    %v1720 = vld [vmem:[#allocation6 + $0x7b8] sm:$0xff]
    %v1721 = vld [vmem:[#allocation6 + $0x7c0] sm:$0xff]
    %v1722 = vld [vmem:[#allocation6 + $0x7c8] sm:$0xff]
    %v1723 = vld [vmem:[#allocation6 + $0x7d0] sm:$0xff]
    %v1724 = vld [vmem:[#allocation6 + $0x7d8] sm:$0xff]
    %v1725 = vld [vmem:[#allocation6 + $0x7e0] sm:$0xff]
    %v1726 = vld [vmem:[#allocation6 + $0x7e8] sm:$0xff]
    %v1727 = vld [vmem:[#allocation6 + $0x7f0] sm:$0xff]
    %v1728 = vld [vmem:[#allocation6 + $0x7f8] sm:$0xff]
    %v1729 = vld [vmem:[#allocation6 + $0x800] sm:$0xff]
    %v1730 = vld [vmem:[#allocation6 + $0x808] sm:$0xff]
    %v1731 = vld [vmem:[#allocation6 + $0x810] sm:$0xff]
    %v1732 = vld [vmem:[#allocation6 + $0x818] sm:$0xff]
    %v1733 = vld [vmem:[#allocation6 + $0x820] sm:$0xff]
    %v1734 = vld [vmem:[#allocation6 + $0x828] sm:$0xff]
    %v1735 = vld [vmem:[#allocation6 + $0x830] sm:$0xff]
    %v1736 = vld [vmem:[#allocation6 + $0x838] sm:$0xff]
    %v1737 = vld [vmem:[#allocation6 + $0x840] sm:$0xff]
    %v1738 = vld [vmem:[#allocation6 + $0x848] sm:$0xff]
    %v1739 = vld [vmem:[#allocation6 + $0x850] sm:$0xff]
    %v1740 = vld [vmem:[#allocation6 + $0x858] sm:$0xff]
    %v1741 = vld [vmem:[#allocation6 + $0x860] sm:$0xff]
    %v1742 = vld [vmem:[#allocation6 + $0x868] sm:$0xff]
    %v1743 = vld [vmem:[#allocation6 + $0x870] sm:$0xff]
    %v1744 = vld [vmem:[#allocation6 + $0x878] sm:$0xff]
    %v1745 = vld [vmem:[#allocation6 + $0x880] sm:$0xff]
    %v1746 = vld [vmem:[#allocation6 + $0x888] sm:$0xff]
    %v1747 = vld [vmem:[#allocation6 + $0x890] sm:$0xff]
    %v1748 = vld [vmem:[#allocation6 + $0x898] sm:$0xff]
    %v1749 = vld [vmem:[#allocation6 + $0x8a0] sm:$0xff]
    %v1750 = vld [vmem:[#allocation6 + $0x8a8] sm:$0xff]
    %v1751 = vld [vmem:[#allocation6 + $0x8b0] sm:$0xff]
    %v1752 = vld [vmem:[#allocation6 + $0x8b8] sm:$0xff]
    %v1753 = vld [vmem:[#allocation6 + $0x8c0] sm:$0xff]
    %v1754 = vld [vmem:[#allocation6 + $0x8c8] sm:$0xff]
    %v1755 = vld [vmem:[#allocation6 + $0x8d0] sm:$0xff]
    %v1756 = vld [vmem:[#allocation6 + $0x8d8] sm:$0xff]
    %v1757 = vld [vmem:[#allocation6 + $0x8e0] sm:$0xff]
    %v1758 = vld [vmem:[#allocation6 + $0x8e8] sm:$0xff]
    %v1759 = vld [vmem:[#allocation6 + $0x8f0] sm:$0xff]
    %v1760 = vld [vmem:[#allocation6 + $0x8f8] sm:$0xff]
    %v1761 = vld [vmem:[#allocation7] sm:$0x7]
    %v1763 = vlaneseq
    %v1764 = vshrl.u32 %v1763, 7
    %v1765 = vsub.s32 0, %v1764
    %v1766 = vrot.slane %v1761, %v1765
    %v1767 = vlaneseq
    %v1768 = vshrl.u32 %v1767, 7
    %v1769 = vsub.s32 1, %v1768
    %v1770 = vrot.slane %v1761, %v1769
    %v1771 = vlaneseq
    %v1772 = vshrl.u32 %v1771, 7
    %v1773 = vsub.s32 2, %v1772
    %v1774 = vrot.slane %v1761, %v1773
    %1778 = vmatprep.subr.mxu0 %v1474
    %1779 = vmatpush1.msra.mxu0 %v1473
    %1780 = vmatprep.subr.mxu0 %v1477
    %1781 = vmatpush1.msra.mxu0 %v1476
    %1782 = vmatprep.subr.mxu0 %v1480
    %1783 = vmatpush1.msra.mxu0 %v1479
    %1784 = vmatprep.subr.mxu0 %v1483
    %1785 = vmatpush1.msra.mxu0 %v1482
    %1786 = vmatprep.subr.mxu0 %v1486
    %1787 = vmatpush1.msra.mxu0 %v1485
    %1788 = vmatprep.subr.mxu0 %v1489
    %1789 = vmatpush1.msra.mxu0 %v1488
    %1790 = vmatprep.subr.mxu0 %v1492
    %1791 = vmatpush1.msra.mxu0 %v1491
    %1792 = vmatprep.subr.mxu0 %v1495
    %1793 = vmatpush1.msra.mxu0 %v1494
    %1794 = vmatprep.subr.mxu0 %v1498
    %1795 = vmatpush1.msra.mxu0 %v1497
    %1796 = vmatprep.subr.mxu0 %v1501
    %1797 = vmatpush1.msra.mxu0 %v1500
    %1798 = vmatprep.subr.mxu0 %v1504
    %1799 = vmatpush1.msra.mxu0 %v1503
    %1800 = vmatprep.subr.mxu0 %v1507
    %1801 = vmatpush1.msra.mxu0 %v1506
    %1802 = vmatprep.subr.mxu0 %v1510
    %1803 = vmatpush1.msra.mxu0 %v1509
    %1804 = vmatprep.subr.mxu0 %v1513
    %1805 = vmatpush1.msra.mxu0 %v1512
    %1806 = vmatprep.subr.mxu0 %v1516
    %1807 = vmatpush1.msra.mxu0 %v1515
    %1808 = vmatprep.subr.mxu0 %v1519
    %1809 = vmatpush1.msra.mxu0 %v1518
    %1810 = vmatprep.subr.mxu0 %v1522
    %1811 = vmatpush1.msra.mxu0 %v1521
    %1812 = vmatprep.subr.mxu0 %v1525
    %1813 = vmatpush1.msra.mxu0 %v1524
    %1814 = vmatprep.subr.mxu0 %v1528
    %1815 = vmatpush1.msra.mxu0 %v1527
    %1816 = vmatprep.subr.mxu0 %v1531
    %1817 = vmatpush1.msra.mxu0 %v1530
    %1818 = vmatprep.subr.mxu0 %v1534
    %1819 = vmatpush1.msra.mxu0 %v1533
    %1820 = vmatprep.subr.mxu0 %v1537
    %1821 = vmatpush1.msra.mxu0 %v1536
    %1822 = vmatprep.subr.mxu0 %v1540
    %1823 = vmatpush1.msra.mxu0 %v1539
    %1824 = vmatprep.subr.mxu0 %v1543
    %1825 = vmatpush1.msra.mxu0 %v1542
    %1826 = vmatprep.subr.mxu0 %v1546
    %1827 = vmatpush1.msra.mxu0 %v1545
    %1828 = vmatprep.subr.mxu0 %v1549
    %1829 = vmatpush1.msra.mxu0 %v1548
    %1830 = vmatprep.subr.mxu0 %v1552
    %1831 = vmatpush1.msra.mxu0 %v1551
    %1832 = vmatprep.subr.mxu0 %v1555
    %1833 = vmatpush1.msra.mxu0 %v1554
    %1834 = vmatprep.subr.mxu0 %v1558
    %1835 = vmatpush1.msra.mxu0 %v1557
    %1836 = vmatprep.subr.mxu0 %v1561
    %1837 = vmatpush1.msra.mxu0 %v1560
    %1838 = vmatprep.subr.mxu0 %v1564
    %1839 = vmatpush1.msra.mxu0 %v1563
    %1840 = vmatprep.subr.mxu0 %v1567
    %1841 = vmatpush1.msra.mxu0 %v1566
    %1842 = vmatprep.mubr.f32.mxu0 %v1468
    %1843 = vmatmul.mubr.f32.gmra.mrb[0].mxu0 %v1467
    %v1844 = vpop.f32.mrb[0].mxu0
    %v1845 = vadd.f32 %v1766, %v1844
    %v1846 = vpop.f32.mrb[0].mxu0
    %v1847 = vadd.f32 %v1770, %v1846
    %1848 = vdwg.mxu0
    %1849 = vmatprep.subr.mxu0 %v1570
    %1850 = vmatpush1.msra.mxu0 %v1569
    %1851 = vmatprep.subr.mxu0 %v1573
    %1852 = vmatpush1.msra.mxu0 %v1572
    %1853 = vmatprep.subr.mxu0 %v1576
    %1854 = vmatpush1.msra.mxu0 %v1575
    %1855 = vmatprep.subr.mxu0 %v1579
    %1856 = vmatpush1.msra.mxu0 %v1578
    %1857 = vmatprep.subr.mxu0 %v1582
    %1858 = vmatpush1.msra.mxu0 %v1581
    %1859 = vmatprep.subr.mxu0 %v1585
    %1860 = vmatpush1.msra.mxu0 %v1584
    %1861 = vmatprep.subr.mxu0 %v1588
    %1862 = vmatpush1.msra.mxu0 %v1587
    %1863 = vmatprep.subr.mxu0 %v1591
    %1864 = vmatpush1.msra.mxu0 %v1590
    %1865 = vmatprep.subr.mxu0 %v1594
    %1866 = vmatpush1.msra.mxu0 %v1593
    %1867 = vmatprep.subr.mxu0 %v1597
    %1868 = vmatpush1.msra.mxu0 %v1596
    %1869 = vmatprep.subr.mxu0 %v1600
    %1870 = vmatpush1.msra.mxu0 %v1599
    %1871 = vmatprep.subr.mxu0 %v1603
    %1872 = vmatpush1.msra.mxu0 %v1602
    %1873 = vmatprep.subr.mxu0 %v1606
    %1874 = vmatpush1.msra.mxu0 %v1605
    %1875 = vmatprep.subr.mxu0 %v1609
    %1876 = vmatpush1.msra.mxu0 %v1608
    %1877 = vmatprep.subr.mxu0 %v1612
    %1878 = vmatpush1.msra.mxu0 %v1611
    %1879 = vmatprep.subr.mxu0 %v1615
    %1880 = vmatpush1.msra.mxu0 %v1614
    %1881 = vmatprep.subr.mxu0 %v1618
    %1882 = vmatpush1.msra.mxu0 %v1617
    %1883 = vmatprep.subr.mxu0 %v1621
    %1884 = vmatpush1.msra.mxu0 %v1620
    %1885 = vmatprep.subr.mxu0 %v1624
    %1886 = vmatpush1.msra.mxu0 %v1623
    %1887 = vmatprep.subr.mxu0 %v1627
    %1888 = vmatpush1.msra.mxu0 %v1626
    %1889 = vmatprep.subr.mxu0 %v1630
    %1890 = vmatpush1.msra.mxu0 %v1629
    %1891 = vmatprep.subr.mxu0 %v1633
    %1892 = vmatpush1.msra.mxu0 %v1632
    %1893 = vmatprep.subr.mxu0 %v1636
    %1894 = vmatpush1.msra.mxu0 %v1635
    %1895 = vmatprep.subr.mxu0 %v1639
    %1896 = vmatpush1.msra.mxu0 %v1638
    %1897 = vmatprep.subr.mxu0 %v1642
    %1898 = vmatpush1.msra.mxu0 %v1641
    %1899 = vmatprep.subr.mxu0 %v1645
    %1900 = vmatpush1.msra.mxu0 %v1644
    %1901 = vmatprep.subr.mxu0 %v1648
    %1902 = vmatpush1.msra.mxu0 %v1647
    %1903 = vmatprep.subr.mxu0 %v1651
    %1904 = vmatpush1.msra.mxu0 %v1650
    %1905 = vmatprep.subr.mxu0 %v1654
    %1906 = vmatpush1.msra.mxu0 %v1653
    %1907 = vmatprep.subr.mxu0 %v1657
    %1908 = vmatpush1.msra.mxu0 %v1656
    %1909 = vmatprep.subr.mxu0 %v1660
    %1910 = vmatpush1.msra.mxu0 %v1659
    %1911 = vmatprep.subr.mxu0 %v1663
    %1912 = vmatpush1.msra.mxu0 %v1662
    %1913 = vmatprep.mubr.f32.mxu0 %v1470
    %1914 = vmatmul.mubr.f32.gmra.mrb[0].mxu0 %v1469
    %v1915 = vpop.f32.mrb[0].mxu0
    %v1916 = vadd.f32 %v1845, %v1915
    %v1917 = vpop.f32.mrb[0].mxu0
    %v1918 = vadd.f32 %v1847, %v1917
    %1919 = vdwg.mxu0
    %1920 = vmatprep.subr.mxu0 %v1666
    %1921 = vmatpush1.msra.mxu0 %v1665
    %1922 = vmatprep.subr.mxu0 %v1669
    %1923 = vmatpush1.msra.mxu0 %v1668
    %1924 = vmatprep.subr.mxu0 %v1672
    %1925 = vmatpush1.msra.mxu0 %v1671
    %1926 = vmatprep.subr.mxu0 %v1675
    %1927 = vmatpush1.msra.mxu0 %v1674
    %1928 = vmatprep.subr.mxu0 %v1678
    %1929 = vmatpush1.msra.mxu0 %v1677
    %1930 = vmatprep.subr.mxu0 %v1681
    %1931 = vmatpush1.msra.mxu0 %v1680
    %1932 = vmatprep.subr.mxu0 %v1684
    %1933 = vmatpush1.msra.mxu0 %v1683
    %1934 = vmatprep.subr.mxu0 %v1687
    %1935 = vmatpush1.msra.mxu0 %v1686
    %1936 = vmatprep.subr.mxu0 %v1690
    %1937 = vmatpush1.msra.mxu0 %v1689
    %1938 = vmatprep.subr.mxu0 %v1693
    %1939 = vmatpush1.msra.mxu0 %v1692
    %1940 = vmatprep.subr.mxu0 %v1696
    %1941 = vmatpush1.msra.mxu0 %v1695
    %1942 = vmatprep.subr.mxu0 %v1699
    %1943 = vmatpush1.msra.mxu0 %v1698
    %1944 = vmatprep.subr.mxu0 %v1702
    %1945 = vmatpush1.msra.mxu0 %v1701
    %1946 = vmatprep.subr.mxu0 %v1705
    %1947 = vmatpush1.msra.mxu0 %v1704
    %1948 = vmatprep.subr.mxu0 %v1708
    %1949 = vmatpush1.msra.mxu0 %v1707
    %1950 = vmatprep.subr.mxu0 %v1711
    %1951 = vmatpush1.msra.mxu0 %v1710
    %1952 = vmatprep.subr.mxu0 %v1714
    %1953 = vmatpush1.msra.mxu0 %v1713
    %1954 = vmatprep.subr.mxu0 %v1717
    %1955 = vmatpush1.msra.mxu0 %v1716
    %1956 = vmatprep.subr.mxu0 %v1720
    %1957 = vmatpush1.msra.mxu0 %v1719
    %1958 = vmatprep.subr.mxu0 %v1723
    %1959 = vmatpush1.msra.mxu0 %v1722
    %1960 = vmatprep.subr.mxu0 %v1726
    %1961 = vmatpush1.msra.mxu0 %v1725
    %1962 = vmatprep.subr.mxu0 %v1729
    %1963 = vmatpush1.msra.mxu0 %v1728
    %1964 = vmatprep.subr.mxu0 %v1732
    %1965 = vmatpush1.msra.mxu0 %v1731
    %1966 = vmatprep.subr.mxu0 %v1735
    %1967 = vmatpush1.msra.mxu0 %v1734
    %1968 = vmatprep.subr.mxu0 %v1738
    %1969 = vmatpush1.msra.mxu0 %v1737
    %1970 = vmatprep.subr.mxu0 %v1741
    %1971 = vmatpush1.msra.mxu0 %v1740
    %1972 = vmatprep.subr.mxu0 %v1744
    %1973 = vmatpush1.msra.mxu0 %v1743
    %1974 = vmatprep.subr.mxu0 %v1747
    %1975 = vmatpush1.msra.mxu0 %v1746
    %1976 = vmatprep.subr.mxu0 %v1750
    %1977 = vmatpush1.msra.mxu0 %v1749
    %1978 = vmatprep.subr.mxu0 %v1753
    %1979 = vmatpush1.msra.mxu0 %v1752
    %1980 = vmatprep.subr.mxu0 %v1756
    %1981 = vmatpush1.msra.mxu0 %v1755
    %1982 = vmatprep.subr.mxu0 %v1759
    %1983 = vmatpush1.msra.mxu0 %v1758
    %1984 = vmatprep.mubr.f32.mxu0 %v1472
    %1985 = vmatmul.mubr.f32.gmra.mrb[0].mxu0 %v1471
    %v1986 = vpop.f32.mrb[0].mxu0
    %v1987 = vadd.f32 %v1916, %v1986
    %v1988 = vpop.f32.mrb[0].mxu0
    %v1989 = vadd.f32 %v1918, %v1988
    %1990 = vdwg.mxu0
    %1991 = vmatprep.subr.mxu0 0.0
    %1992 = vmatpush1.msra.mxu0 %v1475
    %1993 = vmatprep.subr.mxu0 0.0
    %1994 = vmatpush1.msra.mxu0 %v1478
    %1995 = vmatprep.subr.mxu0 0.0
    %1996 = vmatpush1.msra.mxu0 %v1481
    %1997 = vmatprep.subr.mxu0 0.0
    %1998 = vmatpush1.msra.mxu0 %v1484
    %1999 = vmatprep.subr.mxu0 0.0
    %2000 = vmatpush1.msra.mxu0 %v1487
    %2001 = vmatprep.subr.mxu0 0.0
    %2002 = vmatpush1.msra.mxu0 %v1490
    %2003 = vmatprep.subr.mxu0 0.0
    %2004 = vmatpush1.msra.mxu0 %v1493
    %2005 = vmatprep.subr.mxu0 0.0
    %2006 = vmatpush1.msra.mxu0 %v1496
    %2007 = vmatprep.subr.mxu0 0.0
    %2008 = vmatpush1.msra.mxu0 %v1499
    %2009 = vmatprep.subr.mxu0 0.0
    %2010 = vmatpush1.msra.mxu0 %v1502
    %2011 = vmatprep.subr.mxu0 0.0
    %2012 = vmatpush1.msra.mxu0 %v1505
    %2013 = vmatprep.subr.mxu0 0.0
    %2014 = vmatpush1.msra.mxu0 %v1508
    %2015 = vmatprep.subr.mxu0 0.0
    %2016 = vmatpush1.msra.mxu0 %v1511
    %2017 = vmatprep.subr.mxu0 0.0
    %2018 = vmatpush1.msra.mxu0 %v1514
    %2019 = vmatprep.subr.mxu0 0.0
    %2020 = vmatpush1.msra.mxu0 %v1517
    %2021 = vmatprep.subr.mxu0 0.0
    %2022 = vmatpush1.msra.mxu0 %v1520
    %2023 = vmatprep.subr.mxu0 0.0
    %2024 = vmatpush1.msra.mxu0 %v1523
    %2025 = vmatprep.subr.mxu0 0.0
    %2026 = vmatpush1.msra.mxu0 %v1526
    %2027 = vmatprep.subr.mxu0 0.0
    %2028 = vmatpush1.msra.mxu0 %v1529
    %2029 = vmatprep.subr.mxu0 0.0
    %2030 = vmatpush1.msra.mxu0 %v1532
    %2031 = vmatprep.subr.mxu0 0.0
    %2032 = vmatpush1.msra.mxu0 %v1535
    %2033 = vmatprep.subr.mxu0 0.0
    %2034 = vmatpush1.msra.mxu0 %v1538
    %2035 = vmatprep.subr.mxu0 0.0
    %2036 = vmatpush1.msra.mxu0 %v1541
    %2037 = vmatprep.subr.mxu0 0.0
    %2038 = vmatpush1.msra.mxu0 %v1544
    %2039 = vmatprep.subr.mxu0 0.0
    %2040 = vmatpush1.msra.mxu0 %v1547
    %2041 = vmatprep.subr.mxu0 0.0
    %2042 = vmatpush1.msra.mxu0 %v1550
    %2043 = vmatprep.subr.mxu0 0.0
    %2044 = vmatpush1.msra.mxu0 %v1553
    %2045 = vmatprep.subr.mxu0 0.0
    %2046 = vmatpush1.msra.mxu0 %v1556
    %2047 = vmatprep.subr.mxu0 0.0
    %2048 = vmatpush1.msra.mxu0 %v1559
    %2049 = vmatprep.subr.mxu0 0.0
    %2050 = vmatpush1.msra.mxu0 %v1562
    %2051 = vmatprep.subr.mxu0 0.0
    %2052 = vmatpush1.msra.mxu0 %v1565
    %2053 = vmatprep.subr.mxu0 0.0
    %2054 = vmatpush1.msra.mxu0 %v1568
    %2055 = vmatprep.mubr.f32.mxu0 %v1468
    %2056 = vmatmul.mubr.f32.gmra.mrb[0].mxu0 %v1467
    %v2057 = vpop.f32.mrb[0].mxu0
    %v2058 = vadd.f32 %v1774, %v2057
    %v2059 = vpop.f32.mrb[0].mxu0
    %2060 = vdwg.mxu0
    %2061 = vmatprep.subr.mxu0 0.0
    %2062 = vmatpush1.msra.mxu0 %v1571
    %2063 = vmatprep.subr.mxu0 0.0
    %2064 = vmatpush1.msra.mxu0 %v1574
    %2065 = vmatprep.subr.mxu0 0.0
    %2066 = vmatpush1.msra.mxu0 %v1577
    %2067 = vmatprep.subr.mxu0 0.0
    %2068 = vmatpush1.msra.mxu0 %v1580
    %2069 = vmatprep.subr.mxu0 0.0
    %2070 = vmatpush1.msra.mxu0 %v1583
    %2071 = vmatprep.subr.mxu0 0.0
    %2072 = vmatpush1.msra.mxu0 %v1586
    %2073 = vmatprep.subr.mxu0 0.0
    %2074 = vmatpush1.msra.mxu0 %v1589
    %2075 = vmatprep.subr.mxu0 0.0
    %2076 = vmatpush1.msra.mxu0 %v1592
    %2077 = vmatprep.subr.mxu0 0.0
    %2078 = vmatpush1.msra.mxu0 %v1595
    %2079 = vmatprep.subr.mxu0 0.0
    %2080 = vmatpush1.msra.mxu0 %v1598
    %2081 = vmatprep.subr.mxu0 0.0
    %2082 = vmatpush1.msra.mxu0 %v1601
    %2083 = vmatprep.subr.mxu0 0.0
    %2084 = vmatpush1.msra.mxu0 %v1604
    %2085 = vmatprep.subr.mxu0 0.0
    %2086 = vmatpush1.msra.mxu0 %v1607
    %2087 = vmatprep.subr.mxu0 0.0
    %2088 = vmatpush1.msra.mxu0 %v1610
    %2089 = vmatprep.subr.mxu0 0.0
    %2090 = vmatpush1.msra.mxu0 %v1613
    %2091 = vmatprep.subr.mxu0 0.0
    %2092 = vmatpush1.msra.mxu0 %v1616
    %2093 = vmatprep.subr.mxu0 0.0
    %2094 = vmatpush1.msra.mxu0 %v1619
    %2095 = vmatprep.subr.mxu0 0.0
    %2096 = vmatpush1.msra.mxu0 %v1622
    %2097 = vmatprep.subr.mxu0 0.0
    %2098 = vmatpush1.msra.mxu0 %v1625
    %2099 = vmatprep.subr.mxu0 0.0
    %2100 = vmatpush1.msra.mxu0 %v1628
    %2101 = vmatprep.subr.mxu0 0.0
    %2102 = vmatpush1.msra.mxu0 %v1631
    %2103 = vmatprep.subr.mxu0 0.0
    %2104 = vmatpush1.msra.mxu0 %v1634
    %2105 = vmatprep.subr.mxu0 0.0
    %2106 = vmatpush1.msra.mxu0 %v1637
    %2107 = vmatprep.subr.mxu0 0.0
    %2108 = vmatpush1.msra.mxu0 %v1640
    %2109 = vmatprep.subr.mxu0 0.0
    %2110 = vmatpush1.msra.mxu0 %v1643
    %2111 = vmatprep.subr.mxu0 0.0
    %2112 = vmatpush1.msra.mxu0 %v1646
    %2113 = vmatprep.subr.mxu0 0.0
    %2114 = vmatpush1.msra.mxu0 %v1649
    %2115 = vmatprep.subr.mxu0 0.0
    %2116 = vmatpush1.msra.mxu0 %v1652
    %2117 = vmatprep.subr.mxu0 0.0
    %2118 = vmatpush1.msra.mxu0 %v1655
    %2119 = vmatprep.subr.mxu0 0.0
    %2120 = vmatpush1.msra.mxu0 %v1658
    %2121 = vmatprep.subr.mxu0 0.0
    %2122 = vmatpush1.msra.mxu0 %v1661
    %2123 = vmatprep.subr.mxu0 0.0
    %2124 = vmatpush1.msra.mxu0 %v1664
    %2125 = vmatprep.mubr.f32.mxu0 %v1470
    %2126 = vmatmul.mubr.f32.gmra.mrb[0].mxu0 %v1469
    %v2127 = vpop.f32.mrb[0].mxu0
    %v2128 = vadd.f32 %v2058, %v2127
    %v2129 = vpop.f32.mrb[0].mxu0
    %2130 = vdwg.mxu0
    %2131 = vmatprep.subr.mxu0 0.0
    %2132 = vmatpush1.msra.mxu0 %v1667
    %2133 = vmatprep.subr.mxu0 0.0
    %2134 = vmatpush1.msra.mxu0 %v1670
    %2135 = vmatprep.subr.mxu0 0.0
    %2136 = vmatpush1.msra.mxu0 %v1673
    %2137 = vmatprep.subr.mxu0 0.0
    %2138 = vmatpush1.msra.mxu0 %v1676
    %2139 = vmatprep.subr.mxu0 0.0
    %2140 = vmatpush1.msra.mxu0 %v1679
    %2141 = vmatprep.subr.mxu0 0.0
    %2142 = vmatpush1.msra.mxu0 %v1682
    %2143 = vmatprep.subr.mxu0 0.0
    %2144 = vmatpush1.msra.mxu0 %v1685
    %2145 = vmatprep.subr.mxu0 0.0
    %2146 = vmatpush1.msra.mxu0 %v1688
    %2147 = vmatprep.subr.mxu0 0.0
    %2148 = vmatpush1.msra.mxu0 %v1691
    %2149 = vmatprep.subr.mxu0 0.0
    %2150 = vmatpush1.msra.mxu0 %v1694
    %2151 = vmatprep.subr.mxu0 0.0
    %2152 = vmatpush1.msra.mxu0 %v1697
    %2153 = vmatprep.subr.mxu0 0.0
    %2154 = vmatpush1.msra.mxu0 %v1700
    %2155 = vmatprep.subr.mxu0 0.0
    %2156 = vmatpush1.msra.mxu0 %v1703
    %2157 = vmatprep.subr.mxu0 0.0
    %2158 = vmatpush1.msra.mxu0 %v1706
    %2159 = vmatprep.subr.mxu0 0.0
    %2160 = vmatpush1.msra.mxu0 %v1709
    %2161 = vmatprep.subr.mxu0 0.0
    %2162 = vmatpush1.msra.mxu0 %v1712
    %2163 = vmatprep.subr.mxu0 0.0
    %2164 = vmatpush1.msra.mxu0 %v1715
    %2165 = vmatprep.subr.mxu0 0.0
    %2166 = vmatpush1.msra.mxu0 %v1718
    %2167 = vmatprep.subr.mxu0 0.0
    %2168 = vmatpush1.msra.mxu0 %v1721
    %2169 = vmatprep.subr.mxu0 0.0
    %2170 = vmatpush1.msra.mxu0 %v1724
    %2171 = vmatprep.subr.mxu0 0.0
    %2172 = vmatpush1.msra.mxu0 %v1727
    %2173 = vmatprep.subr.mxu0 0.0
    %2174 = vmatpush1.msra.mxu0 %v1730
    %2175 = vmatprep.subr.mxu0 0.0
    %2176 = vmatpush1.msra.mxu0 %v1733
    %2177 = vmatprep.subr.mxu0 0.0
    %2178 = vmatpush1.msra.mxu0 %v1736
    %2179 = vmatprep.subr.mxu0 0.0
    %2180 = vmatpush1.msra.mxu0 %v1739
    %2181 = vmatprep.subr.mxu0 0.0
    %2182 = vmatpush1.msra.mxu0 %v1742
    %2183 = vmatprep.subr.mxu0 0.0
    %2184 = vmatpush1.msra.mxu0 %v1745
    %2185 = vmatprep.subr.mxu0 0.0
    %2186 = vmatpush1.msra.mxu0 %v1748
    %2187 = vmatprep.subr.mxu0 0.0
    %2188 = vmatpush1.msra.mxu0 %v1751
    %2189 = vmatprep.subr.mxu0 0.0
    %2190 = vmatpush1.msra.mxu0 %v1754
    %2191 = vmatprep.subr.mxu0 0.0
    %2192 = vmatpush1.msra.mxu0 %v1757
    %2193 = vmatprep.subr.mxu0 0.0
    %2194 = vmatpush1.msra.mxu0 %v1760
    %2195 = vmatprep.mubr.f32.mxu0 %v1472
    %2196 = vmatmul.mubr.f32.gmra.mrb[0].mxu0 %v1471
    %v2197 = vpop.f32.mrb[0].mxu0
    %v2198 = vadd.f32 %v2128, %v2197
    %v2199 = vpop.f32.mrb[0].mxu0
    %2200 = vdwg.mxu0
    %v2201 = vmax.f32 %v1987, 0.0
    %v2202 = vmax.f32 %v1989, 0.0
    %v2203 = vmax.f32 %v2198, 0.0
    %v2204 = vld [vmem:[#allocation9] sm:$0xff]
    %v2205 = vld [vmem:[#allocation9 + $0x8] sm:$0xff]
    %v2206 = vld [vmem:[#allocation9 + $0x10] sm:$0xff]
    %v2207 = vld [vmem:[#allocation9 + $0x18] sm:$0xff]
    %v2208 = vld [vmem:[#allocation9 + $0x20] sm:$0xff]
    %v2209 = vld [vmem:[#allocation9 + $0x28] sm:$0xff]
    %v2210 = vld [vmem:[#allocation9 + $0x30] sm:$0xff]
    %v2211 = vld [vmem:[#allocation9 + $0x38] sm:$0xff]
    %v2212 = vld [vmem:[#allocation9 + $0x40] sm:$0xff]
    %v2213 = vld [vmem:[#allocation9 + $0x48] sm:$0xff]
    %v2214 = vld [vmem:[#allocation9 + $0x50] sm:$0xff]
    %v2215 = vld [vmem:[#allocation9 + $0x58] sm:$0xff]
    %v2216 = vld [vmem:[#allocation9 + $0x60] sm:$0xff]
    %v2217 = vld [vmem:[#allocation9 + $0x68] sm:$0xff]
    %v2218 = vld [vmem:[#allocation9 + $0x70] sm:$0xff]
    %v2219 = vld [vmem:[#allocation9 + $0x78] sm:$0xff]
    %v2220 = vld [vmem:[#allocation9 + $0x80] sm:$0xff]
    %v2221 = vld [vmem:[#allocation9 + $0x88] sm:$0xff]
    %v2222 = vld [vmem:[#allocation9 + $0x90] sm:$0xff]
    %v2223 = vld [vmem:[#allocation9 + $0x98] sm:$0xff]
    %v2224 = vld [vmem:[#allocation9 + $0xa0] sm:$0xff]
    %v2225 = vld [vmem:[#allocation9 + $0xa8] sm:$0xff]
    %v2226 = vld [vmem:[#allocation9 + $0xb0] sm:$0xff]
    %v2227 = vld [vmem:[#allocation9 + $0xb8] sm:$0xff]
    %v2228 = vld [vmem:[#allocation9 + $0xc0] sm:$0xff]
    %v2229 = vld [vmem:[#allocation9 + $0xc8] sm:$0xff]
    %v2230 = vld [vmem:[#allocation9 + $0xd0] sm:$0xff]
    %v2231 = vld [vmem:[#allocation9 + $0xd8] sm:$0xff]
    %v2232 = vld [vmem:[#allocation9 + $0xe0] sm:$0xff]
    %v2233 = vld [vmem:[#allocation9 + $0xe8] sm:$0xff]
    %v2234 = vld [vmem:[#allocation9 + $0xf0] sm:$0xff]
    %v2235 = vld [vmem:[#allocation9 + $0xf8] sm:$0xff]
    %v2236 = vld [vmem:[#allocation9 + $0x100] sm:$0xff]
    %v2237 = vld [vmem:[#allocation9 + $0x108] sm:$0xff]
    %v2238 = vld [vmem:[#allocation9 + $0x110] sm:$0xff]
    %v2239 = vld [vmem:[#allocation9 + $0x118] sm:$0xff]
    %v2240 = vld [vmem:[#allocation9 + $0x120] sm:$0xff]
    %v2241 = vld [vmem:[#allocation9 + $0x128] sm:$0xff]
    %v2242 = vld [vmem:[#allocation9 + $0x130] sm:$0xff]
    %v2243 = vld [vmem:[#allocation9 + $0x138] sm:$0xff]
    %v2244 = vld [vmem:[#allocation9 + $0x140] sm:$0xff]
    %v2245 = vld [vmem:[#allocation9 + $0x148] sm:$0xff]
    %v2246 = vld [vmem:[#allocation9 + $0x150] sm:$0xff]
    %v2247 = vld [vmem:[#allocation9 + $0x158] sm:$0xff]
    %v2248 = vld [vmem:[#allocation9 + $0x160] sm:$0xff]
    %v2249 = vld [vmem:[#allocation9 + $0x168] sm:$0xff]
    %v2250 = vld [vmem:[#allocation9 + $0x170] sm:$0xff]
    %v2251 = vld [vmem:[#allocation9 + $0x178] sm:$0xff]
    %v2252 = vld [vmem:[#allocation10] sm:$0x1]
    %v2254 = vlaneseq
    %v2255 = vshrl.u32 %v2254, 7
    %v2256 = vsub.s32 0, %v2255
    %v2257 = vrot.slane %v2252, %v2256
    %2259 = vmatprep.subr.mxu0 0.0
    %2260 = vmatpush1.msra.mxu0 %v2204
    %2261 = vmatprep.subr.mxu0 0.0
    %2262 = vmatpush1.msra.mxu0 %v2205
    %2263 = vmatprep.subr.mxu0 0.0
    %2264 = vmatpush1.msra.mxu0 %v2206
    %2265 = vmatprep.subr.mxu0 0.0
    %2266 = vmatpush1.msra.mxu0 %v2207
    %2267 = vmatprep.subr.mxu0 0.0
    %2268 = vmatpush1.msra.mxu0 %v2208
    %2269 = vmatprep.subr.mxu0 0.0
    %2270 = vmatpush1.msra.mxu0 %v2209
    %2271 = vmatprep.subr.mxu0 0.0
    %2272 = vmatpush1.msra.mxu0 %v2210
    %2273 = vmatprep.subr.mxu0 0.0
    %2274 = vmatpush1.msra.mxu0 %v2211
    %2275 = vmatprep.subr.mxu0 0.0
    %2276 = vmatpush1.msra.mxu0 %v2212
    %2277 = vmatprep.subr.mxu0 0.0
    %2278 = vmatpush1.msra.mxu0 %v2213
    %2279 = vmatprep.subr.mxu0 0.0
    %2280 = vmatpush1.msra.mxu0 %v2214
    %2281 = vmatprep.subr.mxu0 0.0
    %2282 = vmatpush1.msra.mxu0 %v2215
    %2283 = vmatprep.subr.mxu0 0.0
    %2284 = vmatpush1.msra.mxu0 %v2216
    %2285 = vmatprep.subr.mxu0 0.0
    %2286 = vmatpush1.msra.mxu0 %v2217
    %2287 = vmatprep.subr.mxu0 0.0
    %2288 = vmatpush1.msra.mxu0 %v2218
    %2289 = vmatprep.subr.mxu0 0.0
    %2290 = vmatpush1.msra.mxu0 %v2219
    %2291 = vmatprep.subr.mxu0 0.0
    %2292 = vmatpush1.msra.mxu0 %v2220
    %2293 = vmatprep.subr.mxu0 0.0
    %2294 = vmatpush1.msra.mxu0 %v2221
    %2295 = vmatprep.subr.mxu0 0.0
    %2296 = vmatpush1.msra.mxu0 %v2222
    %2297 = vmatprep.subr.mxu0 0.0
    %2298 = vmatpush1.msra.mxu0 %v2223
    %2299 = vmatprep.subr.mxu0 0.0
    %2300 = vmatpush1.msra.mxu0 %v2224
    %2301 = vmatprep.subr.mxu0 0.0
    %2302 = vmatpush1.msra.mxu0 %v2225
    %2303 = vmatprep.subr.mxu0 0.0
    %2304 = vmatpush1.msra.mxu0 %v2226
    %2305 = vmatprep.subr.mxu0 0.0
    %2306 = vmatpush1.msra.mxu0 %v2227
    %2307 = vmatprep.subr.mxu0 0.0
    %2308 = vmatpush1.msra.mxu0 %v2228
    %2309 = vmatprep.subr.mxu0 0.0
    %2310 = vmatpush1.msra.mxu0 %v2229
    %2311 = vmatprep.subr.mxu0 0.0
    %2312 = vmatpush1.msra.mxu0 %v2230
    %2313 = vmatprep.subr.mxu0 0.0
    %2314 = vmatpush1.msra.mxu0 %v2231
    %2315 = vmatprep.subr.mxu0 0.0
    %2316 = vmatpush1.msra.mxu0 %v2232
    %2317 = vmatprep.subr.mxu0 0.0
    %2318 = vmatpush1.msra.mxu0 %v2233
    %2319 = vmatprep.subr.mxu0 0.0
    %2320 = vmatpush1.msra.mxu0 %v2234
    %2321 = vmatprep.subr.mxu0 0.0
    %2322 = vmatpush1.msra.mxu0 %v2235
    %2323 = vmatprep.mubr.f32.mxu0 %v2202
    %2324 = vmatmul.mubr.f32.gmra.mrb[0].mxu0 %v2201
    %v2325 = vpop.f32.mrb[0].mxu0
    %v2326 = vadd.f32 %v2257, %v2325
    %v2327 = vpop.f32.mrb[0].mxu0
    %2328 = vdwg.mxu0
    %2329 = vmatprep.subr.mxu0 0.0
    %2330 = vmatpush1.msra.mxu0 %v2236
    %2331 = vmatprep.subr.mxu0 0.0
    %2332 = vmatpush1.msra.mxu0 %v2237
    %2333 = vmatprep.subr.mxu0 0.0
    %2334 = vmatpush1.msra.mxu0 %v2238
    %2335 = vmatprep.subr.mxu0 0.0
    %2336 = vmatpush1.msra.mxu0 %v2239
    %2337 = vmatprep.subr.mxu0 0.0
    %2338 = vmatpush1.msra.mxu0 %v2240
    %2339 = vmatprep.subr.mxu0 0.0
    %2340 = vmatpush1.msra.mxu0 %v2241
    %2341 = vmatprep.subr.mxu0 0.0
    %2342 = vmatpush1.msra.mxu0 %v2242
    %2343 = vmatprep.subr.mxu0 0.0
    %2344 = vmatpush1.msra.mxu0 %v2243
    %2345 = vmatprep.subr.mxu0 0.0
    %2346 = vmatpush1.msra.mxu0 %v2244
    %2347 = vmatprep.subr.mxu0 0.0
    %2348 = vmatpush1.msra.mxu0 %v2245
    %2349 = vmatprep.subr.mxu0 0.0
    %2350 = vmatpush1.msra.mxu0 %v2246
    %2351 = vmatprep.subr.mxu0 0.0
    %2352 = vmatpush1.msra.mxu0 %v2247
    %2353 = vmatprep.subr.mxu0 0.0
    %2354 = vmatpush1.msra.mxu0 %v2248
    %2355 = vmatprep.subr.mxu0 0.0
    %2356 = vmatpush1.msra.mxu0 %v2249
    %2357 = vmatprep.subr.mxu0 0.0
    %2358 = vmatpush1.msra.mxu0 %v2250
    %2359 = vmatprep.subr.mxu0 0.0
    %2360 = vmatpush1.msra.mxu0 %v2251
    %2361 = vmatprep.subr.mxu0 0.0
    %2362 = vmatpush1.msra.mxu0 0.0
    %2363 = vmatprep.subr.mxu0 0.0
    %2364 = vmatpush1.msra.mxu0 0.0
    %2365 = vmatprep.subr.mxu0 0.0
    %2366 = vmatpush1.msra.mxu0 0.0
    %2367 = vmatprep.subr.mxu0 0.0
    %2368 = vmatpush1.msra.mxu0 0.0
    %2369 = vmatprep.subr.mxu0 0.0
    %2370 = vmatpush1.msra.mxu0 0.0
    %2371 = vmatprep.subr.mxu0 0.0
    %2372 = vmatpush1.msra.mxu0 0.0
    %2373 = vmatprep.subr.mxu0 0.0
    %2374 = vmatpush1.msra.mxu0 0.0
    %2375 = vmatprep.subr.mxu0 0.0
    %2376 = vmatpush1.msra.mxu0 0.0
    %2377 = vmatprep.subr.mxu0 0.0
    %2378 = vmatpush1.msra.mxu0 0.0
    %2379 = vmatprep.subr.mxu0 0.0
    %2380 = vmatpush1.msra.mxu0 0.0
    %2381 = vmatprep.subr.mxu0 0.0
    %2382 = vmatpush1.msra.mxu0 0.0
    %2383 = vmatprep.subr.mxu0 0.0
    %2384 = vmatpush1.msra.mxu0 0.0
    %2385 = vmatprep.subr.mxu0 0.0
    %2386 = vmatpush1.msra.mxu0 0.0
    %2387 = vmatprep.subr.mxu0 0.0
    %2388 = vmatpush1.msra.mxu0 0.0
    %2389 = vmatprep.subr.mxu0 0.0
    %2390 = vmatpush1.msra.mxu0 0.0
    %2391 = vmatprep.subr.mxu0 0.0
    %2392 = vmatpush1.msra.mxu0 0.0
    %2393 = vmatprep.mubr.f32.mxu0 0.0
    %2394 = vmatmul.mubr.f32.gmra.mrb[0].mxu0 %v2203
    %v2395 = vpop.f32.mrb[0].mxu0
    %v2396 = vadd.f32 %v2326, %v2395
    %v2397 = vpop.f32.mrb[0].mxu0
    %2398 = vdwg.mxu0
    %v2399 = vmax.f32 %v2396, 0.0
    %v2400 = vld [vmem:[%s1] sm:$0xff]
    %v2401 = vld [vmem:[#allocation12] sm:$0xff]
    %v2402 = vld [vmem:[#allocation12 + $0x8] sm:$0xff]
    %v2403 = vld [vmem:[#allocation12 + $0x10] sm:$0xff]
    %v2404 = vld [vmem:[#allocation12 + $0x18] sm:$0xff]
    %v2405 = vld [vmem:[#allocation12 + $0x20] sm:$0xff]
    %v2406 = vld [vmem:[#allocation12 + $0x28] sm:$0xff]
    %v2407 = vld [vmem:[#allocation12 + $0x30] sm:$0xff]
    %v2408 = vld [vmem:[#allocation12 + $0x38] sm:$0xff]
    %v2409 = vld [vmem:[#allocation12 + $0x40] sm:$0xff]
    %v2410 = vld [vmem:[#allocation12 + $0x48] sm:$0xff]
    %v2411 = vld [vmem:[#allocation12 + $0x50] sm:$0xff]
    %v2412 = vld [vmem:[#allocation12 + $0x58] sm:$0xff]
    %v2413 = vld [vmem:[#allocation12 + $0x60] sm:$0xff]
    %v2414 = vld [vmem:[#allocation12 + $0x68] sm:$0xff]
    %v2415 = vld [vmem:[#allocation12 + $0x70] sm:$0xff]
    %v2416 = vld [vmem:[#allocation12 + $0x78] sm:$0xff]
    %v2417 = vld [vmem:[#allocation13] sm:$0xff]
    %v2418 = vld [vmem:[#allocation13 + $0x8] sm:$0xff]
    %v2419 = vld [vmem:[#allocation13 + $0x10] sm:$0xff]
    %v2420 = vld [vmem:[#allocation13 + $0x18] sm:$0xff]
    %v2421 = vld [vmem:[#allocation13 + $0x20] sm:$0xff]
    %v2422 = vld [vmem:[#allocation13 + $0x28] sm:$0xff]
    %v2423 = vld [vmem:[#allocation13 + $0x30] sm:$0xff]
    %v2424 = vld [vmem:[#allocation13 + $0x38] sm:$0xff]
    %v2425 = vld [vmem:[#allocation13 + $0x40] sm:$0xff]
    %v2426 = vld [vmem:[#allocation13 + $0x48] sm:$0xff]
    %v2427 = vld [vmem:[#allocation13 + $0x50] sm:$0xff]
    %v2428 = vld [vmem:[#allocation13 + $0x58] sm:$0xff]
    %v2429 = vld [vmem:[#allocation13 + $0x60] sm:$0xff]
    %v2430 = vld [vmem:[#allocation13 + $0x68] sm:$0xff]
    %v2431 = vld [vmem:[#allocation13 + $0x70] sm:$0xff]
    %v2432 = vld [vmem:[#allocation13 + $0x78] sm:$0xff]
    %2433 = vmatprep.subr.mxu0 0.0
    %2434 = vmatpush1.msra.mxu0 %v2417
    %2435 = vmatprep.subr.mxu0 0.0
    %2436 = vmatpush1.msra.mxu0 %v2418
    %2437 = vmatprep.subr.mxu0 0.0
    %2438 = vmatpush1.msra.mxu0 %v2419
    %2439 = vmatprep.subr.mxu0 0.0
    %2440 = vmatpush1.msra.mxu0 %v2420
    %2441 = vmatprep.subr.mxu0 0.0
    %2442 = vmatpush1.msra.mxu0 %v2421
    %2443 = vmatprep.subr.mxu0 0.0
    %2444 = vmatpush1.msra.mxu0 %v2422
    %2445 = vmatprep.subr.mxu0 0.0
    %2446 = vmatpush1.msra.mxu0 %v2423
    %2447 = vmatprep.subr.mxu0 0.0
    %2448 = vmatpush1.msra.mxu0 %v2424
    %2449 = vmatprep.subr.mxu0 0.0
    %2450 = vmatpush1.msra.mxu0 %v2425
    %2451 = vmatprep.subr.mxu0 0.0
    %2452 = vmatpush1.msra.mxu0 %v2426
    %2453 = vmatprep.subr.mxu0 0.0
    %2454 = vmatpush1.msra.mxu0 %v2427
    %2455 = vmatprep.subr.mxu0 0.0
    %2456 = vmatpush1.msra.mxu0 %v2428
    %2457 = vmatprep.subr.mxu0 0.0
    %2458 = vmatpush1.msra.mxu0 %v2429
    %2459 = vmatprep.subr.mxu0 0.0
    %2460 = vmatpush1.msra.mxu0 %v2430
    %2461 = vmatprep.subr.mxu0 0.0
    %2462 = vmatpush1.msra.mxu0 %v2431
    %2463 = vmatprep.subr.mxu0 0.0
    %2464 = vmatpush1.msra.mxu0 %v2432
    %2465 = vmatprep.subr.mxu0 0.0
    %2466 = vmatpush1.msra.mxu0 0.0
    %2467 = vmatprep.subr.mxu0 0.0
    %2468 = vmatpush1.msra.mxu0 0.0
    %2469 = vmatprep.subr.mxu0 0.0
    %2470 = vmatpush1.msra.mxu0 0.0
    %2471 = vmatprep.subr.mxu0 0.0
    %2472 = vmatpush1.msra.mxu0 0.0
    %2473 = vmatprep.subr.mxu0 0.0
    %2474 = vmatpush1.msra.mxu0 0.0
    %2475 = vmatprep.subr.mxu0 0.0
    %2476 = vmatpush1.msra.mxu0 0.0
    %2477 = vmatprep.subr.mxu0 0.0
    %2478 = vmatpush1.msra.mxu0 0.0
    %2479 = vmatprep.subr.mxu0 0.0
    %2480 = vmatpush1.msra.mxu0 0.0
    %2481 = vmatprep.subr.mxu0 0.0
    %2482 = vmatpush1.msra.mxu0 0.0
    %2483 = vmatprep.subr.mxu0 0.0
    %2484 = vmatpush1.msra.mxu0 0.0
    %2485 = vmatprep.subr.mxu0 0.0
    %2486 = vmatpush1.msra.mxu0 0.0
    %2487 = vmatprep.subr.mxu0 0.0
    %2488 = vmatpush1.msra.mxu0 0.0
    %2489 = vmatprep.subr.mxu0 0.0
    %2490 = vmatpush1.msra.mxu0 0.0
    %2491 = vmatprep.subr.mxu0 0.0
    %2492 = vmatpush1.msra.mxu0 0.0
    %2493 = vmatprep.subr.mxu0 0.0
    %2494 = vmatpush1.msra.mxu0 0.0
    %2495 = vmatprep.subr.mxu0 0.0
    %2496 = vmatpush1.msra.mxu0 0.0
    %2497 = vmatprep.mubr.f32.mxu0 0.0
    %2498 = vmatmul.mubr.f32.gmra.mrb[0].mxu0 %v2400
    %v2499 = vpop.f32.mrb[0].mxu0
    %v2500 = vadd.f32 0.0, %v2499
    %v2501 = vpop.f32.mrb[0].mxu0
    %2502 = vdwg.mxu0
    %2503 = vmatprep.subr.mxu0 0.0
    %2504 = vmatpush1.msra.mxu0 %v2401
    %2505 = vmatprep.subr.mxu0 0.0
    %2506 = vmatpush1.msra.mxu0 %v2402
    %2507 = vmatprep.subr.mxu0 0.0
    %2508 = vmatpush1.msra.mxu0 %v2403
    %2509 = vmatprep.subr.mxu0 0.0
    %2510 = vmatpush1.msra.mxu0 %v2404
    %2511 = vmatprep.subr.mxu0 0.0
    %2512 = vmatpush1.msra.mxu0 %v2405
    %2513 = vmatprep.subr.mxu0 0.0
    %2514 = vmatpush1.msra.mxu0 %v2406
    %2515 = vmatprep.subr.mxu0 0.0
    %2516 = vmatpush1.msra.mxu0 %v2407
    %2517 = vmatprep.subr.mxu0 0.0
    %2518 = vmatpush1.msra.mxu0 %v2408
    %2519 = vmatprep.subr.mxu0 0.0
    %2520 = vmatpush1.msra.mxu0 %v2409
    %2521 = vmatprep.subr.mxu0 0.0
    %2522 = vmatpush1.msra.mxu0 %v2410
    %2523 = vmatprep.subr.mxu0 0.0
    %2524 = vmatpush1.msra.mxu0 %v2411
    %2525 = vmatprep.subr.mxu0 0.0
    %2526 = vmatpush1.msra.mxu0 %v2412
    %2527 = vmatprep.subr.mxu0 0.0
    %2528 = vmatpush1.msra.mxu0 %v2413
    %2529 = vmatprep.subr.mxu0 0.0
    %2530 = vmatpush1.msra.mxu0 %v2414
    %2531 = vmatprep.subr.mxu0 0.0
    %2532 = vmatpush1.msra.mxu0 %v2415
    %2533 = vmatprep.subr.mxu0 0.0
    %2534 = vmatpush1.msra.mxu0 %v2416
    %2535 = vmatprep.subr.mxu0 0.0
    %2536 = vmatpush1.msra.mxu0 0.0
    %2537 = vmatprep.subr.mxu0 0.0
    %2538 = vmatpush1.msra.mxu0 0.0
    %2539 = vmatprep.subr.mxu0 0.0
    %2540 = vmatpush1.msra.mxu0 0.0
    %2541 = vmatprep.subr.mxu0 0.0
    %2542 = vmatpush1.msra.mxu0 0.0
    %2543 = vmatprep.subr.mxu0 0.0
    %2544 = vmatpush1.msra.mxu0 0.0
    %2545 = vmatprep.subr.mxu0 0.0
    %2546 = vmatpush1.msra.mxu0 0.0
    %2547 = vmatprep.subr.mxu0 0.0
    %2548 = vmatpush1.msra.mxu0 0.0
    %2549 = vmatprep.subr.mxu0 0.0
    %2550 = vmatpush1.msra.mxu0 0.0
    %2551 = vmatprep.subr.mxu0 0.0
    %2552 = vmatpush1.msra.mxu0 0.0
    %2553 = vmatprep.subr.mxu0 0.0
    %2554 = vmatpush1.msra.mxu0 0.0
    %2555 = vmatprep.subr.mxu0 0.0
    %2556 = vmatpush1.msra.mxu0 0.0
    %2557 = vmatprep.subr.mxu0 0.0
    %2558 = vmatpush1.msra.mxu0 0.0
    %2559 = vmatprep.subr.mxu0 0.0
    %2560 = vmatpush1.msra.mxu0 0.0
    %2561 = vmatprep.subr.mxu0 0.0
    %2562 = vmatpush1.msra.mxu0 0.0
    %2563 = vmatprep.subr.mxu0 0.0
    %2564 = vmatpush1.msra.mxu0 0.0
    %2565 = vmatprep.subr.mxu0 0.0
    %2566 = vmatpush1.msra.mxu0 0.0
    %2567 = vmatprep.mubr.f32.mxu0 0.0
    %2568 = vmatmul.mubr.f32.gmra.mrb[0].mxu0 %v2399
    %v2569 = vpop.f32.mrb[0].mxu0
    %v2570 = vadd.f32 %v2500, %v2569
    %v2571 = vpop.f32.mrb[0].mxu0
    %2572 = vdwg.mxu0
    %v2573 = vld [vmem:[#allocation15] sm:$0x1]
    %v2575 = vlaneseq
    %v2576 = vshrl.u32 %v2575, 7
    %v2577 = vsub.s32 0, %v2576
    %v2578 = vrot.slane %v2573, %v2577
    %v2580 = vadd.f32 %v2570, %v2578
    %v2581 = vmax.f32 %v2580, 0.0
    %v2582 = vld [vmem:[#allocation16] sm:$0xff]
    %v2583 = vld [vmem:[#allocation16 + $0x8] sm:$0xff]
    %v2584 = vld [vmem:[#allocation16 + $0x10] sm:$0xff]
    %v2585 = vld [vmem:[#allocation16 + $0x18] sm:$0xff]
    %v2586 = vld [vmem:[#allocation16 + $0x20] sm:$0xff]
    %v2587 = vld [vmem:[#allocation16 + $0x28] sm:$0xff]
    %v2588 = vld [vmem:[#allocation16 + $0x30] sm:$0xff]
    %v2589 = vld [vmem:[#allocation16 + $0x38] sm:$0xff]
    %v2590 = vld [vmem:[#allocation16 + $0x40] sm:$0xff]
    %v2591 = vld [vmem:[#allocation16 + $0x48] sm:$0xff]
    %v2592 = vld [vmem:[#allocation16 + $0x50] sm:$0xff]
    %v2593 = vld [vmem:[#allocation16 + $0x58] sm:$0xff]
    %v2594 = vld [vmem:[#allocation16 + $0x60] sm:$0xff]
    %v2595 = vld [vmem:[#allocation16 + $0x68] sm:$0xff]
    %v2596 = vld [vmem:[#allocation16 + $0x70] sm:$0xff]
    %v2597 = vld [vmem:[#allocation16 + $0x78] sm:$0xff]
    %v2598 = vld [vmem:[#allocation18] sm:$0x1]
    %v2600 = vlaneseq
    %v2601 = vshrl.u32 %v2600, 7
    %v2602 = vsub.s32 0, %v2601
    %v2603 = vrot.slane %v2598, %v2602
    %2605 = vmatprep.subr.mxu0 0.0
    %2606 = vmatpush1.msra.mxu0 %v2582
    %2607 = vmatprep.subr.mxu0 0.0
    %2608 = vmatpush1.msra.mxu0 %v2583
    %2609 = vmatprep.subr.mxu0 0.0
    %2610 = vmatpush1.msra.mxu0 %v2584
    %2611 = vmatprep.subr.mxu0 0.0
    %2612 = vmatpush1.msra.mxu0 %v2585
    %2613 = vmatprep.subr.mxu0 0.0
    %2614 = vmatpush1.msra.mxu0 %v2586
    %2615 = vmatprep.subr.mxu0 0.0
    %2616 = vmatpush1.msra.mxu0 %v2587
    %2617 = vmatprep.subr.mxu0 0.0
    %2618 = vmatpush1.msra.mxu0 %v2588
    %2619 = vmatprep.subr.mxu0 0.0
    %2620 = vmatpush1.msra.mxu0 %v2589
    %2621 = vmatprep.subr.mxu0 0.0
    %2622 = vmatpush1.msra.mxu0 %v2590
    %2623 = vmatprep.subr.mxu0 0.0
    %2624 = vmatpush1.msra.mxu0 %v2591
    %2625 = vmatprep.subr.mxu0 0.0
    %2626 = vmatpush1.msra.mxu0 %v2592
    %2627 = vmatprep.subr.mxu0 0.0
    %2628 = vmatpush1.msra.mxu0 %v2593
    %2629 = vmatprep.subr.mxu0 0.0
    %2630 = vmatpush1.msra.mxu0 %v2594
    %2631 = vmatprep.subr.mxu0 0.0
    %2632 = vmatpush1.msra.mxu0 %v2595
    %2633 = vmatprep.subr.mxu0 0.0
    %2634 = vmatpush1.msra.mxu0 %v2596
    %2635 = vmatprep.subr.mxu0 0.0
    %2636 = vmatpush1.msra.mxu0 %v2597
    %2637 = vmatprep.subr.mxu0 0.0
    %2638 = vmatpush1.msra.mxu0 0.0
    %2639 = vmatprep.subr.mxu0 0.0
    %2640 = vmatpush1.msra.mxu0 0.0
    %2641 = vmatprep.subr.mxu0 0.0
    %2642 = vmatpush1.msra.mxu0 0.0
    %2643 = vmatprep.subr.mxu0 0.0
    %2644 = vmatpush1.msra.mxu0 0.0
    %2645 = vmatprep.subr.mxu0 0.0
    %2646 = vmatpush1.msra.mxu0 0.0
    %2647 = vmatprep.subr.mxu0 0.0
    %2648 = vmatpush1.msra.mxu0 0.0
    %2649 = vmatprep.subr.mxu0 0.0
    %2650 = vmatpush1.msra.mxu0 0.0
    %2651 = vmatprep.subr.mxu0 0.0
    %2652 = vmatpush1.msra.mxu0 0.0
    %2653 = vmatprep.subr.mxu0 0.0
    %2654 = vmatpush1.msra.mxu0 0.0
    %2655 = vmatprep.subr.mxu0 0.0
    %2656 = vmatpush1.msra.mxu0 0.0
    %2657 = vmatprep.subr.mxu0 0.0
    %2658 = vmatpush1.msra.mxu0 0.0
    %2659 = vmatprep.subr.mxu0 0.0
    %2660 = vmatpush1.msra.mxu0 0.0
    %2661 = vmatprep.subr.mxu0 0.0
    %2662 = vmatpush1.msra.mxu0 0.0
    %2663 = vmatprep.subr.mxu0 0.0
    %2664 = vmatpush1.msra.mxu0 0.0
    %2665 = vmatprep.subr.mxu0 0.0
    %2666 = vmatpush1.msra.mxu0 0.0
    %2667 = vmatprep.subr.mxu0 0.0
    %2668 = vmatpush1.msra.mxu0 0.0
    %2669 = vmatprep.mubr.f32.mxu0 0.0
    %2670 = vmatmul.mubr.f32.gmra.mrb[0].mxu0 %v2581
    %v2671 = vpop.f32.mrb[0].mxu0
    %v2672 = vadd.f32 %v2603, %v2671
    %v2673 = vpop.f32.mrb[0].mxu0
    %2674 = vdwg.mxu0
    %v2675 = vld [vmem:[#allocation19] sm:$0xff]
    %v2676 = vld [vmem:[#allocation19 + $0x8] sm:$0xff]
    %v2677 = vld [vmem:[#allocation19 + $0x10] sm:$0xff]
    %v2678 = vld [vmem:[#allocation19 + $0x18] sm:$0xff]
    %v2679 = vld [vmem:[#allocation19 + $0x20] sm:$0xff]
    %v2680 = vld [vmem:[#allocation19 + $0x28] sm:$0xff]
    %v2681 = vld [vmem:[#allocation19 + $0x30] sm:$0xff]
    %v2682 = vld [vmem:[#allocation19 + $0x38] sm:$0xff]
    %v2683 = vld [vmem:[#allocation19 + $0x40] sm:$0xff]
    %v2684 = vld [vmem:[#allocation19 + $0x48] sm:$0xff]
    %v2685 = vld [vmem:[#allocation19 + $0x50] sm:$0xff]
    %v2686 = vld [vmem:[#allocation19 + $0x58] sm:$0xff]
    %v2687 = vld [vmem:[#allocation19 + $0x60] sm:$0xff]
    %v2688 = vld [vmem:[#allocation19 + $0x68] sm:$0xff]
    %v2689 = vld [vmem:[#allocation19 + $0x70] sm:$0xff]
    %v2690 = vld [vmem:[#allocation19 + $0x78] sm:$0xff]
    %v2691 = vld [vmem:[#allocation19 + $0x80] sm:$0xff]
    %v2692 = vld [vmem:[#allocation19 + $0x88] sm:$0xff]
    %v2693 = vld [vmem:[#allocation19 + $0x90] sm:$0xff]
    %v2694 = vld [vmem:[#allocation19 + $0x98] sm:$0xff]
    %v2695 = vld [vmem:[#allocation19 + $0xa0] sm:$0xff]
    %v2696 = vld [vmem:[#allocation19 + $0xa8] sm:$0xff]
    %v2697 = vld [vmem:[#allocation19 + $0xb0] sm:$0xff]
    %v2698 = vld [vmem:[#allocation19 + $0xb8] sm:$0xff]
    %v2699 = vld [vmem:[#allocation19 + $0xc0] sm:$0xff]
    %v2700 = vld [vmem:[#allocation19 + $0xc8] sm:$0xff]
    %v2701 = vld [vmem:[#allocation19 + $0xd0] sm:$0xff]
    %v2702 = vld [vmem:[#allocation19 + $0xd8] sm:$0xff]
    %v2703 = vld [vmem:[#allocation19 + $0xe0] sm:$0xff]
    %v2704 = vld [vmem:[#allocation19 + $0xe8] sm:$0xff]
    %v2705 = vld [vmem:[#allocation19 + $0xf0] sm:$0xff]
    %v2706 = vld [vmem:[#allocation19 + $0xf8] sm:$0xff]
    %v2707 = vld [vmem:[#allocation19 + $0x100] sm:$0xff]
    %v2708 = vld [vmem:[#allocation19 + $0x108] sm:$0xff]
    %v2709 = vld [vmem:[#allocation19 + $0x110] sm:$0xff]
    %v2710 = vld [vmem:[#allocation19 + $0x118] sm:$0xff]
    %v2711 = vld [vmem:[#allocation19 + $0x120] sm:$0xff]
    %v2712 = vld [vmem:[#allocation19 + $0x128] sm:$0xff]
    %v2713 = vld [vmem:[#allocation19 + $0x130] sm:$0xff]
    %v2714 = vld [vmem:[#allocation19 + $0x138] sm:$0xff]
    %v2715 = vld [vmem:[#allocation19 + $0x140] sm:$0xff]
    %v2716 = vld [vmem:[#allocation19 + $0x148] sm:$0xff]
    %v2717 = vld [vmem:[#allocation19 + $0x150] sm:$0xff]
    %v2718 = vld [vmem:[#allocation19 + $0x158] sm:$0xff]
    %v2719 = vld [vmem:[#allocation19 + $0x160] sm:$0xff]
    %v2720 = vld [vmem:[#allocation19 + $0x168] sm:$0xff]
    %v2721 = vld [vmem:[#allocation19 + $0x170] sm:$0xff]
    %v2722 = vld [vmem:[#allocation19 + $0x178] sm:$0xff]
    %v2723 = vld [vmem:[#allocation21] sm:$0x7]
    %v2725 = vlaneseq
    %v2726 = vshrl.u32 %v2725, 7
    %v2727 = vsub.s32 0, %v2726
    %v2728 = vrot.slane %v2723, %v2727
    %v2729 = vlaneseq
    %v2730 = vshrl.u32 %v2729, 7
    %v2731 = vsub.s32 1, %v2730
    %v2732 = vrot.slane %v2723, %v2731
    %v2733 = vlaneseq
    %v2734 = vshrl.u32 %v2733, 7
    %v2735 = vsub.s32 2, %v2734
    %v2736 = vrot.slane %v2723, %v2735
    %2740 = vmatprep.subr.mxu0 %v2676
    %2741 = vmatpush1.msra.mxu0 %v2675
    %2742 = vmatprep.subr.mxu0 %v2679
    %2743 = vmatpush1.msra.mxu0 %v2678
    %2744 = vmatprep.subr.mxu0 %v2682
    %2745 = vmatpush1.msra.mxu0 %v2681
    %2746 = vmatprep.subr.mxu0 %v2685
    %2747 = vmatpush1.msra.mxu0 %v2684
    %2748 = vmatprep.subr.mxu0 %v2688
    %2749 = vmatpush1.msra.mxu0 %v2687
    %2750 = vmatprep.subr.mxu0 %v2691
    %2751 = vmatpush1.msra.mxu0 %v2690
    %2752 = vmatprep.subr.mxu0 %v2694
    %2753 = vmatpush1.msra.mxu0 %v2693
    %2754 = vmatprep.subr.mxu0 %v2697
    %2755 = vmatpush1.msra.mxu0 %v2696
    %2756 = vmatprep.subr.mxu0 %v2700
    %2757 = vmatpush1.msra.mxu0 %v2699
    %2758 = vmatprep.subr.mxu0 %v2703
    %2759 = vmatpush1.msra.mxu0 %v2702
    %2760 = vmatprep.subr.mxu0 %v2706
    %2761 = vmatpush1.msra.mxu0 %v2705
    %2762 = vmatprep.subr.mxu0 %v2709
    %2763 = vmatpush1.msra.mxu0 %v2708
    %2764 = vmatprep.subr.mxu0 %v2712
    %2765 = vmatpush1.msra.mxu0 %v2711
    %2766 = vmatprep.subr.mxu0 %v2715
    %2767 = vmatpush1.msra.mxu0 %v2714
    %2768 = vmatprep.subr.mxu0 %v2718
    %2769 = vmatpush1.msra.mxu0 %v2717
    %2770 = vmatprep.subr.mxu0 %v2721
    %2771 = vmatpush1.msra.mxu0 %v2720
    %2772 = vmatprep.subr.mxu0 0.0
    %2773 = vmatpush1.msra.mxu0 0.0
    %2774 = vmatprep.subr.mxu0 0.0
    %2775 = vmatpush1.msra.mxu0 0.0
    %2776 = vmatprep.subr.mxu0 0.0
    %2777 = vmatpush1.msra.mxu0 0.0
    %2778 = vmatprep.subr.mxu0 0.0
    %2779 = vmatpush1.msra.mxu0 0.0
    %2780 = vmatprep.subr.mxu0 0.0
    %2781 = vmatpush1.msra.mxu0 0.0
    %2782 = vmatprep.subr.mxu0 0.0
    %2783 = vmatpush1.msra.mxu0 0.0
    %2784 = vmatprep.subr.mxu0 0.0
    %2785 = vmatpush1.msra.mxu0 0.0
    %2786 = vmatprep.subr.mxu0 0.0
    %2787 = vmatpush1.msra.mxu0 0.0
    %2788 = vmatprep.subr.mxu0 0.0
    %2789 = vmatpush1.msra.mxu0 0.0
    %2790 = vmatprep.subr.mxu0 0.0
    %2791 = vmatpush1.msra.mxu0 0.0
    %2792 = vmatprep.subr.mxu0 0.0
    %2793 = vmatpush1.msra.mxu0 0.0
    %2794 = vmatprep.subr.mxu0 0.0
    %2795 = vmatpush1.msra.mxu0 0.0
    %2796 = vmatprep.subr.mxu0 0.0
    %2797 = vmatpush1.msra.mxu0 0.0
    %2798 = vmatprep.subr.mxu0 0.0
    %2799 = vmatpush1.msra.mxu0 0.0
    %2800 = vmatprep.subr.mxu0 0.0
    %2801 = vmatpush1.msra.mxu0 0.0
    %2802 = vmatprep.subr.mxu0 0.0
    %2803 = vmatpush1.msra.mxu0 0.0
    %2804 = vmatprep.mubr.f32.mxu0 0.0
    %2805 = vmatmul.mubr.f32.gmra.mrb[0].mxu0 %v2672
    %v2806 = vpop.f32.mrb[0].mxu0
    %v2807 = vadd.f32 %v2728, %v2806
    %v2808 = vpop.f32.mrb[0].mxu0
    %v2809 = vadd.f32 %v2732, %v2808
    %2810 = vdwg.mxu0
    %2811 = vmatprep.subr.mxu0 0.0
    %2812 = vmatpush1.msra.mxu0 %v2677
    %2813 = vmatprep.subr.mxu0 0.0
    %2814 = vmatpush1.msra.mxu0 %v2680
    %2815 = vmatprep.subr.mxu0 0.0
    %2816 = vmatpush1.msra.mxu0 %v2683
    %2817 = vmatprep.subr.mxu0 0.0
    %2818 = vmatpush1.msra.mxu0 %v2686
    %2819 = vmatprep.subr.mxu0 0.0
    %2820 = vmatpush1.msra.mxu0 %v2689
    %2821 = vmatprep.subr.mxu0 0.0
    %2822 = vmatpush1.msra.mxu0 %v2692
    %2823 = vmatprep.subr.mxu0 0.0
    %2824 = vmatpush1.msra.mxu0 %v2695
    %2825 = vmatprep.subr.mxu0 0.0
    %2826 = vmatpush1.msra.mxu0 %v2698
    %2827 = vmatprep.subr.mxu0 0.0
    %2828 = vmatpush1.msra.mxu0 %v2701
    %2829 = vmatprep.subr.mxu0 0.0
    %2830 = vmatpush1.msra.mxu0 %v2704
    %2831 = vmatprep.subr.mxu0 0.0
    %2832 = vmatpush1.msra.mxu0 %v2707
    %2833 = vmatprep.subr.mxu0 0.0
    %2834 = vmatpush1.msra.mxu0 %v2710
    %2835 = vmatprep.subr.mxu0 0.0
    %2836 = vmatpush1.msra.mxu0 %v2713
    %2837 = vmatprep.subr.mxu0 0.0
    %2838 = vmatpush1.msra.mxu0 %v2716
    %2839 = vmatprep.subr.mxu0 0.0
    %2840 = vmatpush1.msra.mxu0 %v2719
    %2841 = vmatprep.subr.mxu0 0.0
    %2842 = vmatpush1.msra.mxu0 %v2722
    %2843 = vmatprep.subr.mxu0 0.0
    %2844 = vmatpush1.msra.mxu0 0.0
    %2845 = vmatprep.subr.mxu0 0.0
    %2846 = vmatpush1.msra.mxu0 0.0
    %2847 = vmatprep.subr.mxu0 0.0
    %2848 = vmatpush1.msra.mxu0 0.0
    %2849 = vmatprep.subr.mxu0 0.0
    %2850 = vmatpush1.msra.mxu0 0.0
    %2851 = vmatprep.subr.mxu0 0.0
    %2852 = vmatpush1.msra.mxu0 0.0
    %2853 = vmatprep.subr.mxu0 0.0
    %2854 = vmatpush1.msra.mxu0 0.0
    %2855 = vmatprep.subr.mxu0 0.0
    %2856 = vmatpush1.msra.mxu0 0.0
    %2857 = vmatprep.subr.mxu0 0.0
    %2858 = vmatpush1.msra.mxu0 0.0
    %2859 = vmatprep.subr.mxu0 0.0
    %2860 = vmatpush1.msra.mxu0 0.0
    %2861 = vmatprep.subr.mxu0 0.0
    %2862 = vmatpush1.msra.mxu0 0.0
    %2863 = vmatprep.subr.mxu0 0.0
    %2864 = vmatpush1.msra.mxu0 0.0
    %2865 = vmatprep.subr.mxu0 0.0
    %2866 = vmatpush1.msra.mxu0 0.0
    %2867 = vmatprep.subr.mxu0 0.0
    %2868 = vmatpush1.msra.mxu0 0.0
    %2869 = vmatprep.subr.mxu0 0.0
    %2870 = vmatpush1.msra.mxu0 0.0
    %2871 = vmatprep.subr.mxu0 0.0
    %2872 = vmatpush1.msra.mxu0 0.0
    %2873 = vmatprep.subr.mxu0 0.0
    %2874 = vmatpush1.msra.mxu0 0.0
    %2875 = vmatprep.mubr.f32.mxu0 0.0
    %2876 = vmatmul.mubr.f32.gmra.mrb[0].mxu0 %v2672
    %v2877 = vpop.f32.mrb[0].mxu0
    %v2878 = vadd.f32 %v2736, %v2877
    %v2879 = vpop.f32.mrb[0].mxu0
    %2880 = vdwg.mxu0
    %2881 = vst [vmem:[%s15] sm:$0xff] %v2807
    %2882 = vst [vmem:[%s15 + $0x8] sm:$0xff] %v2809
    %2883 = vst [vmem:[%s15 + $0x10] sm:$0xff] %v2878
    %v2884 = vld [vmem:[%s1 + $0x8] sm:$0xff]
    %v2885 = vld [vmem:[#allocation12] sm:$0xff]
    %v2886 = vld [vmem:[#allocation12 + $0x8] sm:$0xff]
    %v2887 = vld [vmem:[#allocation12 + $0x10] sm:$0xff]
    %v2888 = vld [vmem:[#allocation12 + $0x18] sm:$0xff]
    %v2889 = vld [vmem:[#allocation12 + $0x20] sm:$0xff]
    %v2890 = vld [vmem:[#allocation12 + $0x28] sm:$0xff]
    %v2891 = vld [vmem:[#allocation12 + $0x30] sm:$0xff]
    %v2892 = vld [vmem:[#allocation12 + $0x38] sm:$0xff]
    %v2893 = vld [vmem:[#allocation12 + $0x40] sm:$0xff]
    %v2894 = vld [vmem:[#allocation12 + $0x48] sm:$0xff]
    %v2895 = vld [vmem:[#allocation12 + $0x50] sm:$0xff]
    %v2896 = vld [vmem:[#allocation12 + $0x58] sm:$0xff]
    %v2897 = vld [vmem:[#allocation12 + $0x60] sm:$0xff]
    %v2898 = vld [vmem:[#allocation12 + $0x68] sm:$0xff]
    %v2899 = vld [vmem:[#allocation12 + $0x70] sm:$0xff]
    %v2900 = vld [vmem:[#allocation12 + $0x78] sm:$0xff]
    %v2901 = vld [vmem:[#allocation13] sm:$0xff]
    %v2902 = vld [vmem:[#allocation13 + $0x8] sm:$0xff]
    %v2903 = vld [vmem:[#allocation13 + $0x10] sm:$0xff]
    %v2904 = vld [vmem:[#allocation13 + $0x18] sm:$0xff]
    %v2905 = vld [vmem:[#allocation13 + $0x20] sm:$0xff]
    %v2906 = vld [vmem:[#allocation13 + $0x28] sm:$0xff]
    %v2907 = vld [vmem:[#allocation13 + $0x30] sm:$0xff]
    %v2908 = vld [vmem:[#allocation13 + $0x38] sm:$0xff]
    %v2909 = vld [vmem:[#allocation13 + $0x40] sm:$0xff]
    %v2910 = vld [vmem:[#allocation13 + $0x48] sm:$0xff]
    %v2911 = vld [vmem:[#allocation13 + $0x50] sm:$0xff]
    %v2912 = vld [vmem:[#allocation13 + $0x58] sm:$0xff]
    %v2913 = vld [vmem:[#allocation13 + $0x60] sm:$0xff]
    %v2914 = vld [vmem:[#allocation13 + $0x68] sm:$0xff]
    %v2915 = vld [vmem:[#allocation13 + $0x70] sm:$0xff]
    %v2916 = vld [vmem:[#allocation13 + $0x78] sm:$0xff]
    %2917 = vmatprep.subr.mxu0 0.0
    %2918 = vmatpush1.msra.mxu0 %v2901
    %2919 = vmatprep.subr.mxu0 0.0
    %2920 = vmatpush1.msra.mxu0 %v2902
    %2921 = vmatprep.subr.mxu0 0.0
    %2922 = vmatpush1.msra.mxu0 %v2903
    %2923 = vmatprep.subr.mxu0 0.0
    %2924 = vmatpush1.msra.mxu0 %v2904
    %2925 = vmatprep.subr.mxu0 0.0
    %2926 = vmatpush1.msra.mxu0 %v2905
    %2927 = vmatprep.subr.mxu0 0.0
    %2928 = vmatpush1.msra.mxu0 %v2906
    %2929 = vmatprep.subr.mxu0 0.0
    %2930 = vmatpush1.msra.mxu0 %v2907
    %2931 = vmatprep.subr.mxu0 0.0
    %2932 = vmatpush1.msra.mxu0 %v2908
    %2933 = vmatprep.subr.mxu0 0.0
    %2934 = vmatpush1.msra.mxu0 %v2909
    %2935 = vmatprep.subr.mxu0 0.0
    %2936 = vmatpush1.msra.mxu0 %v2910
    %2937 = vmatprep.subr.mxu0 0.0
    %2938 = vmatpush1.msra.mxu0 %v2911
    %2939 = vmatprep.subr.mxu0 0.0
    %2940 = vmatpush1.msra.mxu0 %v2912
    %2941 = vmatprep.subr.mxu0 0.0
    %2942 = vmatpush1.msra.mxu0 %v2913
    %2943 = vmatprep.subr.mxu0 0.0
    %2944 = vmatpush1.msra.mxu0 %v2914
    %2945 = vmatprep.subr.mxu0 0.0
    %2946 = vmatpush1.msra.mxu0 %v2915
    %2947 = vmatprep.subr.mxu0 0.0
    %2948 = vmatpush1.msra.mxu0 %v2916
    %2949 = vmatprep.subr.mxu0 0.0
    %2950 = vmatpush1.msra.mxu0 0.0
    %2951 = vmatprep.subr.mxu0 0.0
    %2952 = vmatpush1.msra.mxu0 0.0
    %2953 = vmatprep.subr.mxu0 0.0
    %2954 = vmatpush1.msra.mxu0 0.0
    %2955 = vmatprep.subr.mxu0 0.0
    %2956 = vmatpush1.msra.mxu0 0.0
    %2957 = vmatprep.subr.mxu0 0.0
    %2958 = vmatpush1.msra.mxu0 0.0
    %2959 = vmatprep.subr.mxu0 0.0
    %2960 = vmatpush1.msra.mxu0 0.0
    %2961 = vmatprep.subr.mxu0 0.0
    %2962 = vmatpush1.msra.mxu0 0.0
    %2963 = vmatprep.subr.mxu0 0.0
    %2964 = vmatpush1.msra.mxu0 0.0
    %2965 = vmatprep.subr.mxu0 0.0
    %2966 = vmatpush1.msra.mxu0 0.0
    %2967 = vmatprep.subr.mxu0 0.0
    %2968 = vmatpush1.msra.mxu0 0.0
    %2969 = vmatprep.subr.mxu0 0.0
    %2970 = vmatpush1.msra.mxu0 0.0
    %2971 = vmatprep.subr.mxu0 0.0
    %2972 = vmatpush1.msra.mxu0 0.0
    %2973 = vmatprep.subr.mxu0 0.0
    %2974 = vmatpush1.msra.mxu0 0.0
    %2975 = vmatprep.subr.mxu0 0.0
    %2976 = vmatpush1.msra.mxu0 0.0
    %2977 = vmatprep.subr.mxu0 0.0
    %2978 = vmatpush1.msra.mxu0 0.0
    %2979 = vmatprep.subr.mxu0 0.0
    %2980 = vmatpush1.msra.mxu0 0.0
    %2981 = vmatprep.mubr.f32.mxu0 0.0
    %2982 = vmatmul.mubr.f32.gmra.mrb[0].mxu0 %v2884
    %v2983 = vpop.f32.mrb[0].mxu0
    %v2984 = vadd.f32 0.0, %v2983
    %v2985 = vpop.f32.mrb[0].mxu0
    %2986 = vdwg.mxu0
    %2987 = vmatprep.subr.mxu0 0.0
    %2988 = vmatpush1.msra.mxu0 %v2885
    %2989 = vmatprep.subr.mxu0 0.0
    %2990 = vmatpush1.msra.mxu0 %v2886
    %2991 = vmatprep.subr.mxu0 0.0
    %2992 = vmatpush1.msra.mxu0 %v2887
    %2993 = vmatprep.subr.mxu0 0.0
    %2994 = vmatpush1.msra.mxu0 %v2888
    %2995 = vmatprep.subr.mxu0 0.0
    %2996 = vmatpush1.msra.mxu0 %v2889
    %2997 = vmatprep.subr.mxu0 0.0
    %2998 = vmatpush1.msra.mxu0 %v2890
    %2999 = vmatprep.subr.mxu0 0.0
    %3000 = vmatpush1.msra.mxu0 %v2891
    %3001 = vmatprep.subr.mxu0 0.0
    %3002 = vmatpush1.msra.mxu0 %v2892
    %3003 = vmatprep.subr.mxu0 0.0
    %3004 = vmatpush1.msra.mxu0 %v2893
    %3005 = vmatprep.subr.mxu0 0.0
    %3006 = vmatpush1.msra.mxu0 %v2894
    %3007 = vmatprep.subr.mxu0 0.0
    %3008 = vmatpush1.msra.mxu0 %v2895
    %3009 = vmatprep.subr.mxu0 0.0
    %3010 = vmatpush1.msra.mxu0 %v2896
    %3011 = vmatprep.subr.mxu0 0.0
    %3012 = vmatpush1.msra.mxu0 %v2897
    %3013 = vmatprep.subr.mxu0 0.0
    %3014 = vmatpush1.msra.mxu0 %v2898
    %3015 = vmatprep.subr.mxu0 0.0
    %3016 = vmatpush1.msra.mxu0 %v2899
    %3017 = vmatprep.subr.mxu0 0.0
    %3018 = vmatpush1.msra.mxu0 %v2900
    %3019 = vmatprep.subr.mxu0 0.0
    %3020 = vmatpush1.msra.mxu0 0.0
    %3021 = vmatprep.subr.mxu0 0.0
    %3022 = vmatpush1.msra.mxu0 0.0
    %3023 = vmatprep.subr.mxu0 0.0
    %3024 = vmatpush1.msra.mxu0 0.0
    %3025 = vmatprep.subr.mxu0 0.0
    %3026 = vmatpush1.msra.mxu0 0.0
    %3027 = vmatprep.subr.mxu0 0.0
    %3028 = vmatpush1.msra.mxu0 0.0
    %3029 = vmatprep.subr.mxu0 0.0
    %3030 = vmatpush1.msra.mxu0 0.0
    %3031 = vmatprep.subr.mxu0 0.0
    %3032 = vmatpush1.msra.mxu0 0.0
    %3033 = vmatprep.subr.mxu0 0.0
    %3034 = vmatpush1.msra.mxu0 0.0
    %3035 = vmatprep.subr.mxu0 0.0
    %3036 = vmatpush1.msra.mxu0 0.0
    %3037 = vmatprep.subr.mxu0 0.0
    %3038 = vmatpush1.msra.mxu0 0.0
    %3039 = vmatprep.subr.mxu0 0.0
    %3040 = vmatpush1.msra.mxu0 0.0
    %3041 = vmatprep.subr.mxu0 0.0
    %3042 = vmatpush1.msra.mxu0 0.0
    %3043 = vmatprep.subr.mxu0 0.0
    %3044 = vmatpush1.msra.mxu0 0.0
    %3045 = vmatprep.subr.mxu0 0.0
    %3046 = vmatpush1.msra.mxu0 0.0
    %3047 = vmatprep.subr.mxu0 0.0
    %3048 = vmatpush1.msra.mxu0 0.0
    %3049 = vmatprep.subr.mxu0 0.0
    %3050 = vmatpush1.msra.mxu0 0.0
    %3051 = vmatprep.mubr.f32.mxu0 0.0
    %3052 = vmatmul.mubr.f32.gmra.mrb[0].mxu0 %v2672
    %v3053 = vpop.f32.mrb[0].mxu0
    %v3054 = vadd.f32 %v2984, %v3053
    %v3055 = vpop.f32.mrb[0].mxu0
    %3056 = vdwg.mxu0
    %v3057 = vld [vmem:[#allocation15] sm:$0x1]
    %v3059 = vlaneseq
    %v3060 = vshrl.u32 %v3059, 7
    %v3061 = vsub.s32 0, %v3060
    %v3062 = vrot.slane %v3057, %v3061
    %v3064 = vadd.f32 %v3054, %v3062
    %v3065 = vmax.f32 %v3064, 0.0
    %v3066 = vld [vmem:[#allocation16] sm:$0xff]
    %v3067 = vld [vmem:[#allocation16 + $0x8] sm:$0xff]
    %v3068 = vld [vmem:[#allocation16 + $0x10] sm:$0xff]
    %v3069 = vld [vmem:[#allocation16 + $0x18] sm:$0xff]
    %v3070 = vld [vmem:[#allocation16 + $0x20] sm:$0xff]
    %v3071 = vld [vmem:[#allocation16 + $0x28] sm:$0xff]
    %v3072 = vld [vmem:[#allocation16 + $0x30] sm:$0xff]
    %v3073 = vld [vmem:[#allocation16 + $0x38] sm:$0xff]
    %v3074 = vld [vmem:[#allocation16 + $0x40] sm:$0xff]
    %v3075 = vld [vmem:[#allocation16 + $0x48] sm:$0xff]
    %v3076 = vld [vmem:[#allocation16 + $0x50] sm:$0xff]
    %v3077 = vld [vmem:[#allocation16 + $0x58] sm:$0xff]
    %v3078 = vld [vmem:[#allocation16 + $0x60] sm:$0xff]
    %v3079 = vld [vmem:[#allocation16 + $0x68] sm:$0xff]
    %v3080 = vld [vmem:[#allocation16 + $0x70] sm:$0xff]
    %v3081 = vld [vmem:[#allocation16 + $0x78] sm:$0xff]
    %v3082 = vld [vmem:[#allocation18] sm:$0x1]
    %v3084 = vlaneseq
    %v3085 = vshrl.u32 %v3084, 7
    %v3086 = vsub.s32 0, %v3085
    %v3087 = vrot.slane %v3082, %v3086
    %3089 = vmatprep.subr.mxu0 0.0
    %3090 = vmatpush1.msra.mxu0 %v3066
    %3091 = vmatprep.subr.mxu0 0.0
    %3092 = vmatpush1.msra.mxu0 %v3067
    %3093 = vmatprep.subr.mxu0 0.0
    %3094 = vmatpush1.msra.mxu0 %v3068
    %3095 = vmatprep.subr.mxu0 0.0
    %3096 = vmatpush1.msra.mxu0 %v3069
    %3097 = vmatprep.subr.mxu0 0.0
    %3098 = vmatpush1.msra.mxu0 %v3070
    %3099 = vmatprep.subr.mxu0 0.0
    %3100 = vmatpush1.msra.mxu0 %v3071
    %3101 = vmatprep.subr.mxu0 0.0
    %3102 = vmatpush1.msra.mxu0 %v3072
    %3103 = vmatprep.subr.mxu0 0.0
    %3104 = vmatpush1.msra.mxu0 %v3073
    %3105 = vmatprep.subr.mxu0 0.0
    %3106 = vmatpush1.msra.mxu0 %v3074
    %3107 = vmatprep.subr.mxu0 0.0
    %3108 = vmatpush1.msra.mxu0 %v3075
    %3109 = vmatprep.subr.mxu0 0.0
    %3110 = vmatpush1.msra.mxu0 %v3076
    %3111 = vmatprep.subr.mxu0 0.0
    %3112 = vmatpush1.msra.mxu0 %v3077
    %3113 = vmatprep.subr.mxu0 0.0
    %3114 = vmatpush1.msra.mxu0 %v3078
    %3115 = vmatprep.subr.mxu0 0.0
    %3116 = vmatpush1.msra.mxu0 %v3079
    %3117 = vmatprep.subr.mxu0 0.0
    %3118 = vmatpush1.msra.mxu0 %v3080
    %3119 = vmatprep.subr.mxu0 0.0
    %3120 = vmatpush1.msra.mxu0 %v3081
    %3121 = vmatprep.subr.mxu0 0.0
    %3122 = vmatpush1.msra.mxu0 0.0
    %3123 = vmatprep.subr.mxu0 0.0
    %3124 = vmatpush1.msra.mxu0 0.0
    %3125 = vmatprep.subr.mxu0 0.0
    %3126 = vmatpush1.msra.mxu0 0.0
    %3127 = vmatprep.subr.mxu0 0.0
    %3128 = vmatpush1.msra.mxu0 0.0
    %3129 = vmatprep.subr.mxu0 0.0
    %3130 = vmatpush1.msra.mxu0 0.0
    %3131 = vmatprep.subr.mxu0 0.0
    %3132 = vmatpush1.msra.mxu0 0.0
    %3133 = vmatprep.subr.mxu0 0.0
    %3134 = vmatpush1.msra.mxu0 0.0
    %3135 = vmatprep.subr.mxu0 0.0
    %3136 = vmatpush1.msra.mxu0 0.0
    %3137 = vmatprep.subr.mxu0 0.0
    %3138 = vmatpush1.msra.mxu0 0.0
    %3139 = vmatprep.subr.mxu0 0.0
    %3140 = vmatpush1.msra.mxu0 0.0
    %3141 = vmatprep.subr.mxu0 0.0
    %3142 = vmatpush1.msra.mxu0 0.0
    %3143 = vmatprep.subr.mxu0 0.0
    %3144 = vmatpush1.msra.mxu0 0.0
    %3145 = vmatprep.subr.mxu0 0.0
    %3146 = vmatpush1.msra.mxu0 0.0
    %3147 = vmatprep.subr.mxu0 0.0
    %3148 = vmatpush1.msra.mxu0 0.0
    %3149 = vmatprep.subr.mxu0 0.0
    %3150 = vmatpush1.msra.mxu0 0.0
    %3151 = vmatprep.subr.mxu0 0.0
    %3152 = vmatpush1.msra.mxu0 0.0
    %3153 = vmatprep.mubr.f32.mxu0 0.0
    %3154 = vmatmul.mubr.f32.gmra.mrb[0].mxu0 %v3065
    %v3155 = vpop.f32.mrb[0].mxu0
    %v3156 = vadd.f32 %v3087, %v3155
    %v3157 = vpop.f32.mrb[0].mxu0
    %3158 = vdwg.mxu0
    %v3159 = vld [vmem:[#allocation19] sm:$0xff]
    %v3160 = vld [vmem:[#allocation19 + $0x8] sm:$0xff]
    %v3161 = vld [vmem:[#allocation19 + $0x10] sm:$0xff]
    %v3162 = vld [vmem:[#allocation19 + $0x18] sm:$0xff]
    %v3163 = vld [vmem:[#allocation19 + $0x20] sm:$0xff]
    %v3164 = vld [vmem:[#allocation19 + $0x28] sm:$0xff]
    %v3165 = vld [vmem:[#allocation19 + $0x30] sm:$0xff]
    %v3166 = vld [vmem:[#allocation19 + $0x38] sm:$0xff]
    %v3167 = vld [vmem:[#allocation19 + $0x40] sm:$0xff]
    %v3168 = vld [vmem:[#allocation19 + $0x48] sm:$0xff]
    %v3169 = vld [vmem:[#allocation19 + $0x50] sm:$0xff]
    %v3170 = vld [vmem:[#allocation19 + $0x58] sm:$0xff]
    %v3171 = vld [vmem:[#allocation19 + $0x60] sm:$0xff]
    %v3172 = vld [vmem:[#allocation19 + $0x68] sm:$0xff]
    %v3173 = vld [vmem:[#allocation19 + $0x70] sm:$0xff]
    %v3174 = vld [vmem:[#allocation19 + $0x78] sm:$0xff]
    %v3175 = vld [vmem:[#allocation19 + $0x80] sm:$0xff]
    %v3176 = vld [vmem:[#allocation19 + $0x88] sm:$0xff]
    %v3177 = vld [vmem:[#allocation19 + $0x90] sm:$0xff]
    %v3178 = vld [vmem:[#allocation19 + $0x98] sm:$0xff]
    %v3179 = vld [vmem:[#allocation19 + $0xa0] sm:$0xff]
    %v3180 = vld [vmem:[#allocation19 + $0xa8] sm:$0xff]
    %v3181 = vld [vmem:[#allocation19 + $0xb0] sm:$0xff]
    %v3182 = vld [vmem:[#allocation19 + $0xb8] sm:$0xff]
    %v3183 = vld [vmem:[#allocation19 + $0xc0] sm:$0xff]
    %v3184 = vld [vmem:[#allocation19 + $0xc8] sm:$0xff]
    %v3185 = vld [vmem:[#allocation19 + $0xd0] sm:$0xff]
    %v3186 = vld [vmem:[#allocation19 + $0xd8] sm:$0xff]
    %v3187 = vld [vmem:[#allocation19 + $0xe0] sm:$0xff]
    %v3188 = vld [vmem:[#allocation19 + $0xe8] sm:$0xff]
    %v3189 = vld [vmem:[#allocation19 + $0xf0] sm:$0xff]
    %v3190 = vld [vmem:[#allocation19 + $0xf8] sm:$0xff]
    %v3191 = vld [vmem:[#allocation19 + $0x100] sm:$0xff]
    %v3192 = vld [vmem:[#allocation19 + $0x108] sm:$0xff]
    %v3193 = vld [vmem:[#allocation19 + $0x110] sm:$0xff]
    %v3194 = vld [vmem:[#allocation19 + $0x118] sm:$0xff]
    %v3195 = vld [vmem:[#allocation19 + $0x120] sm:$0xff]
    %v3196 = vld [vmem:[#allocation19 + $0x128] sm:$0xff]
    %v3197 = vld [vmem:[#allocation19 + $0x130] sm:$0xff]
    %v3198 = vld [vmem:[#allocation19 + $0x138] sm:$0xff]
    %v3199 = vld [vmem:[#allocation19 + $0x140] sm:$0xff]
    %v3200 = vld [vmem:[#allocation19 + $0x148] sm:$0xff]
    %v3201 = vld [vmem:[#allocation19 + $0x150] sm:$0xff]
    %v3202 = vld [vmem:[#allocation19 + $0x158] sm:$0xff]
    %v3203 = vld [vmem:[#allocation19 + $0x160] sm:$0xff]
    %v3204 = vld [vmem:[#allocation19 + $0x168] sm:$0xff]
    %v3205 = vld [vmem:[#allocation19 + $0x170] sm:$0xff]
    %v3206 = vld [vmem:[#allocation19 + $0x178] sm:$0xff]
    %v3207 = vld [vmem:[#allocation21] sm:$0x7]
    %v3209 = vlaneseq
    %v3210 = vshrl.u32 %v3209, 7
    %v3211 = vsub.s32 0, %v3210
    %v3212 = vrot.slane %v3207, %v3211
    %v3213 = vlaneseq
    %v3214 = vshrl.u32 %v3213, 7
    %v3215 = vsub.s32 1, %v3214
    %v3216 = vrot.slane %v3207, %v3215
    %v3217 = vlaneseq
    %v3218 = vshrl.u32 %v3217, 7
    %v3219 = vsub.s32 2, %v3218
    %v3220 = vrot.slane %v3207, %v3219
    %3224 = vmatprep.subr.mxu0 %v3160
    %3225 = vmatpush1.msra.mxu0 %v3159
    %3226 = vmatprep.subr.mxu0 %v3163
    %3227 = vmatpush1.msra.mxu0 %v3162
    %3228 = vmatprep.subr.mxu0 %v3166
    %3229 = vmatpush1.msra.mxu0 %v3165
    %3230 = vmatprep.subr.mxu0 %v3169
    %3231 = vmatpush1.msra.mxu0 %v3168
    %3232 = vmatprep.subr.mxu0 %v3172
    %3233 = vmatpush1.msra.mxu0 %v3171
    %3234 = vmatprep.subr.mxu0 %v3175
    %3235 = vmatpush1.msra.mxu0 %v3174
    %3236 = vmatprep.subr.mxu0 %v3178
    %3237 = vmatpush1.msra.mxu0 %v3177
    %3238 = vmatprep.subr.mxu0 %v3181
    %3239 = vmatpush1.msra.mxu0 %v3180
    %3240 = vmatprep.subr.mxu0 %v3184
    %3241 = vmatpush1.msra.mxu0 %v3183
    %3242 = vmatprep.subr.mxu0 %v3187
    %3243 = vmatpush1.msra.mxu0 %v3186
    %3244 = vmatprep.subr.mxu0 %v3190
    %3245 = vmatpush1.msra.mxu0 %v3189
    %3246 = vmatprep.subr.mxu0 %v3193
    %3247 = vmatpush1.msra.mxu0 %v3192
    %3248 = vmatprep.subr.mxu0 %v3196
    %3249 = vmatpush1.msra.mxu0 %v3195
    %3250 = vmatprep.subr.mxu0 %v3199
    %3251 = vmatpush1.msra.mxu0 %v3198
    %3252 = vmatprep.subr.mxu0 %v3202
    %3253 = vmatpush1.msra.mxu0 %v3201
    %3254 = vmatprep.subr.mxu0 %v3205
    %3255 = vmatpush1.msra.mxu0 %v3204
    %3256 = vmatprep.subr.mxu0 0.0
    %3257 = vmatpush1.msra.mxu0 0.0
    %3258 = vmatprep.subr.mxu0 0.0
    %3259 = vmatpush1.msra.mxu0 0.0
    %3260 = vmatprep.subr.mxu0 0.0
    %3261 = vmatpush1.msra.mxu0 0.0
    %3262 = vmatprep.subr.mxu0 0.0
    %3263 = vmatpush1.msra.mxu0 0.0
    %3264 = vmatprep.subr.mxu0 0.0
    %3265 = vmatpush1.msra.mxu0 0.0
    %3266 = vmatprep.subr.mxu0 0.0
    %3267 = vmatpush1.msra.mxu0 0.0
    %3268 = vmatprep.subr.mxu0 0.0
    %3269 = vmatpush1.msra.mxu0 0.0
    %3270 = vmatprep.subr.mxu0 0.0
    %3271 = vmatpush1.msra.mxu0 0.0
    %3272 = vmatprep.subr.mxu0 0.0
    %3273 = vmatpush1.msra.mxu0 0.0
    %3274 = vmatprep.subr.mxu0 0.0
    %3275 = vmatpush1.msra.mxu0 0.0
    %3276 = vmatprep.subr.mxu0 0.0
    %3277 = vmatpush1.msra.mxu0 0.0
    %3278 = vmatprep.subr.mxu0 0.0
    %3279 = vmatpush1.msra.mxu0 0.0
    %3280 = vmatprep.subr.mxu0 0.0
    %3281 = vmatpush1.msra.mxu0 0.0
    %3282 = vmatprep.subr.mxu0 0.0
    %3283 = vmatpush1.msra.mxu0 0.0
    %3284 = vmatprep.subr.mxu0 0.0
    %3285 = vmatpush1.msra.mxu0 0.0
    %3286 = vmatprep.subr.mxu0 0.0
    %3287 = vmatpush1.msra.mxu0 0.0
    %3288 = vmatprep.mubr.f32.mxu0 0.0
    %3289 = vmatmul.mubr.f32.gmra.mrb[0].mxu0 %v3156
    %v3290 = vpop.f32.mrb[0].mxu0
    %v3291 = vadd.f32 %v3212, %v3290
    %v3292 = vpop.f32.mrb[0].mxu0
    %v3293 = vadd.f32 %v3216, %v3292
    %3294 = vdwg.mxu0
    %3295 = vmatprep.subr.mxu0 0.0
    %3296 = vmatpush1.msra.mxu0 %v3161
    %3297 = vmatprep.subr.mxu0 0.0
    %3298 = vmatpush1.msra.mxu0 %v3164
    %3299 = vmatprep.subr.mxu0 0.0
    %3300 = vmatpush1.msra.mxu0 %v3167
    %3301 = vmatprep.subr.mxu0 0.0
    %3302 = vmatpush1.msra.mxu0 %v3170
    %3303 = vmatprep.subr.mxu0 0.0
    %3304 = vmatpush1.msra.mxu0 %v3173
    %3305 = vmatprep.subr.mxu0 0.0
    %3306 = vmatpush1.msra.mxu0 %v3176
    %3307 = vmatprep.subr.mxu0 0.0
    %3308 = vmatpush1.msra.mxu0 %v3179
    %3309 = vmatprep.subr.mxu0 0.0
    %3310 = vmatpush1.msra.mxu0 %v3182
    %3311 = vmatprep.subr.mxu0 0.0
    %3312 = vmatpush1.msra.mxu0 %v3185
    %3313 = vmatprep.subr.mxu0 0.0
    %3314 = vmatpush1.msra.mxu0 %v3188
    %3315 = vmatprep.subr.mxu0 0.0
    %3316 = vmatpush1.msra.mxu0 %v3191
    %3317 = vmatprep.subr.mxu0 0.0
    %3318 = vmatpush1.msra.mxu0 %v3194
    %3319 = vmatprep.subr.mxu0 0.0
    %3320 = vmatpush1.msra.mxu0 %v3197
    %3321 = vmatprep.subr.mxu0 0.0
    %3322 = vmatpush1.msra.mxu0 %v3200
    %3323 = vmatprep.subr.mxu0 0.0
    %3324 = vmatpush1.msra.mxu0 %v3203
    %3325 = vmatprep.subr.mxu0 0.0
    %3326 = vmatpush1.msra.mxu0 %v3206
    %3327 = vmatprep.subr.mxu0 0.0
    %3328 = vmatpush1.msra.mxu0 0.0
    %3329 = vmatprep.subr.mxu0 0.0
    %3330 = vmatpush1.msra.mxu0 0.0
    %3331 = vmatprep.subr.mxu0 0.0
    %3332 = vmatpush1.msra.mxu0 0.0
    %3333 = vmatprep.subr.mxu0 0.0
    %3334 = vmatpush1.msra.mxu0 0.0
    %3335 = vmatprep.subr.mxu0 0.0
    %3336 = vmatpush1.msra.mxu0 0.0
    %3337 = vmatprep.subr.mxu0 0.0
    %3338 = vmatpush1.msra.mxu0 0.0
    %3339 = vmatprep.subr.mxu0 0.0
    %3340 = vmatpush1.msra.mxu0 0.0
    %3341 = vmatprep.subr.mxu0 0.0
    %3342 = vmatpush1.msra.mxu0 0.0
    %3343 = vmatprep.subr.mxu0 0.0
    %3344 = vmatpush1.msra.mxu0 0.0
    %3345 = vmatprep.subr.mxu0 0.0
    %3346 = vmatpush1.msra.mxu0 0.0
    %3347 = vmatprep.subr.mxu0 0.0
    %3348 = vmatpush1.msra.mxu0 0.0
    %3349 = vmatprep.subr.mxu0 0.0
    %3350 = vmatpush1.msra.mxu0 0.0
    %3351 = vmatprep.subr.mxu0 0.0
    %3352 = vmatpush1.msra.mxu0 0.0
    %3353 = vmatprep.subr.mxu0 0.0
    %3354 = vmatpush1.msra.mxu0 0.0
    %3355 = vmatprep.subr.mxu0 0.0
    %3356 = vmatpush1.msra.mxu0 0.0
    %3357 = vmatprep.subr.mxu0 0.0
    %3358 = vmatpush1.msra.mxu0 0.0
    %3359 = vmatprep.mubr.f32.mxu0 0.0
    %3360 = vmatmul.mubr.f32.gmra.mrb[0].mxu0 %v3156
    %v3361 = vpop.f32.mrb[0].mxu0
    %v3362 = vadd.f32 %v3220, %v3361
    %v3363 = vpop.f32.mrb[0].mxu0
    %3364 = vdwg.mxu0
    %3365 = vst [vmem:[%s15 + $0x18] sm:$0xff] %v3291
    %3366 = vst [vmem:[%s15 + $0x20] sm:$0xff] %v3293
    %3367 = vst [vmem:[%s15 + $0x28] sm:$0xff] %v3362
    %v3368 = vld [vmem:[%s1 + $0x10] sm:$0xff]
    %v3369 = vld [vmem:[#allocation12] sm:$0xff]
    %v3370 = vld [vmem:[#allocation12 + $0x8] sm:$0xff]
    %v3371 = vld [vmem:[#allocation12 + $0x10] sm:$0xff]
    %v3372 = vld [vmem:[#allocation12 + $0x18] sm:$0xff]
    %v3373 = vld [vmem:[#allocation12 + $0x20] sm:$0xff]
    %v3374 = vld [vmem:[#allocation12 + $0x28] sm:$0xff]
    %v3375 = vld [vmem:[#allocation12 + $0x30] sm:$0xff]
    %v3376 = vld [vmem:[#allocation12 + $0x38] sm:$0xff]
    %v3377 = vld [vmem:[#allocation12 + $0x40] sm:$0xff]
    %v3378 = vld [vmem:[#allocation12 + $0x48] sm:$0xff]
    %v3379 = vld [vmem:[#allocation12 + $0x50] sm:$0xff]
    %v3380 = vld [vmem:[#allocation12 + $0x58] sm:$0xff]
    %v3381 = vld [vmem:[#allocation12 + $0x60] sm:$0xff]
    %v3382 = vld [vmem:[#allocation12 + $0x68] sm:$0xff]
    %v3383 = vld [vmem:[#allocation12 + $0x70] sm:$0xff]
    %v3384 = vld [vmem:[#allocation12 + $0x78] sm:$0xff]
    %v3385 = vld [vmem:[#allocation13] sm:$0xff]
    %v3386 = vld [vmem:[#allocation13 + $0x8] sm:$0xff]
    %v3387 = vld [vmem:[#allocation13 + $0x10] sm:$0xff]
    %v3388 = vld [vmem:[#allocation13 + $0x18] sm:$0xff]
    %v3389 = vld [vmem:[#allocation13 + $0x20] sm:$0xff]
    %v3390 = vld [vmem:[#allocation13 + $0x28] sm:$0xff]
    %v3391 = vld [vmem:[#allocation13 + $0x30] sm:$0xff]
    %v3392 = vld [vmem:[#allocation13 + $0x38] sm:$0xff]
    %v3393 = vld [vmem:[#allocation13 + $0x40] sm:$0xff]
    %v3394 = vld [vmem:[#allocation13 + $0x48] sm:$0xff]
    %v3395 = vld [vmem:[#allocation13 + $0x50] sm:$0xff]
    %v3396 = vld [vmem:[#allocation13 + $0x58] sm:$0xff]
    %v3397 = vld [vmem:[#allocation13 + $0x60] sm:$0xff]
    %v3398 = vld [vmem:[#allocation13 + $0x68] sm:$0xff]
    %v3399 = vld [vmem:[#allocation13 + $0x70] sm:$0xff]
    %v3400 = vld [vmem:[#allocation13 + $0x78] sm:$0xff]
    %3401 = vmatprep.subr.mxu0 0.0
    %3402 = vmatpush1.msra.mxu0 %v3385
    %3403 = vmatprep.subr.mxu0 0.0
    %3404 = vmatpush1.msra.mxu0 %v3386
    %3405 = vmatprep.subr.mxu0 0.0
    %3406 = vmatpush1.msra.mxu0 %v3387
    %3407 = vmatprep.subr.mxu0 0.0
    %3408 = vmatpush1.msra.mxu0 %v3388
    %3409 = vmatprep.subr.mxu0 0.0
    %3410 = vmatpush1.msra.mxu0 %v3389
    %3411 = vmatprep.subr.mxu0 0.0
    %3412 = vmatpush1.msra.mxu0 %v3390
    %3413 = vmatprep.subr.mxu0 0.0
    %3414 = vmatpush1.msra.mxu0 %v3391
    %3415 = vmatprep.subr.mxu0 0.0
    %3416 = vmatpush1.msra.mxu0 %v3392
    %3417 = vmatprep.subr.mxu0 0.0
    %3418 = vmatpush1.msra.mxu0 %v3393
    %3419 = vmatprep.subr.mxu0 0.0
    %3420 = vmatpush1.msra.mxu0 %v3394
    %3421 = vmatprep.subr.mxu0 0.0
    %3422 = vmatpush1.msra.mxu0 %v3395
    %3423 = vmatprep.subr.mxu0 0.0
    %3424 = vmatpush1.msra.mxu0 %v3396
    %3425 = vmatprep.subr.mxu0 0.0
    %3426 = vmatpush1.msra.mxu0 %v3397
    %3427 = vmatprep.subr.mxu0 0.0
    %3428 = vmatpush1.msra.mxu0 %v3398
    %3429 = vmatprep.subr.mxu0 0.0
    %3430 = vmatpush1.msra.mxu0 %v3399
    %3431 = vmatprep.subr.mxu0 0.0
    %3432 = vmatpush1.msra.mxu0 %v3400
    %3433 = vmatprep.subr.mxu0 0.0
    %3434 = vmatpush1.msra.mxu0 0.0
    %3435 = vmatprep.subr.mxu0 0.0
    %3436 = vmatpush1.msra.mxu0 0.0
    %3437 = vmatprep.subr.mxu0 0.0
    %3438 = vmatpush1.msra.mxu0 0.0
    %3439 = vmatprep.subr.mxu0 0.0
    %3440 = vmatpush1.msra.mxu0 0.0
    %3441 = vmatprep.subr.mxu0 0.0
    %3442 = vmatpush1.msra.mxu0 0.0
    %3443 = vmatprep.subr.mxu0 0.0
    %3444 = vmatpush1.msra.mxu0 0.0
    %3445 = vmatprep.subr.mxu0 0.0
    %3446 = vmatpush1.msra.mxu0 0.0
    %3447 = vmatprep.subr.mxu0 0.0
    %3448 = vmatpush1.msra.mxu0 0.0
    %3449 = vmatprep.subr.mxu0 0.0
    %3450 = vmatpush1.msra.mxu0 0.0
    %3451 = vmatprep.subr.mxu0 0.0
    %3452 = vmatpush1.msra.mxu0 0.0
    %3453 = vmatprep.subr.mxu0 0.0
    %3454 = vmatpush1.msra.mxu0 0.0
    %3455 = vmatprep.subr.mxu0 0.0
    %3456 = vmatpush1.msra.mxu0 0.0
    %3457 = vmatprep.subr.mxu0 0.0
    %3458 = vmatpush1.msra.mxu0 0.0
    %3459 = vmatprep.subr.mxu0 0.0
    %3460 = vmatpush1.msra.mxu0 0.0
    %3461 = vmatprep.subr.mxu0 0.0
    %3462 = vmatpush1.msra.mxu0 0.0
    %3463 = vmatprep.subr.mxu0 0.0
    %3464 = vmatpush1.msra.mxu0 0.0
    %3465 = vmatprep.mubr.f32.mxu0 0.0
    %3466 = vmatmul.mubr.f32.gmra.mrb[0].mxu0 %v3368
    %v3467 = vpop.f32.mrb[0].mxu0
    %v3468 = vadd.f32 0.0, %v3467
    %v3469 = vpop.f32.mrb[0].mxu0
    %3470 = vdwg.mxu0
    %3471 = vmatprep.subr.mxu0 0.0
    %3472 = vmatpush1.msra.mxu0 %v3369
    %3473 = vmatprep.subr.mxu0 0.0
    %3474 = vmatpush1.msra.mxu0 %v3370
    %3475 = vmatprep.subr.mxu0 0.0
    %3476 = vmatpush1.msra.mxu0 %v3371
    %3477 = vmatprep.subr.mxu0 0.0
    %3478 = vmatpush1.msra.mxu0 %v3372
    %3479 = vmatprep.subr.mxu0 0.0
    %3480 = vmatpush1.msra.mxu0 %v3373
    %3481 = vmatprep.subr.mxu0 0.0
    %3482 = vmatpush1.msra.mxu0 %v3374
    %3483 = vmatprep.subr.mxu0 0.0
    %3484 = vmatpush1.msra.mxu0 %v3375
    %3485 = vmatprep.subr.mxu0 0.0
    %3486 = vmatpush1.msra.mxu0 %v3376
    %3487 = vmatprep.subr.mxu0 0.0
    %3488 = vmatpush1.msra.mxu0 %v3377
    %3489 = vmatprep.subr.mxu0 0.0
    %3490 = vmatpush1.msra.mxu0 %v3378
    %3491 = vmatprep.subr.mxu0 0.0
    %3492 = vmatpush1.msra.mxu0 %v3379
    %3493 = vmatprep.subr.mxu0 0.0
    %3494 = vmatpush1.msra.mxu0 %v3380
    %3495 = vmatprep.subr.mxu0 0.0
    %3496 = vmatpush1.msra.mxu0 %v3381
    %3497 = vmatprep.subr.mxu0 0.0
    %3498 = vmatpush1.msra.mxu0 %v3382
    %3499 = vmatprep.subr.mxu0 0.0
    %3500 = vmatpush1.msra.mxu0 %v3383
    %3501 = vmatprep.subr.mxu0 0.0
    %3502 = vmatpush1.msra.mxu0 %v3384
    %3503 = vmatprep.subr.mxu0 0.0
    %3504 = vmatpush1.msra.mxu0 0.0
    %3505 = vmatprep.subr.mxu0 0.0
    %3506 = vmatpush1.msra.mxu0 0.0
    %3507 = vmatprep.subr.mxu0 0.0
    %3508 = vmatpush1.msra.mxu0 0.0
    %3509 = vmatprep.subr.mxu0 0.0
    %3510 = vmatpush1.msra.mxu0 0.0
    %3511 = vmatprep.subr.mxu0 0.0
    %3512 = vmatpush1.msra.mxu0 0.0
    %3513 = vmatprep.subr.mxu0 0.0
    %3514 = vmatpush1.msra.mxu0 0.0
    %3515 = vmatprep.subr.mxu0 0.0
    %3516 = vmatpush1.msra.mxu0 0.0
    %3517 = vmatprep.subr.mxu0 0.0
    %3518 = vmatpush1.msra.mxu0 0.0
    %3519 = vmatprep.subr.mxu0 0.0
    %3520 = vmatpush1.msra.mxu0 0.0
    %3521 = vmatprep.subr.mxu0 0.0
    %3522 = vmatpush1.msra.mxu0 0.0
    %3523 = vmatprep.subr.mxu0 0.0
    %3524 = vmatpush1.msra.mxu0 0.0
    %3525 = vmatprep.subr.mxu0 0.0
    %3526 = vmatpush1.msra.mxu0 0.0
    %3527 = vmatprep.subr.mxu0 0.0
    %3528 = vmatpush1.msra.mxu0 0.0
    %3529 = vmatprep.subr.mxu0 0.0
    %3530 = vmatpush1.msra.mxu0 0.0
    %3531 = vmatprep.subr.mxu0 0.0
    %3532 = vmatpush1.msra.mxu0 0.0
    %3533 = vmatprep.subr.mxu0 0.0
    %3534 = vmatpush1.msra.mxu0 0.0
    %3535 = vmatprep.mubr.f32.mxu0 0.0
    %3536 = vmatmul.mubr.f32.gmra.mrb[0].mxu0 %v3156
    %v3537 = vpop.f32.mrb[0].mxu0
    %v3538 = vadd.f32 %v3468, %v3537
    %v3539 = vpop.f32.mrb[0].mxu0
    %3540 = vdwg.mxu0
    %v3541 = vld [vmem:[#allocation15] sm:$0x1]
    %v3543 = vlaneseq
    %v3544 = vshrl.u32 %v3543, 7
    %v3545 = vsub.s32 0, %v3544
    %v3546 = vrot.slane %v3541, %v3545
    %v3548 = vadd.f32 %v3538, %v3546
    %v3549 = vmax.f32 %v3548, 0.0
    %v3550 = vld [vmem:[#allocation16] sm:$0xff]
    %v3551 = vld [vmem:[#allocation16 + $0x8] sm:$0xff]
    %v3552 = vld [vmem:[#allocation16 + $0x10] sm:$0xff]
    %v3553 = vld [vmem:[#allocation16 + $0x18] sm:$0xff]
    %v3554 = vld [vmem:[#allocation16 + $0x20] sm:$0xff]
    %v3555 = vld [vmem:[#allocation16 + $0x28] sm:$0xff]
    %v3556 = vld [vmem:[#allocation16 + $0x30] sm:$0xff]
    %v3557 = vld [vmem:[#allocation16 + $0x38] sm:$0xff]
    %v3558 = vld [vmem:[#allocation16 + $0x40] sm:$0xff]
    %v3559 = vld [vmem:[#allocation16 + $0x48] sm:$0xff]
    %v3560 = vld [vmem:[#allocation16 + $0x50] sm:$0xff]
    %v3561 = vld [vmem:[#allocation16 + $0x58] sm:$0xff]
    %v3562 = vld [vmem:[#allocation16 + $0x60] sm:$0xff]
    %v3563 = vld [vmem:[#allocation16 + $0x68] sm:$0xff]
    %v3564 = vld [vmem:[#allocation16 + $0x70] sm:$0xff]
    %v3565 = vld [vmem:[#allocation16 + $0x78] sm:$0xff]
    %v3566 = vld [vmem:[#allocation18] sm:$0x1]
    %v3568 = vlaneseq
    %v3569 = vshrl.u32 %v3568, 7
    %v3570 = vsub.s32 0, %v3569
    %v3571 = vrot.slane %v3566, %v3570
    %3573 = vmatprep.subr.mxu0 0.0
    %3574 = vmatpush1.msra.mxu0 %v3550
    %3575 = vmatprep.subr.mxu0 0.0
    %3576 = vmatpush1.msra.mxu0 %v3551
    %3577 = vmatprep.subr.mxu0 0.0
    %3578 = vmatpush1.msra.mxu0 %v3552
    %3579 = vmatprep.subr.mxu0 0.0
    %3580 = vmatpush1.msra.mxu0 %v3553
    %3581 = vmatprep.subr.mxu0 0.0
    %3582 = vmatpush1.msra.mxu0 %v3554
    %3583 = vmatprep.subr.mxu0 0.0
    %3584 = vmatpush1.msra.mxu0 %v3555
    %3585 = vmatprep.subr.mxu0 0.0
    %3586 = vmatpush1.msra.mxu0 %v3556
    %3587 = vmatprep.subr.mxu0 0.0
    %3588 = vmatpush1.msra.mxu0 %v3557
    %3589 = vmatprep.subr.mxu0 0.0
    %3590 = vmatpush1.msra.mxu0 %v3558
    %3591 = vmatprep.subr.mxu0 0.0
    %3592 = vmatpush1.msra.mxu0 %v3559
    %3593 = vmatprep.subr.mxu0 0.0
    %3594 = vmatpush1.msra.mxu0 %v3560
    %3595 = vmatprep.subr.mxu0 0.0
    %3596 = vmatpush1.msra.mxu0 %v3561
    %3597 = vmatprep.subr.mxu0 0.0
    %3598 = vmatpush1.msra.mxu0 %v3562
    %3599 = vmatprep.subr.mxu0 0.0
    %3600 = vmatpush1.msra.mxu0 %v3563
    %3601 = vmatprep.subr.mxu0 0.0
    %3602 = vmatpush1.msra.mxu0 %v3564
    %3603 = vmatprep.subr.mxu0 0.0
    %3604 = vmatpush1.msra.mxu0 %v3565
    %3605 = vmatprep.subr.mxu0 0.0
    %3606 = vmatpush1.msra.mxu0 0.0
    %3607 = vmatprep.subr.mxu0 0.0
    %3608 = vmatpush1.msra.mxu0 0.0
    %3609 = vmatprep.subr.mxu0 0.0
    %3610 = vmatpush1.msra.mxu0 0.0
    %3611 = vmatprep.subr.mxu0 0.0
    %3612 = vmatpush1.msra.mxu0 0.0
    %3613 = vmatprep.subr.mxu0 0.0
    %3614 = vmatpush1.msra.mxu0 0.0
    %3615 = vmatprep.subr.mxu0 0.0
    %3616 = vmatpush1.msra.mxu0 0.0
    %3617 = vmatprep.subr.mxu0 0.0
    %3618 = vmatpush1.msra.mxu0 0.0
    %3619 = vmatprep.subr.mxu0 0.0
    %3620 = vmatpush1.msra.mxu0 0.0
    %3621 = vmatprep.subr.mxu0 0.0
    %3622 = vmatpush1.msra.mxu0 0.0
    %3623 = vmatprep.subr.mxu0 0.0
    %3624 = vmatpush1.msra.mxu0 0.0
    %3625 = vmatprep.subr.mxu0 0.0
    %3626 = vmatpush1.msra.mxu0 0.0
    %3627 = vmatprep.subr.mxu0 0.0
    %3628 = vmatpush1.msra.mxu0 0.0
    %3629 = vmatprep.subr.mxu0 0.0
    %3630 = vmatpush1.msra.mxu0 0.0
    %3631 = vmatprep.subr.mxu0 0.0
    %3632 = vmatpush1.msra.mxu0 0.0
    %3633 = vmatprep.subr.mxu0 0.0
    %3634 = vmatpush1.msra.mxu0 0.0
    %3635 = vmatprep.subr.mxu0 0.0
    %3636 = vmatpush1.msra.mxu0 0.0
    %3637 = vmatprep.mubr.f32.mxu0 0.0
    %3638 = vmatmul.mubr.f32.gmra.mrb[0].mxu0 %v3549
    %v3639 = vpop.f32.mrb[0].mxu0
    %v3640 = vadd.f32 %v3571, %v3639
    %v3641 = vpop.f32.mrb[0].mxu0
    %3642 = vdwg.mxu0
    %v3643 = vld [vmem:[#allocation19] sm:$0xff]
    %v3644 = vld [vmem:[#allocation19 + $0x8] sm:$0xff]
    %v3645 = vld [vmem:[#allocation19 + $0x10] sm:$0xff]
    %v3646 = vld [vmem:[#allocation19 + $0x18] sm:$0xff]
    %v3647 = vld [vmem:[#allocation19 + $0x20] sm:$0xff]
    %v3648 = vld [vmem:[#allocation19 + $0x28] sm:$0xff]
    %v3649 = vld [vmem:[#allocation19 + $0x30] sm:$0xff]
    %v3650 = vld [vmem:[#allocation19 + $0x38] sm:$0xff]
    %v3651 = vld [vmem:[#allocation19 + $0x40] sm:$0xff]
    %v3652 = vld [vmem:[#allocation19 + $0x48] sm:$0xff]
    %v3653 = vld [vmem:[#allocation19 + $0x50] sm:$0xff]
    %v3654 = vld [vmem:[#allocation19 + $0x58] sm:$0xff]
    %v3655 = vld [vmem:[#allocation19 + $0x60] sm:$0xff]
    %v3656 = vld [vmem:[#allocation19 + $0x68] sm:$0xff]
    %v3657 = vld [vmem:[#allocation19 + $0x70] sm:$0xff]
    %v3658 = vld [vmem:[#allocation19 + $0x78] sm:$0xff]
    %v3659 = vld [vmem:[#allocation19 + $0x80] sm:$0xff]
    %v3660 = vld [vmem:[#allocation19 + $0x88] sm:$0xff]
    %v3661 = vld [vmem:[#allocation19 + $0x90] sm:$0xff]
    %v3662 = vld [vmem:[#allocation19 + $0x98] sm:$0xff]
    %v3663 = vld [vmem:[#allocation19 + $0xa0] sm:$0xff]
    %v3664 = vld [vmem:[#allocation19 + $0xa8] sm:$0xff]
    %v3665 = vld [vmem:[#allocation19 + $0xb0] sm:$0xff]
    %v3666 = vld [vmem:[#allocation19 + $0xb8] sm:$0xff]
    %v3667 = vld [vmem:[#allocation19 + $0xc0] sm:$0xff]
    %v3668 = vld [vmem:[#allocation19 + $0xc8] sm:$0xff]
    %v3669 = vld [vmem:[#allocation19 + $0xd0] sm:$0xff]
    %v3670 = vld [vmem:[#allocation19 + $0xd8] sm:$0xff]
    %v3671 = vld [vmem:[#allocation19 + $0xe0] sm:$0xff]
    %v3672 = vld [vmem:[#allocation19 + $0xe8] sm:$0xff]
    %v3673 = vld [vmem:[#allocation19 + $0xf0] sm:$0xff]
    %v3674 = vld [vmem:[#allocation19 + $0xf8] sm:$0xff]
    %v3675 = vld [vmem:[#allocation19 + $0x100] sm:$0xff]
    %v3676 = vld [vmem:[#allocation19 + $0x108] sm:$0xff]
    %v3677 = vld [vmem:[#allocation19 + $0x110] sm:$0xff]
    %v3678 = vld [vmem:[#allocation19 + $0x118] sm:$0xff]
    %v3679 = vld [vmem:[#allocation19 + $0x120] sm:$0xff]
    %v3680 = vld [vmem:[#allocation19 + $0x128] sm:$0xff]
    %v3681 = vld [vmem:[#allocation19 + $0x130] sm:$0xff]
    %v3682 = vld [vmem:[#allocation19 + $0x138] sm:$0xff]
    %v3683 = vld [vmem:[#allocation19 + $0x140] sm:$0xff]
    %v3684 = vld [vmem:[#allocation19 + $0x148] sm:$0xff]
    %v3685 = vld [vmem:[#allocation19 + $0x150] sm:$0xff]
    %v3686 = vld [vmem:[#allocation19 + $0x158] sm:$0xff]
    %v3687 = vld [vmem:[#allocation19 + $0x160] sm:$0xff]
    %v3688 = vld [vmem:[#allocation19 + $0x168] sm:$0xff]
    %v3689 = vld [vmem:[#allocation19 + $0x170] sm:$0xff]
    %v3690 = vld [vmem:[#allocation19 + $0x178] sm:$0xff]
    %v3691 = vld [vmem:[#allocation21] sm:$0x7]
    %v3693 = vlaneseq
    %v3694 = vshrl.u32 %v3693, 7
    %v3695 = vsub.s32 0, %v3694
    %v3696 = vrot.slane %v3691, %v3695
    %v3697 = vlaneseq
    %v3698 = vshrl.u32 %v3697, 7
    %v3699 = vsub.s32 1, %v3698
    %v3700 = vrot.slane %v3691, %v3699
    %v3701 = vlaneseq
    %v3702 = vshrl.u32 %v3701, 7
    %v3703 = vsub.s32 2, %v3702
    %v3704 = vrot.slane %v3691, %v3703
    %3708 = vmatprep.subr.mxu0 %v3644
    %3709 = vmatpush1.msra.mxu0 %v3643
    %3710 = vmatprep.subr.mxu0 %v3647
    %3711 = vmatpush1.msra.mxu0 %v3646
    %3712 = vmatprep.subr.mxu0 %v3650
    %3713 = vmatpush1.msra.mxu0 %v3649
    %3714 = vmatprep.subr.mxu0 %v3653
    %3715 = vmatpush1.msra.mxu0 %v3652
    %3716 = vmatprep.subr.mxu0 %v3656
    %3717 = vmatpush1.msra.mxu0 %v3655
    %3718 = vmatprep.subr.mxu0 %v3659
    %3719 = vmatpush1.msra.mxu0 %v3658
    %3720 = vmatprep.subr.mxu0 %v3662
    %3721 = vmatpush1.msra.mxu0 %v3661
    %3722 = vmatprep.subr.mxu0 %v3665
    %3723 = vmatpush1.msra.mxu0 %v3664
    %3724 = vmatprep.subr.mxu0 %v3668
    %3725 = vmatpush1.msra.mxu0 %v3667
    %3726 = vmatprep.subr.mxu0 %v3671
    %3727 = vmatpush1.msra.mxu0 %v3670
    %3728 = vmatprep.subr.mxu0 %v3674
    %3729 = vmatpush1.msra.mxu0 %v3673
    %3730 = vmatprep.subr.mxu0 %v3677
    %3731 = vmatpush1.msra.mxu0 %v3676
    %3732 = vmatprep.subr.mxu0 %v3680
    %3733 = vmatpush1.msra.mxu0 %v3679
    %3734 = vmatprep.subr.mxu0 %v3683
    %3735 = vmatpush1.msra.mxu0 %v3682
    %3736 = vmatprep.subr.mxu0 %v3686
    %3737 = vmatpush1.msra.mxu0 %v3685
    %3738 = vmatprep.subr.mxu0 %v3689
    %3739 = vmatpush1.msra.mxu0 %v3688
    %3740 = vmatprep.subr.mxu0 0.0
    %3741 = vmatpush1.msra.mxu0 0.0
    %3742 = vmatprep.subr.mxu0 0.0
    %3743 = vmatpush1.msra.mxu0 0.0
    %3744 = vmatprep.subr.mxu0 0.0
    %3745 = vmatpush1.msra.mxu0 0.0
    %3746 = vmatprep.subr.mxu0 0.0
    %3747 = vmatpush1.msra.mxu0 0.0
    %3748 = vmatprep.subr.mxu0 0.0
    %3749 = vmatpush1.msra.mxu0 0.0
    %3750 = vmatprep.subr.mxu0 0.0
    %3751 = vmatpush1.msra.mxu0 0.0
    %3752 = vmatprep.subr.mxu0 0.0
    %3753 = vmatpush1.msra.mxu0 0.0
    %3754 = vmatprep.subr.mxu0 0.0
    %3755 = vmatpush1.msra.mxu0 0.0
    %3756 = vmatprep.subr.mxu0 0.0
    %3757 = vmatpush1.msra.mxu0 0.0
    %3758 = vmatprep.subr.mxu0 0.0
    %3759 = vmatpush1.msra.mxu0 0.0
    %3760 = vmatprep.subr.mxu0 0.0
    %3761 = vmatpush1.msra.mxu0 0.0
    %3762 = vmatprep.subr.mxu0 0.0
    %3763 = vmatpush1.msra.mxu0 0.0
    %3764 = vmatprep.subr.mxu0 0.0
    %3765 = vmatpush1.msra.mxu0 0.0
    %3766 = vmatprep.subr.mxu0 0.0
    %3767 = vmatpush1.msra.mxu0 0.0
    %3768 = vmatprep.subr.mxu0 0.0
    %3769 = vmatpush1.msra.mxu0 0.0
    %3770 = vmatprep.subr.mxu0 0.0
    %3771 = vmatpush1.msra.mxu0 0.0
    %3772 = vmatprep.mubr.f32.mxu0 0.0
    %3773 = vmatmul.mubr.f32.gmra.mrb[0].mxu0 %v3640
    %v3774 = vpop.f32.mrb[0].mxu0
    %v3775 = vadd.f32 %v3696, %v3774
    %v3776 = vpop.f32.mrb[0].mxu0
    %v3777 = vadd.f32 %v3700, %v3776
    %3778 = vdwg.mxu0
    %3779 = vmatprep.subr.mxu0 0.0
    %3780 = vmatpush1.msra.mxu0 %v3645
    %3781 = vmatprep.subr.mxu0 0.0
    %3782 = vmatpush1.msra.mxu0 %v3648
    %3783 = vmatprep.subr.mxu0 0.0
    %3784 = vmatpush1.msra.mxu0 %v3651
    %3785 = vmatprep.subr.mxu0 0.0
    %3786 = vmatpush1.msra.mxu0 %v3654
    %3787 = vmatprep.subr.mxu0 0.0
    %3788 = vmatpush1.msra.mxu0 %v3657
    %3789 = vmatprep.subr.mxu0 0.0
    %3790 = vmatpush1.msra.mxu0 %v3660
    %3791 = vmatprep.subr.mxu0 0.0
    %3792 = vmatpush1.msra.mxu0 %v3663
    %3793 = vmatprep.subr.mxu0 0.0
    %3794 = vmatpush1.msra.mxu0 %v3666
    %3795 = vmatprep.subr.mxu0 0.0
    %3796 = vmatpush1.msra.mxu0 %v3669
    %3797 = vmatprep.subr.mxu0 0.0
    %3798 = vmatpush1.msra.mxu0 %v3672
    %3799 = vmatprep.subr.mxu0 0.0
    %3800 = vmatpush1.msra.mxu0 %v3675
    %3801 = vmatprep.subr.mxu0 0.0
    %3802 = vmatpush1.msra.mxu0 %v3678
    %3803 = vmatprep.subr.mxu0 0.0
    %3804 = vmatpush1.msra.mxu0 %v3681
    %3805 = vmatprep.subr.mxu0 0.0
    %3806 = vmatpush1.msra.mxu0 %v3684
    %3807 = vmatprep.subr.mxu0 0.0
    %3808 = vmatpush1.msra.mxu0 %v3687
    %3809 = vmatprep.subr.mxu0 0.0
    %3810 = vmatpush1.msra.mxu0 %v3690
    %3811 = vmatprep.subr.mxu0 0.0
    %3812 = vmatpush1.msra.mxu0 0.0
    %3813 = vmatprep.subr.mxu0 0.0
    %3814 = vmatpush1.msra.mxu0 0.0
    %3815 = vmatprep.subr.mxu0 0.0
    %3816 = vmatpush1.msra.mxu0 0.0
    %3817 = vmatprep.subr.mxu0 0.0
    %3818 = vmatpush1.msra.mxu0 0.0
    %3819 = vmatprep.subr.mxu0 0.0
    %3820 = vmatpush1.msra.mxu0 0.0
    %3821 = vmatprep.subr.mxu0 0.0
    %3822 = vmatpush1.msra.mxu0 0.0
    %3823 = vmatprep.subr.mxu0 0.0
    %3824 = vmatpush1.msra.mxu0 0.0
    %3825 = vmatprep.subr.mxu0 0.0
    %3826 = vmatpush1.msra.mxu0 0.0
    %3827 = vmatprep.subr.mxu0 0.0
    %3828 = vmatpush1.msra.mxu0 0.0
    %3829 = vmatprep.subr.mxu0 0.0
    %3830 = vmatpush1.msra.mxu0 0.0
    %3831 = vmatprep.subr.mxu0 0.0
    %3832 = vmatpush1.msra.mxu0 0.0
    %3833 = vmatprep.subr.mxu0 0.0
    %3834 = vmatpush1.msra.mxu0 0.0
    %3835 = vmatprep.subr.mxu0 0.0
    %3836 = vmatpush1.msra.mxu0 0.0
    %3837 = vmatprep.subr.mxu0 0.0
    %3838 = vmatpush1.msra.mxu0 0.0
    %3839 = vmatprep.subr.mxu0 0.0
    %3840 = vmatpush1.msra.mxu0 0.0
    %3841 = vmatprep.subr.mxu0 0.0
    %3842 = vmatpush1.msra.mxu0 0.0
    %3843 = vmatprep.mubr.f32.mxu0 0.0
    %3844 = vmatmul.mubr.f32.gmra.mrb[0].mxu0 %v3640
    %v3845 = vpop.f32.mrb[0].mxu0
    %v3846 = vadd.f32 %v3704, %v3845
    %v3847 = vpop.f32.mrb[0].mxu0
    %3848 = vdwg.mxu0
    %3849 = vst [vmem:[%s15 + $0x30] sm:$0xff] %v3775
    %3850 = vst [vmem:[%s15 + $0x38] sm:$0xff] %v3777
    %3851 = vst [vmem:[%s15 + $0x40] sm:$0xff] %v3846
    // Predicated region
    $region114: #{environment_model_forward.1} parent=1 // pred_check
      _
    $region115: #{environment_model_forward.1} parent=1 // pred_check_branch
      %3853 = sbr.rel (0) target = $region117
    $region116: #{environment_model_forward.1} parent=1 // pred_region
      _
    $region117: #{environment_model_forward.1} parent=1 // pred_fallthru
      _
    // Predicated region
    $region118: #{environment_model_forward.1} parent=1 // pred_check
      _
    $region119: #{environment_model_forward.1} parent=1 // pred_check_branch
      %3855 = sbr.rel (0) target = $region121
    $region120: #{environment_model_forward.1} parent=1 // pred_region
      _
    $region121: #{environment_model_forward.1} parent=1 // pred_fallthru
      _
    %3856 = vsyncpa [#allocation3], 1
    %3857 = vsyncpa [#allocation5], 1
    %3858 = vsyncpa [#allocation8], 1
    %3859 = vsyncpa [#allocation11], 1
    %3860 = vsyncpa [#allocation14], 1
    %3861 = vsyncpa [#allocation17], 1
    %3862 = vsyncpa [#allocation20], 1

</llo_original>
